<compile_context>
chip_gen: v7x
topology: tpu7x:2x2x1
jax: 0.10.0
libtpu: 0.0.40
codegen_flags: <defaults>
</compile_context>

<pallas_src>
import numpy as np
import jax
import jax.numpy as jnp
from jax.experimental import pallas as pl
from jax.experimental.pallas import tpu as pltpu

CUT_SIZE = 8
CUTN = 16
CUT_POW = 1.0


def _adaptive_pool_weights(size, offset, full, out_size):
    """1-D adaptive_avg_pool matrix over crop [offset, offset+size) of a length-`full` axis."""
    w = np.zeros((out_size, full), dtype=np.float32)
    for i in range(out_size):
        start = (i * size) // out_size
        end = -((-(i + 1) * size) // out_size)  # ceil((i+1)*size/out_size)
        w[i, offset + start:offset + end] = 1.0 / float(end - start)
    return w


def _cutout_kernel(x_ref, bt_ref, abd_ref, o_ref):
    # x_ref:   [NC*H, W]           image, rows = (flat_batch, h), cols = w
    # bt_ref:  [W, cutn*S]         all cutouts' column-pool matrices (transposed, stacked)
    # abd_ref: [cutn, NC*S, NC*H]  per-cutout block-diagonal row-pool kron(I_NC, A_k)
    # o_ref:   [NC*S, cutn*S]      lane-dense output slab
    cutn = abd_ref.shape[0]
    s = o_ref.shape[-1] // cutn

    # (1) Column pooling for ALL cutouts in one wide MXU matmul.
    v = jnp.dot(x_ref[...], bt_ref[...],
                preferred_element_type=jnp.float32)            # [NC*H, cutn*S]
    v = v.astype(x_ref.dtype)

    # (2) Per-cutout row pooling; unrolled at trace time (cutn is small & static).
    #     Each is a plain 2-D matmul: [NC*S, NC*H] @ [NC*H, S].
    pieces = []
    for k in range(cutn):
        vk = v[:, k * s:(k + 1) * s]                           # [NC*H, S]
        pieces.append(jnp.dot(abd_ref[k], vk,
                              preferred_element_type=jnp.float32))  # [NC*S, S]

    # Single lane-dense store of the whole slab (last dim = cutn*S, multiple of 128
    # for the default cutn=16, S=8).
    o_ref[...] = jnp.concatenate(pieces, axis=-1).astype(o_ref.dtype)


def make_cutouts(x, cut_size=CUT_SIZE, cutn=CUTN, cut_pow=CUT_POW, seed=0,
                 compute_dtype=jnp.float32):
    """x: [N, C, H, W] -> ([cutn*N, C, cut_size, cut_size], (A, B) pooling matrices)."""
    n, c, side_y, side_x = x.shape
    max_size = min(side_x, side_y)
    min_size = min(side_x, side_y, cut_size)
    s = cut_size
    nc = n * c

    # ---- glue: deterministic random crop parameters + separable pooling matrices ----
    rng = np.random.default_rng(seed)
    a_mats = np.zeros((cutn, s, side_y), dtype=np.float32)   # row (H) pooling
    b_mats = np.zeros((cutn, s, side_x), dtype=np.float32)   # col (W) pooling
    for k in range(cutn):
        size = int(float(rng.random()) ** cut_pow * (max_size - min_size) + min_size)
        offsetx = int(rng.integers(0, side_x - size + 1))
        offsety = int(rng.integers(0, side_y - size + 1))
        a_mats[k] = _adaptive_pool_weights(size, offsety, side_y, s)
        b_mats[k] = _adaptive_pool_weights(size, offsetx, side_x, s)

    # Stacked column pooling [W, cutn*S]: bt_wide[w, k*S+j] = B[k, j, w].
    bt_wide = np.transpose(b_mats, (2, 0, 1)).reshape(side_x, cutn * s)
    # Block-diagonal row pooling per cutout: kron(I_NC, A_k) -> [cutn, NC*S, NC*H].
    eye_nc = np.eye(nc, dtype=np.float32)
    a_bd = np.stack([np.kron(eye_nc, a_mats[k]) for k in range(cutn)], axis=0)

    # Free row-major reshape: row = (n*C + c)*H + h, col = w.
    x2d = x.reshape(nc * side_y, side_x).astype(compute_dtype)
    bt_wide_d = jnp.asarray(bt_wide, dtype=compute_dtype)
    a_bd_d = jnp.asarray(a_bd, dtype=compute_dtype)

    itemsize = jnp.dtype(compute_dtype).itemsize
    flops = (2 * (nc * side_y) * side_x * (cutn * s)
             + cutn * 2 * (nc * s) * (nc * side_y) * s)
    bytes_accessed = itemsize * (nc * side_y * side_x + side_x * cutn * s
                                 + cutn * (nc * s) * (nc * side_y)) + 4 * nc * s * cutn * s

    out_slab = pl.pallas_call(
        _cutout_kernel,
        out_shape=jax.ShapeDtypeStruct((nc * s, cutn * s), jnp.float32),
        grid_spec=pltpu.PrefetchScalarGridSpec(
            num_scalar_prefetch=0,
            grid=(1,),  # collapsed grid: all cutouts in one invocation
            in_specs=[
                pl.BlockSpec((nc * side_y, side_x), lambda i: (0, 0)),
                pl.BlockSpec((side_x, cutn * s), lambda i: (0, 0)),
                pl.BlockSpec((cutn, nc * s, nc * side_y), lambda i: (0, 0, 0)),
            ],
            out_specs=pl.BlockSpec((nc * s, cutn * s), lambda i: (0, 0)),
        ),
        compiler_params=pltpu.CompilerParams(
            dimension_semantics=("parallel",)),
        cost_estimate=pl.CostEstimate(flops=flops, transcendentals=0,
                                      bytes_accessed=bytes_accessed),
    )(x2d, bt_wide_d, a_bd_d)

    # Wrapper-side layout plumbing to torch.cat ordering (cutout-major, then batch).
    out = out_slab.reshape(n, c, s, cutn, s)        # (batch, ch, i, k, j)
    out = jnp.transpose(out, (3, 0, 1, 2, 4))       # (k, batch, ch, i, j)
    out = out.reshape(cutn * n, c, s, s)
    return out, (jnp.asarray(a_mats), jnp.asarray(b_mats))


if __name__ == "__main__":
    key = jax.random.PRNGKey(0)
    N, C, H, W = 2, 4, 16, 16
    x = jax.random.normal(key, (N, C, H, W), dtype=jnp.float32)

    out, (a_mats, b_mats) = make_cutouts(x)
    out = jax.block_until_ready(out)
    assert out.shape == (CUTN * N, C, CUT_SIZE, CUT_SIZE), out.shape

    # Plain-JAX reference using the same pooling-matrix formulation.
    x_flat = x.reshape(N * C, H, W)
    ref = jnp.einsum('ksh,nhw,ktw->knst', a_mats, x_flat, b_mats)
    ref = ref.reshape(CUTN, N, C, CUT_SIZE, CUT_SIZE).reshape(
        CUTN * N, C, CUT_SIZE, CUT_SIZE)
    np.testing.assert_allclose(np.asarray(out), np.asarray(ref), rtol=1e-5, atol=1e-5)

    # TODO(synk): original module samples crop params with torch.rand/torch.randint;
    # here they come from a seeded numpy RNG (same distribution, different stream).
    print("KERNEL_OK")
</pallas_src>

<mosaic_0001>
module attributes {stable_mosaic.version = 11 : i64} {
  func.func @_cutout_kernel(%arg0: i32, %arg1: memref<128x16xf32, #tpu.memory_space<vmem>>, %arg2: memref<16x128xf32, #tpu.memory_space<vmem>>, %arg3: memref<16x64x128xf32, #tpu.memory_space<vmem>>, %arg4: memref<64x128xf32, #tpu.memory_space<vmem>>) attributes {dimension_semantics = [#tpu.dimension_semantics<parallel>], iteration_bounds = array<i64: 1>, scalar_prefetch = 0 : i64, scratch_operands = 0 : i64, tpu.core_type = #tpu.core_type<tc>, window_params = [{pipeline_mode = #tpu.pipeline_mode<synchronous>, transform_indices = @transform_0, window_bounds = array<i64: 128, 16>}, {pipeline_mode = #tpu.pipeline_mode<synchronous>, transform_indices = @transform_1, window_bounds = array<i64: 16, 128>}, {pipeline_mode = #tpu.pipeline_mode<synchronous>, transform_indices = @transform_2, window_bounds = array<i64: 16, 64, 128>}, {pipeline_mode = #tpu.pipeline_mode<synchronous>, transform_indices = @transform_3, window_bounds = array<i64: 64, 128>}]} {
    %c0 = arith.constant 0 : index
    %c0_0 = arith.constant 0 : index
    %0 = vector.load %arg1[%c0, %c0_0] : memref<128x16xf32, #tpu.memory_space<vmem>>, vector<128x16xf32>
    %c0_1 = arith.constant 0 : index
    %c0_2 = arith.constant 0 : index
    %1 = vector.load %arg2[%c0_1, %c0_2] : memref<16x128xf32, #tpu.memory_space<vmem>>, vector<16x128xf32>
    %cst = arith.constant dense<0.000000e+00> : vector<128x128xf32>
    %2 = tpu.matmul %0, %1, %cst {dimension_numbers = #tpu.dot_dimension_numbers<[1], [0], [0], [1], [0, 0, 1, 1], [], []>} : vector<128x16xf32>, vector<16x128xf32>, vector<128x128xf32> -> vector<128x128xf32>
    %3 = vector.extract_strided_slice %2 {offsets = [0, 0], sizes = [128, 8], strides = [1, 1]} : vector<128x128xf32> to vector<128x8xf32>
    %c0_3 = arith.constant 0 : index
    %c0_4 = arith.constant 0 : index
    %c0_5 = arith.constant 0 : index
    %4 = vector.load %arg3[%c0_3, %c0_4, %c0_5] : memref<16x64x128xf32, #tpu.memory_space<vmem>>, vector<1x64x128xf32>
    %5 = vector.shape_cast %4 : vector<1x64x128xf32> to vector<64x128xf32>
    %cst_6 = arith.constant dense<0.000000e+00> : vector<64x8xf32>
    %6 = tpu.matmul %5, %3, %cst_6 {dimension_numbers = #tpu.dot_dimension_numbers<[1], [0], [0], [1], [0, 0, 1, 1], [], []>} : vector<64x128xf32>, vector<128x8xf32>, vector<64x8xf32> -> vector<64x8xf32>
    %7 = vector.extract_strided_slice %2 {offsets = [0, 8], sizes = [128, 8], strides = [1, 1]} : vector<128x128xf32> to vector<128x8xf32>
    %c1 = arith.constant 1 : index
    %c0_7 = arith.constant 0 : index
    %c0_8 = arith.constant 0 : index
    %8 = vector.load %arg3[%c1, %c0_7, %c0_8] : memref<16x64x128xf32, #tpu.memory_space<vmem>>, vector<1x64x128xf32>
    %9 = vector.shape_cast %8 : vector<1x64x128xf32> to vector<64x128xf32>
    %cst_9 = arith.constant dense<0.000000e+00> : vector<64x8xf32>
    %10 = tpu.matmul %9, %7, %cst_9 {dimension_numbers = #tpu.dot_dimension_numbers<[1], [0], [0], [1], [0, 0, 1, 1], [], []>} : vector<64x128xf32>, vector<128x8xf32>, vector<64x8xf32> -> vector<64x8xf32>
    %11 = vector.extract_strided_slice %2 {offsets = [0, 16], sizes = [128, 8], strides = [1, 1]} : vector<128x128xf32> to vector<128x8xf32>
    %c2 = arith.constant 2 : index
    %c0_10 = arith.constant 0 : index
    %c0_11 = arith.constant 0 : index
    %12 = vector.load %arg3[%c2, %c0_10, %c0_11] : memref<16x64x128xf32, #tpu.memory_space<vmem>>, vector<1x64x128xf32>
    %13 = vector.shape_cast %12 : vector<1x64x128xf32> to vector<64x128xf32>
    %cst_12 = arith.constant dense<0.000000e+00> : vector<64x8xf32>
    %14 = tpu.matmul %13, %11, %cst_12 {dimension_numbers = #tpu.dot_dimension_numbers<[1], [0], [0], [1], [0, 0, 1, 1], [], []>} : vector<64x128xf32>, vector<128x8xf32>, vector<64x8xf32> -> vector<64x8xf32>
    %15 = vector.extract_strided_slice %2 {offsets = [0, 24], sizes = [128, 8], strides = [1, 1]} : vector<128x128xf32> to vector<128x8xf32>
    %c3 = arith.constant 3 : index
    %c0_13 = arith.constant 0 : index
    %c0_14 = arith.constant 0 : index
    %16 = vector.load %arg3[%c3, %c0_13, %c0_14] : memref<16x64x128xf32, #tpu.memory_space<vmem>>, vector<1x64x128xf32>
    %17 = vector.shape_cast %16 : vector<1x64x128xf32> to vector<64x128xf32>
    %cst_15 = arith.constant dense<0.000000e+00> : vector<64x8xf32>
    %18 = tpu.matmul %17, %15, %cst_15 {dimension_numbers = #tpu.dot_dimension_numbers<[1], [0], [0], [1], [0, 0, 1, 1], [], []>} : vector<64x128xf32>, vector<128x8xf32>, vector<64x8xf32> -> vector<64x8xf32>
    %19 = vector.extract_strided_slice %2 {offsets = [0, 32], sizes = [128, 8], strides = [1, 1]} : vector<128x128xf32> to vector<128x8xf32>
    %c4 = arith.constant 4 : index
    %c0_16 = arith.constant 0 : index
    %c0_17 = arith.constant 0 : index
    %20 = vector.load %arg3[%c4, %c0_16, %c0_17] : memref<16x64x128xf32, #tpu.memory_space<vmem>>, vector<1x64x128xf32>
    %21 = vector.shape_cast %20 : vector<1x64x128xf32> to vector<64x128xf32>
    %cst_18 = arith.constant dense<0.000000e+00> : vector<64x8xf32>
    %22 = tpu.matmul %21, %19, %cst_18 {dimension_numbers = #tpu.dot_dimension_numbers<[1], [0], [0], [1], [0, 0, 1, 1], [], []>} : vector<64x128xf32>, vector<128x8xf32>, vector<64x8xf32> -> vector<64x8xf32>
    %23 = vector.extract_strided_slice %2 {offsets = [0, 40], sizes = [128, 8], strides = [1, 1]} : vector<128x128xf32> to vector<128x8xf32>
    %c5 = arith.constant 5 : index
    %c0_19 = arith.constant 0 : index
    %c0_20 = arith.constant 0 : index
    %24 = vector.load %arg3[%c5, %c0_19, %c0_20] : memref<16x64x128xf32, #tpu.memory_space<vmem>>, vector<1x64x128xf32>
    %25 = vector.shape_cast %24 : vector<1x64x128xf32> to vector<64x128xf32>
    %cst_21 = arith.constant dense<0.000000e+00> : vector<64x8xf32>
    %26 = tpu.matmul %25, %23, %cst_21 {dimension_numbers = #tpu.dot_dimension_numbers<[1], [0], [0], [1], [0, 0, 1, 1], [], []>} : vector<64x128xf32>, vector<128x8xf32>, vector<64x8xf32> -> vector<64x8xf32>
    %27 = vector.extract_strided_slice %2 {offsets = [0, 48], sizes = [128, 8], strides = [1, 1]} : vector<128x128xf32> to vector<128x8xf32>
    %c6 = arith.constant 6 : index
    %c0_22 = arith.constant 0 : index
    %c0_23 = arith.constant 0 : index
    %28 = vector.load %arg3[%c6, %c0_22, %c0_23] : memref<16x64x128xf32, #tpu.memory_space<vmem>>, vector<1x64x128xf32>
    %29 = vector.shape_cast %28 : vector<1x64x128xf32> to vector<64x128xf32>
    %cst_24 = arith.constant dense<0.000000e+00> : vector<64x8xf32>
    %30 = tpu.matmul %29, %27, %cst_24 {dimension_numbers = #tpu.dot_dimension_numbers<[1], [0], [0], [1], [0, 0, 1, 1], [], []>} : vector<64x128xf32>, vector<128x8xf32>, vector<64x8xf32> -> vector<64x8xf32>
    %31 = vector.extract_strided_slice %2 {offsets = [0, 56], sizes = [128, 8], strides = [1, 1]} : vector<128x128xf32> to vector<128x8xf32>
    %c7 = arith.constant 7 : index
    %c0_25 = arith.constant 0 : index
    %c0_26 = arith.constant 0 : index
    %32 = vector.load %arg3[%c7, %c0_25, %c0_26] : memref<16x64x128xf32, #tpu.memory_space<vmem>>, vector<1x64x128xf32>
    %33 = vector.shape_cast %32 : vector<1x64x128xf32> to vector<64x128xf32>
    %cst_27 = arith.constant dense<0.000000e+00> : vector<64x8xf32>
    %34 = tpu.matmul %33, %31, %cst_27 {dimension_numbers = #tpu.dot_dimension_numbers<[1], [0], [0], [1], [0, 0, 1, 1], [], []>} : vector<64x128xf32>, vector<128x8xf32>, vector<64x8xf32> -> vector<64x8xf32>
    %35 = vector.extract_strided_slice %2 {offsets = [0, 64], sizes = [128, 8], strides = [1, 1]} : vector<128x128xf32> to vector<128x8xf32>
    %c8 = arith.constant 8 : index
    %c0_28 = arith.constant 0 : index
    %c0_29 = arith.constant 0 : index
    %36 = vector.load %arg3[%c8, %c0_28, %c0_29] : memref<16x64x128xf32, #tpu.memory_space<vmem>>, vector<1x64x128xf32>
    %37 = vector.shape_cast %36 : vector<1x64x128xf32> to vector<64x128xf32>
    %cst_30 = arith.constant dense<0.000000e+00> : vector<64x8xf32>
    %38 = tpu.matmul %37, %35, %cst_30 {dimension_numbers = #tpu.dot_dimension_numbers<[1], [0], [0], [1], [0, 0, 1, 1], [], []>} : vector<64x128xf32>, vector<128x8xf32>, vector<64x8xf32> -> vector<64x8xf32>
    %39 = vector.extract_strided_slice %2 {offsets = [0, 72], sizes = [128, 8], strides = [1, 1]} : vector<128x128xf32> to vector<128x8xf32>
    %c9 = arith.constant 9 : index
    %c0_31 = arith.constant 0 : index
    %c0_32 = arith.constant 0 : index
    %40 = vector.load %arg3[%c9, %c0_31, %c0_32] : memref<16x64x128xf32, #tpu.memory_space<vmem>>, vector<1x64x128xf32>
    %41 = vector.shape_cast %40 : vector<1x64x128xf32> to vector<64x128xf32>
    %cst_33 = arith.constant dense<0.000000e+00> : vector<64x8xf32>
    %42 = tpu.matmul %41, %39, %cst_33 {dimension_numbers = #tpu.dot_dimension_numbers<[1], [0], [0], [1], [0, 0, 1, 1], [], []>} : vector<64x128xf32>, vector<128x8xf32>, vector<64x8xf32> -> vector<64x8xf32>
    %43 = vector.extract_strided_slice %2 {offsets = [0, 80], sizes = [128, 8], strides = [1, 1]} : vector<128x128xf32> to vector<128x8xf32>
    %c10 = arith.constant 10 : index
    %c0_34 = arith.constant 0 : index
    %c0_35 = arith.constant 0 : index
    %44 = vector.load %arg3[%c10, %c0_34, %c0_35] : memref<16x64x128xf32, #tpu.memory_space<vmem>>, vector<1x64x128xf32>
    %45 = vector.shape_cast %44 : vector<1x64x128xf32> to vector<64x128xf32>
    %cst_36 = arith.constant dense<0.000000e+00> : vector<64x8xf32>
    %46 = tpu.matmul %45, %43, %cst_36 {dimension_numbers = #tpu.dot_dimension_numbers<[1], [0], [0], [1], [0, 0, 1, 1], [], []>} : vector<64x128xf32>, vector<128x8xf32>, vector<64x8xf32> -> vector<64x8xf32>
    %47 = vector.extract_strided_slice %2 {offsets = [0, 88], sizes = [128, 8], strides = [1, 1]} : vector<128x128xf32> to vector<128x8xf32>
    %c11 = arith.constant 11 : index
    %c0_37 = arith.constant 0 : index
    %c0_38 = arith.constant 0 : index
    %48 = vector.load %arg3[%c11, %c0_37, %c0_38] : memref<16x64x128xf32, #tpu.memory_space<vmem>>, vector<1x64x128xf32>
    %49 = vector.shape_cast %48 : vector<1x64x128xf32> to vector<64x128xf32>
    %cst_39 = arith.constant dense<0.000000e+00> : vector<64x8xf32>
    %50 = tpu.matmul %49, %47, %cst_39 {dimension_numbers = #tpu.dot_dimension_numbers<[1], [0], [0], [1], [0, 0, 1, 1], [], []>} : vector<64x128xf32>, vector<128x8xf32>, vector<64x8xf32> -> vector<64x8xf32>
    %51 = vector.extract_strided_slice %2 {offsets = [0, 96], sizes = [128, 8], strides = [1, 1]} : vector<128x128xf32> to vector<128x8xf32>
    %c12 = arith.constant 12 : index
    %c0_40 = arith.constant 0 : index
    %c0_41 = arith.constant 0 : index
    %52 = vector.load %arg3[%c12, %c0_40, %c0_41] : memref<16x64x128xf32, #tpu.memory_space<vmem>>, vector<1x64x128xf32>
    %53 = vector.shape_cast %52 : vector<1x64x128xf32> to vector<64x128xf32>
    %cst_42 = arith.constant dense<0.000000e+00> : vector<64x8xf32>
    %54 = tpu.matmul %53, %51, %cst_42 {dimension_numbers = #tpu.dot_dimension_numbers<[1], [0], [0], [1], [0, 0, 1, 1], [], []>} : vector<64x128xf32>, vector<128x8xf32>, vector<64x8xf32> -> vector<64x8xf32>
    %55 = vector.extract_strided_slice %2 {offsets = [0, 104], sizes = [128, 8], strides = [1, 1]} : vector<128x128xf32> to vector<128x8xf32>
    %c13 = arith.constant 13 : index
    %c0_43 = arith.constant 0 : index
    %c0_44 = arith.constant 0 : index
    %56 = vector.load %arg3[%c13, %c0_43, %c0_44] : memref<16x64x128xf32, #tpu.memory_space<vmem>>, vector<1x64x128xf32>
    %57 = vector.shape_cast %56 : vector<1x64x128xf32> to vector<64x128xf32>
    %cst_45 = arith.constant dense<0.000000e+00> : vector<64x8xf32>
    %58 = tpu.matmul %57, %55, %cst_45 {dimension_numbers = #tpu.dot_dimension_numbers<[1], [0], [0], [1], [0, 0, 1, 1], [], []>} : vector<64x128xf32>, vector<128x8xf32>, vector<64x8xf32> -> vector<64x8xf32>
    %59 = vector.extract_strided_slice %2 {offsets = [0, 112], sizes = [128, 8], strides = [1, 1]} : vector<128x128xf32> to vector<128x8xf32>
    %c14 = arith.constant 14 : index
    %c0_46 = arith.constant 0 : index
    %c0_47 = arith.constant 0 : index
    %60 = vector.load %arg3[%c14, %c0_46, %c0_47] : memref<16x64x128xf32, #tpu.memory_space<vmem>>, vector<1x64x128xf32>
    %61 = vector.shape_cast %60 : vector<1x64x128xf32> to vector<64x128xf32>
    %cst_48 = arith.constant dense<0.000000e+00> : vector<64x8xf32>
    %62 = tpu.matmul %61, %59, %cst_48 {dimension_numbers = #tpu.dot_dimension_numbers<[1], [0], [0], [1], [0, 0, 1, 1], [], []>} : vector<64x128xf32>, vector<128x8xf32>, vector<64x8xf32> -> vector<64x8xf32>
    %63 = vector.extract_strided_slice %2 {offsets = [0, 120], sizes = [128, 8], strides = [1, 1]} : vector<128x128xf32> to vector<128x8xf32>
    %c15 = arith.constant 15 : index
    %c0_49 = arith.constant 0 : index
    %c0_50 = arith.constant 0 : index
    %64 = vector.load %arg3[%c15, %c0_49, %c0_50] : memref<16x64x128xf32, #tpu.memory_space<vmem>>, vector<1x64x128xf32>
    %65 = vector.shape_cast %64 : vector<1x64x128xf32> to vector<64x128xf32>
    %cst_51 = arith.constant dense<0.000000e+00> : vector<64x8xf32>
    %66 = tpu.matmul %65, %63, %cst_51 {dimension_numbers = #tpu.dot_dimension_numbers<[1], [0], [0], [1], [0, 0, 1, 1], [], []>} : vector<64x128xf32>, vector<128x8xf32>, vector<64x8xf32> -> vector<64x8xf32>
    %67 = tpu.concatenate %6, %10, %14, %18, %22, %26, %30, %34, %38, %42, %46, %50, %54, %58, %62, %66 in 1 : vector<64x8xf32>, vector<64x8xf32>, vector<64x8xf32>, vector<64x8xf32>, vector<64x8xf32>, vector<64x8xf32>, vector<64x8xf32>, vector<64x8xf32>, vector<64x8xf32>, vector<64x8xf32>, vector<64x8xf32>, vector<64x8xf32>, vector<64x8xf32>, vector<64x8xf32>, vector<64x8xf32>, vector<64x8xf32> -> vector<64x128xf32>
    %c0_52 = arith.constant 0 : index
    %c0_53 = arith.constant 0 : index
    %68 = vector.load %arg4[%c0_52, %c0_53] : memref<64x128xf32, #tpu.memory_space<vmem>>, vector<64x128xf32>
    tpu.vector_store %arg4[%c0_52, %c0_53], %67 {strides = array<i32>} : memref<64x128xf32, #tpu.memory_space<vmem>>, vector<64x128xf32>,
    return
  }
  func.func @transform_0(%arg0: i32) -> (i32, i32) {
    %c0_i32 = arith.constant 0 : i32
    %c0_i32_0 = arith.constant 0 : i32
    %c0_i32_1 = arith.constant 0 : i32
    return %c0_i32, %c0_i32_0 : i32, i32
  }
  func.func @transform_1(%arg0: i32) -> (i32, i32) {
    %c0_i32 = arith.constant 0 : i32
    %c0_i32_0 = arith.constant 0 : i32
    %c0_i32_1 = arith.constant 0 : i32
    return %c0_i32, %c0_i32_0 : i32, i32
  }
  func.func @transform_2(%arg0: i32) -> (i32, i32, i32) {
    %c0_i32 = arith.constant 0 : i32
    %c0_i32_0 = arith.constant 0 : i32
    %c0_i32_1 = arith.constant 0 : i32
    %c0_i32_2 = arith.constant 0 : i32
    return %c0_i32, %c0_i32_0, %c0_i32_1 : i32, i32, i32
  }
  func.func @transform_3(%arg0: i32) -> (i32, i32) {
    %c0_i32 = arith.constant 0 : i32
    %c0_i32_0 = arith.constant 0 : i32
    %c0_i32_1 = arith.constant 0 : i32
    return %c0_i32, %c0_i32_0 : i32, i32
  }
}

</mosaic_0001>

<llo_original>
// kernel: tpu_custom_call.1
$region0: #{tpu_custom_call.1}
  #allocation0 [shape = 'u32[]', space=smem, size = 0x4, offset = 0x4, fixed_abs, tag = 'smem constant byte address 0x4 - core index']
  #allocation1 [shape = 'u32[144,128]{1,0:T(1,128)}', space=vmem, size = 0x12000, scoped, tag = 'internal scratch']
  %s0 = inlined_call_operand.vmem [shape: f32[128,16], index: 0, kind: input, shape index: {}]
  %s1 = inlined_call_operand.vmem [shape: f32[16,128], index: 1, kind: input, shape index: {}]
  %s2 = inlined_call_operand.hbm [shape: f32[16,64,128], index: 2, kind: input, shape index: {}]
  %s3 = inlined_call_operand.hbm [shape: f32[64,128], index: 3, kind: output, shape index: {}]
  %s4 = sld [smem:[#allocation0]]
  $region26: #{tpu_custom_call.1} parent=0
    _
  %s6 = ssub.s32 1, %s4
  %s7 = scalar_select 0, %s6, %s4
  $region1: #{tpu_custom_call.1} parent=0
    #allocation2 [shape = 'u8[524288]{0}', space=vmem, size = 0x80000, scoped, tag = 'input window, operand 2, single buffered']
    #allocation3 [shape = 's32[1]{0}', space=sflag, size = 0x4, scoped, tag = 'scoped memory for tpu_custom_call.1']
    #allocation4 [shape = 's32[1]{0}', space=sflag, size = 0x4, scoped, tag = 'scoped memory for tpu_custom_call.1']
    #allocation5 [shape = 'u8[32768]{0}', space=vmem, size = 0x8000, scoped, tag = 'output window, operand 0, single buffered']
    %8 = vsyncpa [#allocation3], 0
    %9 = vsyncpa [#allocation4], 0
    // Predicated region
    $region2: #{tpu_custom_call.1} parent=1 // pred_check
      _
    $region3: #{tpu_custom_call.1} parent=1 // pred_check_branch
      %11 = sbr.rel (0) target = $region5
    $region4: #{tpu_custom_call.1} parent=1 // pred_region
      _
    $region5: #{tpu_custom_call.1} parent=1 // pred_fallthru
      _
    // Predicated region
    $region6: #{tpu_custom_call.1} parent=1 // pred_check
      _
    $region7: #{tpu_custom_call.1} parent=1 // pred_check_branch
      %13 = sbr.rel (0) target = $region9
    $region8: #{tpu_custom_call.1} parent=1 // pred_region
      _
    $region9: #{tpu_custom_call.1} parent=1 // pred_fallthru
      _
    // Predicated region
    $region10: #{tpu_custom_call.1} parent=1 // pred_check
      _
    $region11: #{tpu_custom_call.1} parent=1 // pred_check_branch
      %15 = sbr.rel (0) target = $region13
    $region12: #{tpu_custom_call.1} parent=1 // pred_region
      %s17 = ssub.s32 16384, 16384
      %18 = vsyncadd [#allocation3], %s17
      %s19 = sshll.u32 [#allocation2], 4
      %s20 = int_to_ptr.vmem [resolvable:$true] %s19
      %25 = dma.hbm_to_vmem [thread:$0]  %s2, 16384, %s20, [#allocation3], 128, 128, 8
    $region13: #{tpu_custom_call.1} parent=1 // pred_fallthru
      _
    // Predicated region
    $region14: #{tpu_custom_call.1} parent=1 // pred_check
      _
    $region15: #{tpu_custom_call.1} parent=1 // pred_check_branch
      %27 = sbr.rel (0) target = $region17
    $region16: #{tpu_custom_call.1} parent=1 // pred_region
      %28 = dma.done [#allocation3], 16384
    $region17: #{tpu_custom_call.1} parent=1 // pred_fallthru
      _
    %v29 = vld [vmem:[%s0] sm:$0xff]
    %v30 = vld [vmem:[%s0 + $0x8] sm:$0xff]
    %v31 = vld [vmem:[%s0 + $0x10] sm:$0xff]
    %v32 = vld [vmem:[%s0 + $0x18] sm:$0xff]
    %v33 = vld [vmem:[%s0 + $0x20] sm:$0xff]
    %v34 = vld [vmem:[%s0 + $0x28] sm:$0xff]
    %v35 = vld [vmem:[%s0 + $0x30] sm:$0xff]
    %v36 = vld [vmem:[%s0 + $0x38] sm:$0xff]
    %v37 = vld [vmem:[%s0 + $0x40] sm:$0xff]
    %v38 = vld [vmem:[%s0 + $0x48] sm:$0xff]
    %v39 = vld [vmem:[%s0 + $0x50] sm:$0xff]
    %v40 = vld [vmem:[%s0 + $0x58] sm:$0xff]
    %v41 = vld [vmem:[%s0 + $0x60] sm:$0xff]
    %v42 = vld [vmem:[%s0 + $0x68] sm:$0xff]
    %v43 = vld [vmem:[%s0 + $0x70] sm:$0xff]
    %v44 = vld [vmem:[%s0 + $0x78] sm:$0xff]
    %v45 = vld [vmem:[%s1] sm:$0xff]
    %v46 = vld [vmem:[%s1 + $0x8] sm:$0xff]
    %vm47 = vcmask 130048
    %v49 = vsel %vm47, %v29, 0
    %v52 = vsel %vm47, %v30, 0
    %v55 = vsel %vm47, %v31, 0
    %v58 = vsel %vm47, %v32, 0
    %v61 = vsel %vm47, %v33, 0
    %v64 = vsel %vm47, %v34, 0
    %v67 = vsel %vm47, %v35, 0
    %v70 = vsel %vm47, %v36, 0
    %v73 = vsel %vm47, %v37, 0
    %v76 = vsel %vm47, %v38, 0
    %v79 = vsel %vm47, %v39, 0
    %v82 = vsel %vm47, %v40, 0
    %v85 = vsel %vm47, %v41, 0
    %v88 = vsel %vm47, %v42, 0
    %v91 = vsel %vm47, %v43, 0
    %v94 = vsel %vm47, %v44, 0
    %96 = vmatprep.subr.mxu0 0.0
    %97 = vmatpush1.msra.mxu0 %v45
    %98 = vmatprep.subr.mxu0 0.0
    %99 = vmatpush1.msra.mxu0 %v46
    %100 = vmatprep.subr.mxu0 0.0
    %101 = vmatpush1.msra.mxu0 0.0
    %102 = vmatprep.subr.mxu0 0.0
    %103 = vmatpush1.msra.mxu0 0.0
    %104 = vmatprep.subr.mxu0 0.0
    %105 = vmatpush1.msra.mxu0 0.0
    %106 = vmatprep.subr.mxu0 0.0
    %107 = vmatpush1.msra.mxu0 0.0
    %108 = vmatprep.subr.mxu0 0.0
    %109 = vmatpush1.msra.mxu0 0.0
    %110 = vmatprep.subr.mxu0 0.0
    %111 = vmatpush1.msra.mxu0 0.0
    %112 = vmatprep.subr.mxu0 0.0
    %113 = vmatpush1.msra.mxu0 0.0
    %114 = vmatprep.subr.mxu0 0.0
    %115 = vmatpush1.msra.mxu0 0.0
    %116 = vmatprep.subr.mxu0 0.0
    %117 = vmatpush1.msra.mxu0 0.0
    %118 = vmatprep.subr.mxu0 0.0
    %119 = vmatpush1.msra.mxu0 0.0
    %120 = vmatprep.subr.mxu0 0.0
    %121 = vmatpush1.msra.mxu0 0.0
    %122 = vmatprep.subr.mxu0 0.0
    %123 = vmatpush1.msra.mxu0 0.0
    %124 = vmatprep.subr.mxu0 0.0
    %125 = vmatpush1.msra.mxu0 0.0
    %126 = vmatprep.subr.mxu0 0.0
    %127 = vmatpush1.msra.mxu0 0.0
    %128 = vmatprep.subr.mxu0 0.0
    %129 = vmatpush1.msra.mxu0 0.0
    %130 = vmatprep.subr.mxu0 0.0
    %131 = vmatpush1.msra.mxu0 0.0
    %132 = vmatprep.subr.mxu0 0.0
    %133 = vmatpush1.msra.mxu0 0.0
    %134 = vmatprep.subr.mxu0 0.0
    %135 = vmatpush1.msra.mxu0 0.0
    %136 = vmatprep.subr.mxu0 0.0
    %137 = vmatpush1.msra.mxu0 0.0
    %138 = vmatprep.subr.mxu0 0.0
    %139 = vmatpush1.msra.mxu0 0.0
    %140 = vmatprep.subr.mxu0 0.0
    %141 = vmatpush1.msra.mxu0 0.0
    %142 = vmatprep.subr.mxu0 0.0
    %143 = vmatpush1.msra.mxu0 0.0
    %144 = vmatprep.subr.mxu0 0.0
    %145 = vmatpush1.msra.mxu0 0.0
    %146 = vmatprep.subr.mxu0 0.0
    %147 = vmatpush1.msra.mxu0 0.0
    %148 = vmatprep.subr.mxu0 0.0
    %149 = vmatpush1.msra.mxu0 0.0
    %150 = vmatprep.subr.mxu0 0.0
    %151 = vmatpush1.msra.mxu0 0.0
    %152 = vmatprep.subr.mxu0 0.0
    %153 = vmatpush1.msra.mxu0 0.0
    %154 = vmatprep.subr.mxu0 0.0
    %155 = vmatpush1.msra.mxu0 0.0
    %156 = vmatprep.subr.mxu0 0.0
    %157 = vmatpush1.msra.mxu0 0.0
    %158 = vmatprep.subr.mxu0 0.0
    %159 = vmatpush1.msra.mxu0 0.0
    %160 = vmatprep.mubr.f32.mxu0 0.0
    %161 = vmatmul.mubr.f32.gmra.mrb[0].mxu0 %v49
    %v162 = vpop.f32.mrb[0].mxu0
    %v163 = vadd.f32 0.0, %v162
    %v164 = vpop.f32.mrb[0].mxu0
    %165 = vmatprep.mubr.f32.mxu0 0.0
    %166 = vmatmul.mubr.f32.gmra.mrb[0].mxu0 %v52
    %v167 = vpop.f32.mrb[0].mxu0
    %v168 = vadd.f32 0.0, %v167
    %v169 = vpop.f32.mrb[0].mxu0
    %170 = vmatprep.mubr.f32.mxu0 0.0
    %171 = vmatmul.mubr.f32.gmra.mrb[0].mxu0 %v55
    %v172 = vpop.f32.mrb[0].mxu0
    %v173 = vadd.f32 0.0, %v172
    %v174 = vpop.f32.mrb[0].mxu0
    %175 = vmatprep.mubr.f32.mxu0 0.0
    %176 = vmatmul.mubr.f32.gmra.mrb[0].mxu0 %v58
    %v177 = vpop.f32.mrb[0].mxu0
    %v178 = vadd.f32 0.0, %v177
    %v179 = vpop.f32.mrb[0].mxu0
    %180 = vmatprep.mubr.f32.mxu0 0.0
    %181 = vmatmul.mubr.f32.gmra.mrb[0].mxu0 %v61
    %v182 = vpop.f32.mrb[0].mxu0
    %v183 = vadd.f32 0.0, %v182
    %v184 = vpop.f32.mrb[0].mxu0
    %185 = vmatprep.mubr.f32.mxu0 0.0
    %186 = vmatmul.mubr.f32.gmra.mrb[0].mxu0 %v64
    %v187 = vpop.f32.mrb[0].mxu0
    %v188 = vadd.f32 0.0, %v187
    %v189 = vpop.f32.mrb[0].mxu0
    %190 = vmatprep.mubr.f32.mxu0 0.0
    %191 = vmatmul.mubr.f32.gmra.mrb[0].mxu0 %v67
    %v192 = vpop.f32.mrb[0].mxu0
    %v193 = vadd.f32 0.0, %v192
    %v194 = vpop.f32.mrb[0].mxu0
    %195 = vmatprep.mubr.f32.mxu0 0.0
    %196 = vmatmul.mubr.f32.gmra.mrb[0].mxu0 %v70
    %v197 = vpop.f32.mrb[0].mxu0
    %v198 = vadd.f32 0.0, %v197
    %v199 = vpop.f32.mrb[0].mxu0
    %200 = vmatprep.mubr.f32.mxu0 0.0
    %201 = vmatmul.mubr.f32.gmra.mrb[0].mxu0 %v73
    %v202 = vpop.f32.mrb[0].mxu0
    %v203 = vadd.f32 0.0, %v202
    %v204 = vpop.f32.mrb[0].mxu0
    %205 = vmatprep.mubr.f32.mxu0 0.0
    %206 = vmatmul.mubr.f32.gmra.mrb[0].mxu0 %v76
    %v207 = vpop.f32.mrb[0].mxu0
    %v208 = vadd.f32 0.0, %v207
    %v209 = vpop.f32.mrb[0].mxu0
    %210 = vmatprep.mubr.f32.mxu0 0.0
    %211 = vmatmul.mubr.f32.gmra.mrb[0].mxu0 %v79
    %v212 = vpop.f32.mrb[0].mxu0
    %v213 = vadd.f32 0.0, %v212
    %v214 = vpop.f32.mrb[0].mxu0
    %215 = vmatprep.mubr.f32.mxu0 0.0
    %216 = vmatmul.mubr.f32.gmra.mrb[0].mxu0 %v82
    %v217 = vpop.f32.mrb[0].mxu0
    %v218 = vadd.f32 0.0, %v217
    %v219 = vpop.f32.mrb[0].mxu0
    %220 = vmatprep.mubr.f32.mxu0 0.0
    %221 = vmatmul.mubr.f32.gmra.mrb[0].mxu0 %v85
    %v222 = vpop.f32.mrb[0].mxu0
    %v223 = vadd.f32 0.0, %v222
    %v224 = vpop.f32.mrb[0].mxu0
    %225 = vmatprep.mubr.f32.mxu0 0.0
    %226 = vmatmul.mubr.f32.gmra.mrb[0].mxu0 %v88
    %v227 = vpop.f32.mrb[0].mxu0
    %v228 = vadd.f32 0.0, %v227
    %v229 = vpop.f32.mrb[0].mxu0
    %230 = vmatprep.mubr.f32.mxu0 0.0
    %231 = vmatmul.mubr.f32.gmra.mrb[0].mxu0 %v91
    %v232 = vpop.f32.mrb[0].mxu0
    %v233 = vadd.f32 0.0, %v232
    %v234 = vpop.f32.mrb[0].mxu0
    %235 = vmatprep.mubr.f32.mxu0 0.0
    %236 = vmatmul.mubr.f32.gmra.mrb[0].mxu0 %v94
    %v237 = vpop.f32.mrb[0].mxu0
    %v238 = vadd.f32 0.0, %v237
    %v239 = vpop.f32.mrb[0].mxu0
    %240 = vdwg.mxu0
    %v241 = vld [vmem:[#allocation2] sm:$0xff]
    %v242 = vld [vmem:[#allocation2 + $0x8] sm:$0xff]
    %v243 = vld [vmem:[#allocation2 + $0x10] sm:$0xff]
    %v244 = vld [vmem:[#allocation2 + $0x18] sm:$0xff]
    %v245 = vld [vmem:[#allocation2 + $0x20] sm:$0xff]
    %v246 = vld [vmem:[#allocation2 + $0x28] sm:$0xff]
    %v247 = vld [vmem:[#allocation2 + $0x30] sm:$0xff]
    %v248 = vld [vmem:[#allocation2 + $0x38] sm:$0xff]
    %249 = vmatprep.subr.mxu0 0.0
    %250 = vmatpush1.msra.mxu0 %v163
    %251 = vmatprep.subr.mxu0 0.0
    %252 = vmatpush1.msra.mxu0 %v168
    %253 = vmatprep.subr.mxu0 0.0
    %254 = vmatpush1.msra.mxu0 %v173
    %255 = vmatprep.subr.mxu0 0.0
    %256 = vmatpush1.msra.mxu0 %v178
    %257 = vmatprep.subr.mxu0 0.0
    %258 = vmatpush1.msra.mxu0 %v183
    %259 = vmatprep.subr.mxu0 0.0
    %260 = vmatpush1.msra.mxu0 %v188
    %261 = vmatprep.subr.mxu0 0.0
    %262 = vmatpush1.msra.mxu0 %v193
    %263 = vmatprep.subr.mxu0 0.0
    %264 = vmatpush1.msra.mxu0 %v198
    %265 = vmatprep.subr.mxu0 0.0
    %266 = vmatpush1.msra.mxu0 %v203
    %267 = vmatprep.subr.mxu0 0.0
    %268 = vmatpush1.msra.mxu0 %v208
    %269 = vmatprep.subr.mxu0 0.0
    %270 = vmatpush1.msra.mxu0 %v213
    %271 = vmatprep.subr.mxu0 0.0
    %272 = vmatpush1.msra.mxu0 %v218
    %273 = vmatprep.subr.mxu0 0.0
    %274 = vmatpush1.msra.mxu0 %v223
    %275 = vmatprep.subr.mxu0 0.0
    %276 = vmatpush1.msra.mxu0 %v228
    %277 = vmatprep.subr.mxu0 0.0
    %278 = vmatpush1.msra.mxu0 %v233
    %279 = vmatprep.subr.mxu0 0.0
    %280 = vmatpush1.msra.mxu0 %v238
    %281 = vmatprep.subr.mxu0 0.0
    %282 = vmatpush1.msra.mxu0 0.0
    %283 = vmatprep.subr.mxu0 0.0
    %284 = vmatpush1.msra.mxu0 0.0
    %285 = vmatprep.subr.mxu0 0.0
    %286 = vmatpush1.msra.mxu0 0.0
    %287 = vmatprep.subr.mxu0 0.0
    %288 = vmatpush1.msra.mxu0 0.0
    %289 = vmatprep.subr.mxu0 0.0
    %290 = vmatpush1.msra.mxu0 0.0
    %291 = vmatprep.subr.mxu0 0.0
    %292 = vmatpush1.msra.mxu0 0.0
    %293 = vmatprep.subr.mxu0 0.0
    %294 = vmatpush1.msra.mxu0 0.0
    %295 = vmatprep.subr.mxu0 0.0
    %296 = vmatpush1.msra.mxu0 0.0
    %297 = vmatprep.subr.mxu0 0.0
    %298 = vmatpush1.msra.mxu0 0.0
    %299 = vmatprep.subr.mxu0 0.0
    %300 = vmatpush1.msra.mxu0 0.0
    %301 = vmatprep.subr.mxu0 0.0
    %302 = vmatpush1.msra.mxu0 0.0
    %303 = vmatprep.subr.mxu0 0.0
    %304 = vmatpush1.msra.mxu0 0.0
    %305 = vmatprep.subr.mxu0 0.0
    %306 = vmatpush1.msra.mxu0 0.0
    %307 = vmatprep.subr.mxu0 0.0
    %308 = vmatpush1.msra.mxu0 0.0
    %309 = vmatprep.subr.mxu0 0.0
    %310 = vmatpush1.msra.mxu0 0.0
    %311 = vmatprep.subr.mxu0 0.0
    %312 = vmatpush1.msra.mxu0 0.0
    %313 = vmatprep.mubr.f32.mxu0 0.0
    %314 = vmatmul.mubr.f32.gmra.mrb[0].mxu0 %v241
    %v315 = vpop.f32.mrb[0].mxu0
    %v316 = vadd.f32 0.0, %v315
    %v317 = vpop.f32.mrb[0].mxu0
    %318 = vmatprep.mubr.f32.mxu0 0.0
    %319 = vmatmul.mubr.f32.gmra.mrb[0].mxu0 %v242
    %v320 = vpop.f32.mrb[0].mxu0
    %v321 = vadd.f32 0.0, %v320
    %v322 = vpop.f32.mrb[0].mxu0
    %323 = vmatprep.mubr.f32.mxu0 0.0
    %324 = vmatmul.mubr.f32.gmra.mrb[0].mxu0 %v243
    %v325 = vpop.f32.mrb[0].mxu0
    %v326 = vadd.f32 0.0, %v325
    %v327 = vpop.f32.mrb[0].mxu0
    %328 = vmatprep.mubr.f32.mxu0 0.0
    %329 = vmatmul.mubr.f32.gmra.mrb[0].mxu0 %v244
    %v330 = vpop.f32.mrb[0].mxu0
    %v331 = vadd.f32 0.0, %v330
    %v332 = vpop.f32.mrb[0].mxu0
    %333 = vmatprep.mubr.f32.mxu0 0.0
    %334 = vmatmul.mubr.f32.gmra.mrb[0].mxu0 %v245
    %v335 = vpop.f32.mrb[0].mxu0
    %v336 = vadd.f32 0.0, %v335
    %v337 = vpop.f32.mrb[0].mxu0
    %338 = vmatprep.mubr.f32.mxu0 0.0
    %339 = vmatmul.mubr.f32.gmra.mrb[0].mxu0 %v246
    %v340 = vpop.f32.mrb[0].mxu0
    %v341 = vadd.f32 0.0, %v340
    %v342 = vpop.f32.mrb[0].mxu0
    %343 = vmatprep.mubr.f32.mxu0 0.0
    %344 = vmatmul.mubr.f32.gmra.mrb[0].mxu0 %v247
    %v345 = vpop.f32.mrb[0].mxu0
    %v346 = vadd.f32 0.0, %v345
    %v347 = vpop.f32.mrb[0].mxu0
    %348 = vmatprep.mubr.f32.mxu0 0.0
    %349 = vmatmul.mubr.f32.gmra.mrb[0].mxu0 %v248
    %v350 = vpop.f32.mrb[0].mxu0
    %v351 = vadd.f32 0.0, %v350
    %v352 = vpop.f32.mrb[0].mxu0
    %353 = vdwg.mxu0
    %s354 = scalar_lea.vmem [#allocation2], 64
    %v355 = vld [vmem:[%s354] sm:$0xff]
    %v356 = vld [vmem:[%s354 + $0x8] sm:$0xff]
    %v357 = vld [vmem:[%s354 + $0x10] sm:$0xff]
    %v358 = vld [vmem:[%s354 + $0x18] sm:$0xff]
    %v359 = vld [vmem:[%s354 + $0x20] sm:$0xff]
    %v360 = vld [vmem:[%s354 + $0x28] sm:$0xff]
    %v361 = vld [vmem:[%s354 + $0x30] sm:$0xff]
    %v362 = vld [vmem:[%s354 + $0x38] sm:$0xff]
    %379 = vrot.lane.b32.xlu0 %v163, 120
    %v380 = vpop.permute.xlu0 %379
    %381 = vrot.lane.b32.xlu0 %v168, 120
    %v382 = vpop.permute.xlu0 %381
    %383 = vrot.lane.b32.xlu0 %v173, 120
    %v384 = vpop.permute.xlu0 %383
    %385 = vrot.lane.b32.xlu0 %v178, 120
    %v386 = vpop.permute.xlu0 %385
    %387 = vrot.lane.b32.xlu0 %v183, 120
    %v388 = vpop.permute.xlu0 %387
    %389 = vrot.lane.b32.xlu0 %v188, 120
    %v390 = vpop.permute.xlu0 %389
    %391 = vrot.lane.b32.xlu0 %v193, 120
    %v392 = vpop.permute.xlu0 %391
    %393 = vrot.lane.b32.xlu0 %v198, 120
    %v394 = vpop.permute.xlu0 %393
    %395 = vrot.lane.b32.xlu0 %v203, 120
    %v396 = vpop.permute.xlu0 %395
    %397 = vrot.lane.b32.xlu0 %v208, 120
    %v398 = vpop.permute.xlu0 %397
    %399 = vrot.lane.b32.xlu0 %v213, 120
    %v400 = vpop.permute.xlu0 %399
    %401 = vrot.lane.b32.xlu0 %v218, 120
    %v402 = vpop.permute.xlu0 %401
    %403 = vrot.lane.b32.xlu0 %v223, 120
    %v404 = vpop.permute.xlu0 %403
    %405 = vrot.lane.b32.xlu0 %v228, 120
    %v406 = vpop.permute.xlu0 %405
    %407 = vrot.lane.b32.xlu0 %v233, 120
    %v408 = vpop.permute.xlu0 %407
    %409 = vrot.lane.b32.xlu0 %v238, 120
    %v410 = vpop.permute.xlu0 %409
    %427 = vmatprep.subr.mxu0 0.0
    %428 = vmatpush1.msra.mxu0 %v380
    %429 = vmatprep.subr.mxu0 0.0
    %430 = vmatpush1.msra.mxu0 %v382
    %431 = vmatprep.subr.mxu0 0.0
    %432 = vmatpush1.msra.mxu0 %v384
    %433 = vmatprep.subr.mxu0 0.0
    %434 = vmatpush1.msra.mxu0 %v386
    %435 = vmatprep.subr.mxu0 0.0
    %436 = vmatpush1.msra.mxu0 %v388
    %437 = vmatprep.subr.mxu0 0.0
    %438 = vmatpush1.msra.mxu0 %v390
    %439 = vmatprep.subr.mxu0 0.0
    %440 = vmatpush1.msra.mxu0 %v392
    %441 = vmatprep.subr.mxu0 0.0
    %442 = vmatpush1.msra.mxu0 %v394
    %443 = vmatprep.subr.mxu0 0.0
    %444 = vmatpush1.msra.mxu0 %v396
    %445 = vmatprep.subr.mxu0 0.0
    %446 = vmatpush1.msra.mxu0 %v398
    %447 = vmatprep.subr.mxu0 0.0
    %448 = vmatpush1.msra.mxu0 %v400
    %449 = vmatprep.subr.mxu0 0.0
    %450 = vmatpush1.msra.mxu0 %v402
    %451 = vmatprep.subr.mxu0 0.0
    %452 = vmatpush1.msra.mxu0 %v404
    %453 = vmatprep.subr.mxu0 0.0
    %454 = vmatpush1.msra.mxu0 %v406
    %455 = vmatprep.subr.mxu0 0.0
    %456 = vmatpush1.msra.mxu0 %v408
    %457 = vmatprep.subr.mxu0 0.0
    %458 = vmatpush1.msra.mxu0 %v410
    %459 = vmatprep.subr.mxu0 0.0
    %460 = vmatpush1.msra.mxu0 0.0
    %461 = vmatprep.subr.mxu0 0.0
    %462 = vmatpush1.msra.mxu0 0.0
    %463 = vmatprep.subr.mxu0 0.0
    %464 = vmatpush1.msra.mxu0 0.0
    %465 = vmatprep.subr.mxu0 0.0
    %466 = vmatpush1.msra.mxu0 0.0
    %467 = vmatprep.subr.mxu0 0.0
    %468 = vmatpush1.msra.mxu0 0.0
    %469 = vmatprep.subr.mxu0 0.0
    %470 = vmatpush1.msra.mxu0 0.0
    %471 = vmatprep.subr.mxu0 0.0
    %472 = vmatpush1.msra.mxu0 0.0
    %473 = vmatprep.subr.mxu0 0.0
    %474 = vmatpush1.msra.mxu0 0.0
    %475 = vmatprep.subr.mxu0 0.0
    %476 = vmatpush1.msra.mxu0 0.0
    %477 = vmatprep.subr.mxu0 0.0
    %478 = vmatpush1.msra.mxu0 0.0
    %479 = vmatprep.subr.mxu0 0.0
    %480 = vmatpush1.msra.mxu0 0.0
    %481 = vmatprep.subr.mxu0 0.0
    %482 = vmatpush1.msra.mxu0 0.0
    %483 = vmatprep.subr.mxu0 0.0
    %484 = vmatpush1.msra.mxu0 0.0
    %485 = vmatprep.subr.mxu0 0.0
    %486 = vmatpush1.msra.mxu0 0.0
    %487 = vmatprep.subr.mxu0 0.0
    %488 = vmatpush1.msra.mxu0 0.0
    %489 = vmatprep.subr.mxu0 0.0
    %490 = vmatpush1.msra.mxu0 0.0
    %491 = vmatprep.mubr.f32.mxu0 0.0
    %492 = vmatmul.mubr.f32.gmra.mrb[0].mxu0 %v355
    %v493 = vpop.f32.mrb[0].mxu0
    %v494 = vadd.f32 0.0, %v493
    %v495 = vpop.f32.mrb[0].mxu0
    %496 = vmatprep.mubr.f32.mxu0 0.0
    %497 = vmatmul.mubr.f32.gmra.mrb[0].mxu0 %v356
    %v498 = vpop.f32.mrb[0].mxu0
    %v499 = vadd.f32 0.0, %v498
    %v500 = vpop.f32.mrb[0].mxu0
    %501 = vmatprep.mubr.f32.mxu0 0.0
    %502 = vmatmul.mubr.f32.gmra.mrb[0].mxu0 %v357
    %v503 = vpop.f32.mrb[0].mxu0
    %v504 = vadd.f32 0.0, %v503
    %v505 = vpop.f32.mrb[0].mxu0
    %506 = vmatprep.mubr.f32.mxu0 0.0
    %507 = vmatmul.mubr.f32.gmra.mrb[0].mxu0 %v358
    %v508 = vpop.f32.mrb[0].mxu0
    %v509 = vadd.f32 0.0, %v508
    %v510 = vpop.f32.mrb[0].mxu0
    %511 = vmatprep.mubr.f32.mxu0 0.0
    %512 = vmatmul.mubr.f32.gmra.mrb[0].mxu0 %v359
    %v513 = vpop.f32.mrb[0].mxu0
    %v514 = vadd.f32 0.0, %v513
    %v515 = vpop.f32.mrb[0].mxu0
    %516 = vmatprep.mubr.f32.mxu0 0.0
    %517 = vmatmul.mubr.f32.gmra.mrb[0].mxu0 %v360
    %v518 = vpop.f32.mrb[0].mxu0
    %v519 = vadd.f32 0.0, %v518
    %v520 = vpop.f32.mrb[0].mxu0
    %521 = vmatprep.mubr.f32.mxu0 0.0
    %522 = vmatmul.mubr.f32.gmra.mrb[0].mxu0 %v361
    %v523 = vpop.f32.mrb[0].mxu0
    %v524 = vadd.f32 0.0, %v523
    %v525 = vpop.f32.mrb[0].mxu0
    %526 = vmatprep.mubr.f32.mxu0 0.0
    %527 = vmatmul.mubr.f32.gmra.mrb[0].mxu0 %v362
    %v528 = vpop.f32.mrb[0].mxu0
    %v529 = vadd.f32 0.0, %v528
    %v530 = vpop.f32.mrb[0].mxu0
    %531 = vdwg.mxu0
    %s532 = scalar_lea.vmem [#allocation2], 128
    %v533 = vld [vmem:[%s532] sm:$0xff]
    %v534 = vld [vmem:[%s532 + $0x8] sm:$0xff]
    %v535 = vld [vmem:[%s532 + $0x10] sm:$0xff]
    %v536 = vld [vmem:[%s532 + $0x18] sm:$0xff]
    %v537 = vld [vmem:[%s532 + $0x20] sm:$0xff]
    %v538 = vld [vmem:[%s532 + $0x28] sm:$0xff]
    %v539 = vld [vmem:[%s532 + $0x30] sm:$0xff]
    %v540 = vld [vmem:[%s532 + $0x38] sm:$0xff]
    %541 = vrot.lane.b32.xlu0 %v163, 112
    %v542 = vpop.permute.xlu0 %541
    %543 = vrot.lane.b32.xlu0 %v168, 112
    %v544 = vpop.permute.xlu0 %543
    %545 = vrot.lane.b32.xlu0 %v173, 112
    %v546 = vpop.permute.xlu0 %545
    %547 = vrot.lane.b32.xlu0 %v178, 112
    %v548 = vpop.permute.xlu0 %547
    %549 = vrot.lane.b32.xlu0 %v183, 112
    %v550 = vpop.permute.xlu0 %549
    %551 = vrot.lane.b32.xlu0 %v188, 112
    %v552 = vpop.permute.xlu0 %551
    %553 = vrot.lane.b32.xlu0 %v193, 112
    %v554 = vpop.permute.xlu0 %553
    %555 = vrot.lane.b32.xlu0 %v198, 112
    %v556 = vpop.permute.xlu0 %555
    %557 = vrot.lane.b32.xlu0 %v203, 112
    %v558 = vpop.permute.xlu0 %557
    %559 = vrot.lane.b32.xlu0 %v208, 112
    %v560 = vpop.permute.xlu0 %559
    %561 = vrot.lane.b32.xlu0 %v213, 112
    %v562 = vpop.permute.xlu0 %561
    %563 = vrot.lane.b32.xlu0 %v218, 112
    %v564 = vpop.permute.xlu0 %563
    %565 = vrot.lane.b32.xlu0 %v223, 112
    %v566 = vpop.permute.xlu0 %565
    %567 = vrot.lane.b32.xlu0 %v228, 112
    %v568 = vpop.permute.xlu0 %567
    %569 = vrot.lane.b32.xlu0 %v233, 112
    %v570 = vpop.permute.xlu0 %569
    %571 = vrot.lane.b32.xlu0 %v238, 112
    %v572 = vpop.permute.xlu0 %571
    %589 = vmatprep.subr.mxu0 0.0
    %590 = vmatpush1.msra.mxu0 %v542
    %591 = vmatprep.subr.mxu0 0.0
    %592 = vmatpush1.msra.mxu0 %v544
    %593 = vmatprep.subr.mxu0 0.0
    %594 = vmatpush1.msra.mxu0 %v546
    %595 = vmatprep.subr.mxu0 0.0
    %596 = vmatpush1.msra.mxu0 %v548
    %597 = vmatprep.subr.mxu0 0.0
    %598 = vmatpush1.msra.mxu0 %v550
    %599 = vmatprep.subr.mxu0 0.0
    %600 = vmatpush1.msra.mxu0 %v552
    %601 = vmatprep.subr.mxu0 0.0
    %602 = vmatpush1.msra.mxu0 %v554
    %603 = vmatprep.subr.mxu0 0.0
    %604 = vmatpush1.msra.mxu0 %v556
    %605 = vmatprep.subr.mxu0 0.0
    %606 = vmatpush1.msra.mxu0 %v558
    %607 = vmatprep.subr.mxu0 0.0
    %608 = vmatpush1.msra.mxu0 %v560
    %609 = vmatprep.subr.mxu0 0.0
    %610 = vmatpush1.msra.mxu0 %v562
    %611 = vmatprep.subr.mxu0 0.0
    %612 = vmatpush1.msra.mxu0 %v564
    %613 = vmatprep.subr.mxu0 0.0
    %614 = vmatpush1.msra.mxu0 %v566
    %615 = vmatprep.subr.mxu0 0.0
    %616 = vmatpush1.msra.mxu0 %v568
    %617 = vmatprep.subr.mxu0 0.0
    %618 = vmatpush1.msra.mxu0 %v570
    %619 = vmatprep.subr.mxu0 0.0
    %620 = vmatpush1.msra.mxu0 %v572
    %621 = vmatprep.subr.mxu0 0.0
    %622 = vmatpush1.msra.mxu0 0.0
    %623 = vmatprep.subr.mxu0 0.0
    %624 = vmatpush1.msra.mxu0 0.0
    %625 = vmatprep.subr.mxu0 0.0
    %626 = vmatpush1.msra.mxu0 0.0
    %627 = vmatprep.subr.mxu0 0.0
    %628 = vmatpush1.msra.mxu0 0.0
    %629 = vmatprep.subr.mxu0 0.0
    %630 = vmatpush1.msra.mxu0 0.0
    %631 = vmatprep.subr.mxu0 0.0
    %632 = vmatpush1.msra.mxu0 0.0
    %633 = vmatprep.subr.mxu0 0.0
    %634 = vmatpush1.msra.mxu0 0.0
    %635 = vmatprep.subr.mxu0 0.0
    %636 = vmatpush1.msra.mxu0 0.0
    %637 = vmatprep.subr.mxu0 0.0
    %638 = vmatpush1.msra.mxu0 0.0
    %639 = vmatprep.subr.mxu0 0.0
    %640 = vmatpush1.msra.mxu0 0.0
    %641 = vmatprep.subr.mxu0 0.0
    %642 = vmatpush1.msra.mxu0 0.0
    %643 = vmatprep.subr.mxu0 0.0
    %644 = vmatpush1.msra.mxu0 0.0
    %645 = vmatprep.subr.mxu0 0.0
    %646 = vmatpush1.msra.mxu0 0.0
    %647 = vmatprep.subr.mxu0 0.0
    %648 = vmatpush1.msra.mxu0 0.0
    %649 = vmatprep.subr.mxu0 0.0
    %650 = vmatpush1.msra.mxu0 0.0
    %651 = vmatprep.subr.mxu0 0.0
    %652 = vmatpush1.msra.mxu0 0.0
    %653 = vmatprep.mubr.f32.mxu0 0.0
    %654 = vmatmul.mubr.f32.gmra.mrb[0].mxu0 %v533
    %v655 = vpop.f32.mrb[0].mxu0
    %v656 = vadd.f32 0.0, %v655
    %v657 = vpop.f32.mrb[0].mxu0
    %658 = vmatprep.mubr.f32.mxu0 0.0
    %659 = vmatmul.mubr.f32.gmra.mrb[0].mxu0 %v534
    %v660 = vpop.f32.mrb[0].mxu0
    %v661 = vadd.f32 0.0, %v660
    %v662 = vpop.f32.mrb[0].mxu0
    %663 = vmatprep.mubr.f32.mxu0 0.0
    %664 = vmatmul.mubr.f32.gmra.mrb[0].mxu0 %v535
    %v665 = vpop.f32.mrb[0].mxu0
    %v666 = vadd.f32 0.0, %v665
    %v667 = vpop.f32.mrb[0].mxu0
    %668 = vmatprep.mubr.f32.mxu0 0.0
    %669 = vmatmul.mubr.f32.gmra.mrb[0].mxu0 %v536
    %v670 = vpop.f32.mrb[0].mxu0
    %v671 = vadd.f32 0.0, %v670
    %v672 = vpop.f32.mrb[0].mxu0
    %673 = vmatprep.mubr.f32.mxu0 0.0
    %674 = vmatmul.mubr.f32.gmra.mrb[0].mxu0 %v537
    %v675 = vpop.f32.mrb[0].mxu0
    %v676 = vadd.f32 0.0, %v675
    %v677 = vpop.f32.mrb[0].mxu0
    %678 = vmatprep.mubr.f32.mxu0 0.0
    %679 = vmatmul.mubr.f32.gmra.mrb[0].mxu0 %v538
    %v680 = vpop.f32.mrb[0].mxu0
    %v681 = vadd.f32 0.0, %v680
    %v682 = vpop.f32.mrb[0].mxu0
    %683 = vmatprep.mubr.f32.mxu0 0.0
    %684 = vmatmul.mubr.f32.gmra.mrb[0].mxu0 %v539
    %v685 = vpop.f32.mrb[0].mxu0
    %v686 = vadd.f32 0.0, %v685
    %v687 = vpop.f32.mrb[0].mxu0
    %688 = vmatprep.mubr.f32.mxu0 0.0
    %689 = vmatmul.mubr.f32.gmra.mrb[0].mxu0 %v540
    %v690 = vpop.f32.mrb[0].mxu0
    %v691 = vadd.f32 0.0, %v690
    %v692 = vpop.f32.mrb[0].mxu0
    %693 = vdwg.mxu0
    %s694 = scalar_lea.vmem [#allocation2], 192
    %v695 = vld [vmem:[%s694] sm:$0xff]
    %v696 = vld [vmem:[%s694 + $0x8] sm:$0xff]
    %v697 = vld [vmem:[%s694 + $0x10] sm:$0xff]
    %v698 = vld [vmem:[%s694 + $0x18] sm:$0xff]
    %v699 = vld [vmem:[%s694 + $0x20] sm:$0xff]
    %v700 = vld [vmem:[%s694 + $0x28] sm:$0xff]
    %v701 = vld [vmem:[%s694 + $0x30] sm:$0xff]
    %v702 = vld [vmem:[%s694 + $0x38] sm:$0xff]
    %703 = vrot.lane.b32.xlu0 %v163, 104
    %v704 = vpop.permute.xlu0 %703
    %705 = vrot.lane.b32.xlu0 %v168, 104
    %v706 = vpop.permute.xlu0 %705
    %707 = vrot.lane.b32.xlu0 %v173, 104
    %v708 = vpop.permute.xlu0 %707
    %709 = vrot.lane.b32.xlu0 %v178, 104
    %v710 = vpop.permute.xlu0 %709
    %711 = vrot.lane.b32.xlu0 %v183, 104
    %v712 = vpop.permute.xlu0 %711
    %713 = vrot.lane.b32.xlu0 %v188, 104
    %v714 = vpop.permute.xlu0 %713
    %715 = vrot.lane.b32.xlu0 %v193, 104
    %v716 = vpop.permute.xlu0 %715
    %717 = vrot.lane.b32.xlu0 %v198, 104
    %v718 = vpop.permute.xlu0 %717
    %719 = vrot.lane.b32.xlu0 %v203, 104
    %v720 = vpop.permute.xlu0 %719
    %721 = vrot.lane.b32.xlu0 %v208, 104
    %v722 = vpop.permute.xlu0 %721
    %723 = vrot.lane.b32.xlu0 %v213, 104
    %v724 = vpop.permute.xlu0 %723
    %725 = vrot.lane.b32.xlu0 %v218, 104
    %v726 = vpop.permute.xlu0 %725
    %727 = vrot.lane.b32.xlu0 %v223, 104
    %v728 = vpop.permute.xlu0 %727
    %729 = vrot.lane.b32.xlu0 %v228, 104
    %v730 = vpop.permute.xlu0 %729
    %731 = vrot.lane.b32.xlu0 %v233, 104
    %v732 = vpop.permute.xlu0 %731
    %733 = vrot.lane.b32.xlu0 %v238, 104
    %v734 = vpop.permute.xlu0 %733
    %751 = vmatprep.subr.mxu0 0.0
    %752 = vmatpush1.msra.mxu0 %v704
    %753 = vmatprep.subr.mxu0 0.0
    %754 = vmatpush1.msra.mxu0 %v706
    %755 = vmatprep.subr.mxu0 0.0
    %756 = vmatpush1.msra.mxu0 %v708
    %757 = vmatprep.subr.mxu0 0.0
    %758 = vmatpush1.msra.mxu0 %v710
    %759 = vmatprep.subr.mxu0 0.0
    %760 = vmatpush1.msra.mxu0 %v712
    %761 = vmatprep.subr.mxu0 0.0
    %762 = vmatpush1.msra.mxu0 %v714
    %763 = vmatprep.subr.mxu0 0.0
    %764 = vmatpush1.msra.mxu0 %v716
    %765 = vmatprep.subr.mxu0 0.0
    %766 = vmatpush1.msra.mxu0 %v718
    %767 = vmatprep.subr.mxu0 0.0
    %768 = vmatpush1.msra.mxu0 %v720
    %769 = vmatprep.subr.mxu0 0.0
    %770 = vmatpush1.msra.mxu0 %v722
    %771 = vmatprep.subr.mxu0 0.0
    %772 = vmatpush1.msra.mxu0 %v724
    %773 = vmatprep.subr.mxu0 0.0
    %774 = vmatpush1.msra.mxu0 %v726
    %775 = vmatprep.subr.mxu0 0.0
    %776 = vmatpush1.msra.mxu0 %v728
    %777 = vmatprep.subr.mxu0 0.0
    %778 = vmatpush1.msra.mxu0 %v730
    %779 = vmatprep.subr.mxu0 0.0
    %780 = vmatpush1.msra.mxu0 %v732
    %781 = vmatprep.subr.mxu0 0.0
    %782 = vmatpush1.msra.mxu0 %v734
    %783 = vmatprep.subr.mxu0 0.0
    %784 = vmatpush1.msra.mxu0 0.0
    %785 = vmatprep.subr.mxu0 0.0
    %786 = vmatpush1.msra.mxu0 0.0
    %787 = vmatprep.subr.mxu0 0.0
    %788 = vmatpush1.msra.mxu0 0.0
    %789 = vmatprep.subr.mxu0 0.0
    %790 = vmatpush1.msra.mxu0 0.0
    %791 = vmatprep.subr.mxu0 0.0
    %792 = vmatpush1.msra.mxu0 0.0
    %793 = vmatprep.subr.mxu0 0.0
    %794 = vmatpush1.msra.mxu0 0.0
    %795 = vmatprep.subr.mxu0 0.0
    %796 = vmatpush1.msra.mxu0 0.0
    %797 = vmatprep.subr.mxu0 0.0
    %798 = vmatpush1.msra.mxu0 0.0
    %799 = vmatprep.subr.mxu0 0.0
    %800 = vmatpush1.msra.mxu0 0.0
    %801 = vmatprep.subr.mxu0 0.0
    %802 = vmatpush1.msra.mxu0 0.0
    %803 = vmatprep.subr.mxu0 0.0
    %804 = vmatpush1.msra.mxu0 0.0
    %805 = vmatprep.subr.mxu0 0.0
    %806 = vmatpush1.msra.mxu0 0.0
    %807 = vmatprep.subr.mxu0 0.0
    %808 = vmatpush1.msra.mxu0 0.0
    %809 = vmatprep.subr.mxu0 0.0
    %810 = vmatpush1.msra.mxu0 0.0
    %811 = vmatprep.subr.mxu0 0.0
    %812 = vmatpush1.msra.mxu0 0.0
    %813 = vmatprep.subr.mxu0 0.0
    %814 = vmatpush1.msra.mxu0 0.0
    %815 = vmatprep.mubr.f32.mxu0 0.0
    %816 = vmatmul.mubr.f32.gmra.mrb[0].mxu0 %v695
    %v817 = vpop.f32.mrb[0].mxu0
    %v818 = vadd.f32 0.0, %v817
    %v819 = vpop.f32.mrb[0].mxu0
    %820 = vmatprep.mubr.f32.mxu0 0.0
    %821 = vmatmul.mubr.f32.gmra.mrb[0].mxu0 %v696
    %v822 = vpop.f32.mrb[0].mxu0
    %v823 = vadd.f32 0.0, %v822
    %v824 = vpop.f32.mrb[0].mxu0
    %825 = vmatprep.mubr.f32.mxu0 0.0
    %826 = vmatmul.mubr.f32.gmra.mrb[0].mxu0 %v697
    %v827 = vpop.f32.mrb[0].mxu0
    %v828 = vadd.f32 0.0, %v827
    %v829 = vpop.f32.mrb[0].mxu0
    %830 = vmatprep.mubr.f32.mxu0 0.0
    %831 = vmatmul.mubr.f32.gmra.mrb[0].mxu0 %v698
    %v832 = vpop.f32.mrb[0].mxu0
    %v833 = vadd.f32 0.0, %v832
    %v834 = vpop.f32.mrb[0].mxu0
    %835 = vmatprep.mubr.f32.mxu0 0.0
    %836 = vmatmul.mubr.f32.gmra.mrb[0].mxu0 %v699
    %v837 = vpop.f32.mrb[0].mxu0
    %v838 = vadd.f32 0.0, %v837
    %v839 = vpop.f32.mrb[0].mxu0
    %840 = vmatprep.mubr.f32.mxu0 0.0
    %841 = vmatmul.mubr.f32.gmra.mrb[0].mxu0 %v700
    %v842 = vpop.f32.mrb[0].mxu0
    %v843 = vadd.f32 0.0, %v842
    %v844 = vpop.f32.mrb[0].mxu0
    %845 = vmatprep.mubr.f32.mxu0 0.0
    %846 = vmatmul.mubr.f32.gmra.mrb[0].mxu0 %v701
    %v847 = vpop.f32.mrb[0].mxu0
    %v848 = vadd.f32 0.0, %v847
    %v849 = vpop.f32.mrb[0].mxu0
    %850 = vmatprep.mubr.f32.mxu0 0.0
    %851 = vmatmul.mubr.f32.gmra.mrb[0].mxu0 %v702
    %v852 = vpop.f32.mrb[0].mxu0
    %v853 = vadd.f32 0.0, %v852
    %v854 = vpop.f32.mrb[0].mxu0
    %855 = vdwg.mxu0
    %s856 = scalar_lea.vmem [#allocation2], 256
    %v857 = vld [vmem:[%s856] sm:$0xff]
    %v858 = vld [vmem:[%s856 + $0x8] sm:$0xff]
    %v859 = vld [vmem:[%s856 + $0x10] sm:$0xff]
    %v860 = vld [vmem:[%s856 + $0x18] sm:$0xff]
    %v861 = vld [vmem:[%s856 + $0x20] sm:$0xff]
    %v862 = vld [vmem:[%s856 + $0x28] sm:$0xff]
    %v863 = vld [vmem:[%s856 + $0x30] sm:$0xff]
    %v864 = vld [vmem:[%s856 + $0x38] sm:$0xff]
    %865 = vrot.lane.b32.xlu0 %v163, 96
    %v866 = vpop.permute.xlu0 %865
    %867 = vrot.lane.b32.xlu0 %v168, 96
    %v868 = vpop.permute.xlu0 %867
    %869 = vrot.lane.b32.xlu0 %v173, 96
    %v870 = vpop.permute.xlu0 %869
    %871 = vrot.lane.b32.xlu0 %v178, 96
    %v872 = vpop.permute.xlu0 %871
    %873 = vrot.lane.b32.xlu0 %v183, 96
    %v874 = vpop.permute.xlu0 %873
    %875 = vrot.lane.b32.xlu0 %v188, 96
    %v876 = vpop.permute.xlu0 %875
    %877 = vrot.lane.b32.xlu0 %v193, 96
    %v878 = vpop.permute.xlu0 %877
    %879 = vrot.lane.b32.xlu0 %v198, 96
    %v880 = vpop.permute.xlu0 %879
    %881 = vrot.lane.b32.xlu0 %v203, 96
    %v882 = vpop.permute.xlu0 %881
    %883 = vrot.lane.b32.xlu0 %v208, 96
    %v884 = vpop.permute.xlu0 %883
    %885 = vrot.lane.b32.xlu0 %v213, 96
    %v886 = vpop.permute.xlu0 %885
    %887 = vrot.lane.b32.xlu0 %v218, 96
    %v888 = vpop.permute.xlu0 %887
    %889 = vrot.lane.b32.xlu0 %v223, 96
    %v890 = vpop.permute.xlu0 %889
    %891 = vrot.lane.b32.xlu0 %v228, 96
    %v892 = vpop.permute.xlu0 %891
    %893 = vrot.lane.b32.xlu0 %v233, 96
    %v894 = vpop.permute.xlu0 %893
    %895 = vrot.lane.b32.xlu0 %v238, 96
    %v896 = vpop.permute.xlu0 %895
    %913 = vmatprep.subr.mxu0 0.0
    %914 = vmatpush1.msra.mxu0 %v866
    %915 = vmatprep.subr.mxu0 0.0
    %916 = vmatpush1.msra.mxu0 %v868
    %917 = vmatprep.subr.mxu0 0.0
    %918 = vmatpush1.msra.mxu0 %v870
    %919 = vmatprep.subr.mxu0 0.0
    %920 = vmatpush1.msra.mxu0 %v872
    %921 = vmatprep.subr.mxu0 0.0
    %922 = vmatpush1.msra.mxu0 %v874
    %923 = vmatprep.subr.mxu0 0.0
    %924 = vmatpush1.msra.mxu0 %v876
    %925 = vmatprep.subr.mxu0 0.0
    %926 = vmatpush1.msra.mxu0 %v878
    %927 = vmatprep.subr.mxu0 0.0
    %928 = vmatpush1.msra.mxu0 %v880
    %929 = vmatprep.subr.mxu0 0.0
    %930 = vmatpush1.msra.mxu0 %v882
    %931 = vmatprep.subr.mxu0 0.0
    %932 = vmatpush1.msra.mxu0 %v884
    %933 = vmatprep.subr.mxu0 0.0
    %934 = vmatpush1.msra.mxu0 %v886
    %935 = vmatprep.subr.mxu0 0.0
    %936 = vmatpush1.msra.mxu0 %v888
    %937 = vmatprep.subr.mxu0 0.0
    %938 = vmatpush1.msra.mxu0 %v890
    %939 = vmatprep.subr.mxu0 0.0
    %940 = vmatpush1.msra.mxu0 %v892
    %941 = vmatprep.subr.mxu0 0.0
    %942 = vmatpush1.msra.mxu0 %v894
    %943 = vmatprep.subr.mxu0 0.0
    %944 = vmatpush1.msra.mxu0 %v896
    %945 = vmatprep.subr.mxu0 0.0
    %946 = vmatpush1.msra.mxu0 0.0
    %947 = vmatprep.subr.mxu0 0.0
    %948 = vmatpush1.msra.mxu0 0.0
    %949 = vmatprep.subr.mxu0 0.0
    %950 = vmatpush1.msra.mxu0 0.0
    %951 = vmatprep.subr.mxu0 0.0
    %952 = vmatpush1.msra.mxu0 0.0
    %953 = vmatprep.subr.mxu0 0.0
    %954 = vmatpush1.msra.mxu0 0.0
    %955 = vmatprep.subr.mxu0 0.0
    %956 = vmatpush1.msra.mxu0 0.0
    %957 = vmatprep.subr.mxu0 0.0
    %958 = vmatpush1.msra.mxu0 0.0
    %959 = vmatprep.subr.mxu0 0.0
    %960 = vmatpush1.msra.mxu0 0.0
    %961 = vmatprep.subr.mxu0 0.0
    %962 = vmatpush1.msra.mxu0 0.0
    %963 = vmatprep.subr.mxu0 0.0
    %964 = vmatpush1.msra.mxu0 0.0
    %965 = vmatprep.subr.mxu0 0.0
    %966 = vmatpush1.msra.mxu0 0.0
    %967 = vmatprep.subr.mxu0 0.0
    %968 = vmatpush1.msra.mxu0 0.0
    %969 = vmatprep.subr.mxu0 0.0
    %970 = vmatpush1.msra.mxu0 0.0
    %971 = vmatprep.subr.mxu0 0.0
    %972 = vmatpush1.msra.mxu0 0.0
    %973 = vmatprep.subr.mxu0 0.0
    %974 = vmatpush1.msra.mxu0 0.0
    %975 = vmatprep.subr.mxu0 0.0
    %976 = vmatpush1.msra.mxu0 0.0
    %977 = vmatprep.mubr.f32.mxu0 0.0
    %978 = vmatmul.mubr.f32.gmra.mrb[0].mxu0 %v857
    %v979 = vpop.f32.mrb[0].mxu0
    %v980 = vadd.f32 0.0, %v979
    %v981 = vpop.f32.mrb[0].mxu0
    %982 = vmatprep.mubr.f32.mxu0 0.0
    %983 = vmatmul.mubr.f32.gmra.mrb[0].mxu0 %v858
    %v984 = vpop.f32.mrb[0].mxu0
    %v985 = vadd.f32 0.0, %v984
    %v986 = vpop.f32.mrb[0].mxu0
    %987 = vmatprep.mubr.f32.mxu0 0.0
    %988 = vmatmul.mubr.f32.gmra.mrb[0].mxu0 %v859
    %v989 = vpop.f32.mrb[0].mxu0
    %v990 = vadd.f32 0.0, %v989
    %v991 = vpop.f32.mrb[0].mxu0
    %992 = vmatprep.mubr.f32.mxu0 0.0
    %993 = vmatmul.mubr.f32.gmra.mrb[0].mxu0 %v860
    %v994 = vpop.f32.mrb[0].mxu0
    %v995 = vadd.f32 0.0, %v994
    %v996 = vpop.f32.mrb[0].mxu0
    %997 = vmatprep.mubr.f32.mxu0 0.0
    %998 = vmatmul.mubr.f32.gmra.mrb[0].mxu0 %v861
    %v999 = vpop.f32.mrb[0].mxu0
    %v1000 = vadd.f32 0.0, %v999
    %v1001 = vpop.f32.mrb[0].mxu0
    %1002 = vmatprep.mubr.f32.mxu0 0.0
    %1003 = vmatmul.mubr.f32.gmra.mrb[0].mxu0 %v862
    %v1004 = vpop.f32.mrb[0].mxu0
    %v1005 = vadd.f32 0.0, %v1004
    %v1006 = vpop.f32.mrb[0].mxu0
    %1007 = vmatprep.mubr.f32.mxu0 0.0
    %1008 = vmatmul.mubr.f32.gmra.mrb[0].mxu0 %v863
    %v1009 = vpop.f32.mrb[0].mxu0
    %v1010 = vadd.f32 0.0, %v1009
    %v1011 = vpop.f32.mrb[0].mxu0
    %1012 = vmatprep.mubr.f32.mxu0 0.0
    %1013 = vmatmul.mubr.f32.gmra.mrb[0].mxu0 %v864
    %v1014 = vpop.f32.mrb[0].mxu0
    %v1015 = vadd.f32 0.0, %v1014
    %v1016 = vpop.f32.mrb[0].mxu0
    %1017 = vdwg.mxu0
    %s1018 = scalar_lea.vmem [#allocation2], 320
    %v1019 = vld [vmem:[%s1018] sm:$0xff]
    %v1020 = vld [vmem:[%s1018 + $0x8] sm:$0xff]
    %v1021 = vld [vmem:[%s1018 + $0x10] sm:$0xff]
    %v1022 = vld [vmem:[%s1018 + $0x18] sm:$0xff]
    %v1023 = vld [vmem:[%s1018 + $0x20] sm:$0xff]
    %v1024 = vld [vmem:[%s1018 + $0x28] sm:$0xff]
    %v1025 = vld [vmem:[%s1018 + $0x30] sm:$0xff]
    %v1026 = vld [vmem:[%s1018 + $0x38] sm:$0xff]
    %1027 = vrot.lane.b32.xlu0 %v163, 88
    %v1028 = vpop.permute.xlu0 %1027
    %1029 = vrot.lane.b32.xlu0 %v168, 88
    %v1030 = vpop.permute.xlu0 %1029
    %1031 = vrot.lane.b32.xlu0 %v173, 88
    %v1032 = vpop.permute.xlu0 %1031
    %1033 = vrot.lane.b32.xlu0 %v178, 88
    %v1034 = vpop.permute.xlu0 %1033
    %1035 = vrot.lane.b32.xlu0 %v183, 88
    %v1036 = vpop.permute.xlu0 %1035
    %1037 = vrot.lane.b32.xlu0 %v188, 88
    %v1038 = vpop.permute.xlu0 %1037
    %1039 = vrot.lane.b32.xlu0 %v193, 88
    %v1040 = vpop.permute.xlu0 %1039
    %1041 = vrot.lane.b32.xlu0 %v198, 88
    %v1042 = vpop.permute.xlu0 %1041
    %1043 = vrot.lane.b32.xlu0 %v203, 88
    %v1044 = vpop.permute.xlu0 %1043
    %1045 = vrot.lane.b32.xlu0 %v208, 88
    %v1046 = vpop.permute.xlu0 %1045
    %1047 = vrot.lane.b32.xlu0 %v213, 88
    %v1048 = vpop.permute.xlu0 %1047
    %1049 = vrot.lane.b32.xlu0 %v218, 88
    %v1050 = vpop.permute.xlu0 %1049
    %1051 = vrot.lane.b32.xlu0 %v223, 88
    %v1052 = vpop.permute.xlu0 %1051
    %1053 = vrot.lane.b32.xlu0 %v228, 88
    %v1054 = vpop.permute.xlu0 %1053
    %1055 = vrot.lane.b32.xlu0 %v233, 88
    %v1056 = vpop.permute.xlu0 %1055
    %1057 = vrot.lane.b32.xlu0 %v238, 88
    %v1058 = vpop.permute.xlu0 %1057
    %1075 = vmatprep.subr.mxu0 0.0
    %1076 = vmatpush1.msra.mxu0 %v1028
    %1077 = vmatprep.subr.mxu0 0.0
    %1078 = vmatpush1.msra.mxu0 %v1030
    %1079 = vmatprep.subr.mxu0 0.0
    %1080 = vmatpush1.msra.mxu0 %v1032
    %1081 = vmatprep.subr.mxu0 0.0
    %1082 = vmatpush1.msra.mxu0 %v1034
    %1083 = vmatprep.subr.mxu0 0.0
    %1084 = vmatpush1.msra.mxu0 %v1036
    %1085 = vmatprep.subr.mxu0 0.0
    %1086 = vmatpush1.msra.mxu0 %v1038
    %1087 = vmatprep.subr.mxu0 0.0
    %1088 = vmatpush1.msra.mxu0 %v1040
    %1089 = vmatprep.subr.mxu0 0.0
    %1090 = vmatpush1.msra.mxu0 %v1042
    %1091 = vmatprep.subr.mxu0 0.0
    %1092 = vmatpush1.msra.mxu0 %v1044
    %1093 = vmatprep.subr.mxu0 0.0
    %1094 = vmatpush1.msra.mxu0 %v1046
    %1095 = vmatprep.subr.mxu0 0.0
    %1096 = vmatpush1.msra.mxu0 %v1048
    %1097 = vmatprep.subr.mxu0 0.0
    %1098 = vmatpush1.msra.mxu0 %v1050
    %1099 = vmatprep.subr.mxu0 0.0
    %1100 = vmatpush1.msra.mxu0 %v1052
    %1101 = vmatprep.subr.mxu0 0.0
    %1102 = vmatpush1.msra.mxu0 %v1054
    %1103 = vmatprep.subr.mxu0 0.0
    %1104 = vmatpush1.msra.mxu0 %v1056
    %1105 = vmatprep.subr.mxu0 0.0
    %1106 = vmatpush1.msra.mxu0 %v1058
    %1107 = vmatprep.subr.mxu0 0.0
    %1108 = vmatpush1.msra.mxu0 0.0
    %1109 = vmatprep.subr.mxu0 0.0
    %1110 = vmatpush1.msra.mxu0 0.0
    %1111 = vmatprep.subr.mxu0 0.0
    %1112 = vmatpush1.msra.mxu0 0.0
    %1113 = vmatprep.subr.mxu0 0.0
    %1114 = vmatpush1.msra.mxu0 0.0
    %1115 = vmatprep.subr.mxu0 0.0
    %1116 = vmatpush1.msra.mxu0 0.0
    %1117 = vmatprep.subr.mxu0 0.0
    %1118 = vmatpush1.msra.mxu0 0.0
    %1119 = vmatprep.subr.mxu0 0.0
    %1120 = vmatpush1.msra.mxu0 0.0
    %1121 = vmatprep.subr.mxu0 0.0
    %1122 = vmatpush1.msra.mxu0 0.0
    %1123 = vmatprep.subr.mxu0 0.0
    %1124 = vmatpush1.msra.mxu0 0.0
    %1125 = vmatprep.subr.mxu0 0.0
    %1126 = vmatpush1.msra.mxu0 0.0
    %1127 = vmatprep.subr.mxu0 0.0
    %1128 = vmatpush1.msra.mxu0 0.0
    %1129 = vmatprep.subr.mxu0 0.0
    %1130 = vmatpush1.msra.mxu0 0.0
    %1131 = vmatprep.subr.mxu0 0.0
    %1132 = vmatpush1.msra.mxu0 0.0
    %1133 = vmatprep.subr.mxu0 0.0
    %1134 = vmatpush1.msra.mxu0 0.0
    %1135 = vmatprep.subr.mxu0 0.0
    %1136 = vmatpush1.msra.mxu0 0.0
    %1137 = vmatprep.subr.mxu0 0.0
    %1138 = vmatpush1.msra.mxu0 0.0
    %1139 = vmatprep.mubr.f32.mxu0 0.0
    %1140 = vmatmul.mubr.f32.gmra.mrb[0].mxu0 %v1019
    %v1141 = vpop.f32.mrb[0].mxu0
    %v1142 = vadd.f32 0.0, %v1141
    %v1143 = vpop.f32.mrb[0].mxu0
    %1144 = vmatprep.mubr.f32.mxu0 0.0
    %1145 = vmatmul.mubr.f32.gmra.mrb[0].mxu0 %v1020
    %v1146 = vpop.f32.mrb[0].mxu0
    %v1147 = vadd.f32 0.0, %v1146
    %v1148 = vpop.f32.mrb[0].mxu0
    %1149 = vmatprep.mubr.f32.mxu0 0.0
    %1150 = vmatmul.mubr.f32.gmra.mrb[0].mxu0 %v1021
    %v1151 = vpop.f32.mrb[0].mxu0
    %v1152 = vadd.f32 0.0, %v1151
    %v1153 = vpop.f32.mrb[0].mxu0
    %1154 = vmatprep.mubr.f32.mxu0 0.0
    %1155 = vmatmul.mubr.f32.gmra.mrb[0].mxu0 %v1022
    %v1156 = vpop.f32.mrb[0].mxu0
    %v1157 = vadd.f32 0.0, %v1156
    %v1158 = vpop.f32.mrb[0].mxu0
    %1159 = vmatprep.mubr.f32.mxu0 0.0
    %1160 = vmatmul.mubr.f32.gmra.mrb[0].mxu0 %v1023
    %v1161 = vpop.f32.mrb[0].mxu0
    %v1162 = vadd.f32 0.0, %v1161
    %v1163 = vpop.f32.mrb[0].mxu0
    %1164 = vmatprep.mubr.f32.mxu0 0.0
    %1165 = vmatmul.mubr.f32.gmra.mrb[0].mxu0 %v1024
    %v1166 = vpop.f32.mrb[0].mxu0
    %v1167 = vadd.f32 0.0, %v1166
    %v1168 = vpop.f32.mrb[0].mxu0
    %1169 = vmatprep.mubr.f32.mxu0 0.0
    %1170 = vmatmul.mubr.f32.gmra.mrb[0].mxu0 %v1025
    %v1171 = vpop.f32.mrb[0].mxu0
    %v1172 = vadd.f32 0.0, %v1171
    %v1173 = vpop.f32.mrb[0].mxu0
    %1174 = vmatprep.mubr.f32.mxu0 0.0
    %1175 = vmatmul.mubr.f32.gmra.mrb[0].mxu0 %v1026
    %v1176 = vpop.f32.mrb[0].mxu0
    %v1177 = vadd.f32 0.0, %v1176
    %v1178 = vpop.f32.mrb[0].mxu0
    %1179 = vdwg.mxu0
    %s1180 = scalar_lea.vmem [#allocation2], 384
    %v1181 = vld [vmem:[%s1180] sm:$0xff]
    %v1182 = vld [vmem:[%s1180 + $0x8] sm:$0xff]
    %v1183 = vld [vmem:[%s1180 + $0x10] sm:$0xff]
    %v1184 = vld [vmem:[%s1180 + $0x18] sm:$0xff]
    %v1185 = vld [vmem:[%s1180 + $0x20] sm:$0xff]
    %v1186 = vld [vmem:[%s1180 + $0x28] sm:$0xff]
    %v1187 = vld [vmem:[%s1180 + $0x30] sm:$0xff]
    %v1188 = vld [vmem:[%s1180 + $0x38] sm:$0xff]
    %1189 = vrot.lane.b32.xlu0 %v163, 80
    %v1190 = vpop.permute.xlu0 %1189
    %1191 = vrot.lane.b32.xlu0 %v168, 80
    %v1192 = vpop.permute.xlu0 %1191
    %1193 = vrot.lane.b32.xlu0 %v173, 80
    %v1194 = vpop.permute.xlu0 %1193
    %1195 = vrot.lane.b32.xlu0 %v178, 80
    %v1196 = vpop.permute.xlu0 %1195
    %1197 = vrot.lane.b32.xlu0 %v183, 80
    %v1198 = vpop.permute.xlu0 %1197
    %1199 = vrot.lane.b32.xlu0 %v188, 80
    %v1200 = vpop.permute.xlu0 %1199
    %1201 = vrot.lane.b32.xlu0 %v193, 80
    %v1202 = vpop.permute.xlu0 %1201
    %1203 = vrot.lane.b32.xlu0 %v198, 80
    %v1204 = vpop.permute.xlu0 %1203
    %1205 = vrot.lane.b32.xlu0 %v203, 80
    %v1206 = vpop.permute.xlu0 %1205
    %1207 = vrot.lane.b32.xlu0 %v208, 80
    %v1208 = vpop.permute.xlu0 %1207
    %1209 = vrot.lane.b32.xlu0 %v213, 80
    %v1210 = vpop.permute.xlu0 %1209
    %1211 = vrot.lane.b32.xlu0 %v218, 80
    %v1212 = vpop.permute.xlu0 %1211
    %1213 = vrot.lane.b32.xlu0 %v223, 80
    %v1214 = vpop.permute.xlu0 %1213
    %1215 = vrot.lane.b32.xlu0 %v228, 80
    %v1216 = vpop.permute.xlu0 %1215
    %1217 = vrot.lane.b32.xlu0 %v233, 80
    %v1218 = vpop.permute.xlu0 %1217
    %1219 = vrot.lane.b32.xlu0 %v238, 80
    %v1220 = vpop.permute.xlu0 %1219
    %1237 = vmatprep.subr.mxu0 0.0
    %1238 = vmatpush1.msra.mxu0 %v1190
    %1239 = vmatprep.subr.mxu0 0.0
    %1240 = vmatpush1.msra.mxu0 %v1192
    %1241 = vmatprep.subr.mxu0 0.0
    %1242 = vmatpush1.msra.mxu0 %v1194
    %1243 = vmatprep.subr.mxu0 0.0
    %1244 = vmatpush1.msra.mxu0 %v1196
    %1245 = vmatprep.subr.mxu0 0.0
    %1246 = vmatpush1.msra.mxu0 %v1198
    %1247 = vmatprep.subr.mxu0 0.0
    %1248 = vmatpush1.msra.mxu0 %v1200
    %1249 = vmatprep.subr.mxu0 0.0
    %1250 = vmatpush1.msra.mxu0 %v1202
    %1251 = vmatprep.subr.mxu0 0.0
    %1252 = vmatpush1.msra.mxu0 %v1204
    %1253 = vmatprep.subr.mxu0 0.0
    %1254 = vmatpush1.msra.mxu0 %v1206
    %1255 = vmatprep.subr.mxu0 0.0
    %1256 = vmatpush1.msra.mxu0 %v1208
    %1257 = vmatprep.subr.mxu0 0.0
    %1258 = vmatpush1.msra.mxu0 %v1210
    %1259 = vmatprep.subr.mxu0 0.0
    %1260 = vmatpush1.msra.mxu0 %v1212
    %1261 = vmatprep.subr.mxu0 0.0
    %1262 = vmatpush1.msra.mxu0 %v1214
    %1263 = vmatprep.subr.mxu0 0.0
    %1264 = vmatpush1.msra.mxu0 %v1216
    %1265 = vmatprep.subr.mxu0 0.0
    %1266 = vmatpush1.msra.mxu0 %v1218
    %1267 = vmatprep.subr.mxu0 0.0
    %1268 = vmatpush1.msra.mxu0 %v1220
    %1269 = vmatprep.subr.mxu0 0.0
    %1270 = vmatpush1.msra.mxu0 0.0
    %1271 = vmatprep.subr.mxu0 0.0
    %1272 = vmatpush1.msra.mxu0 0.0
    %1273 = vmatprep.subr.mxu0 0.0
    %1274 = vmatpush1.msra.mxu0 0.0
    %1275 = vmatprep.subr.mxu0 0.0
    %1276 = vmatpush1.msra.mxu0 0.0
    %1277 = vmatprep.subr.mxu0 0.0
    %1278 = vmatpush1.msra.mxu0 0.0
    %1279 = vmatprep.subr.mxu0 0.0
    %1280 = vmatpush1.msra.mxu0 0.0
    %1281 = vmatprep.subr.mxu0 0.0
    %1282 = vmatpush1.msra.mxu0 0.0
    %1283 = vmatprep.subr.mxu0 0.0
    %1284 = vmatpush1.msra.mxu0 0.0
    %1285 = vmatprep.subr.mxu0 0.0
    %1286 = vmatpush1.msra.mxu0 0.0
    %1287 = vmatprep.subr.mxu0 0.0
    %1288 = vmatpush1.msra.mxu0 0.0
    %1289 = vmatprep.subr.mxu0 0.0
    %1290 = vmatpush1.msra.mxu0 0.0
    %1291 = vmatprep.subr.mxu0 0.0
    %1292 = vmatpush1.msra.mxu0 0.0
    %1293 = vmatprep.subr.mxu0 0.0
    %1294 = vmatpush1.msra.mxu0 0.0
    %1295 = vmatprep.subr.mxu0 0.0
    %1296 = vmatpush1.msra.mxu0 0.0
    %1297 = vmatprep.subr.mxu0 0.0
    %1298 = vmatpush1.msra.mxu0 0.0
    %1299 = vmatprep.subr.mxu0 0.0
    %1300 = vmatpush1.msra.mxu0 0.0
    %1301 = vmatprep.mubr.f32.mxu0 0.0
    %1302 = vmatmul.mubr.f32.gmra.mrb[0].mxu0 %v1181
    %v1303 = vpop.f32.mrb[0].mxu0
    %v1304 = vadd.f32 0.0, %v1303
    %v1305 = vpop.f32.mrb[0].mxu0
    %1306 = vmatprep.mubr.f32.mxu0 0.0
    %1307 = vmatmul.mubr.f32.gmra.mrb[0].mxu0 %v1182
    %v1308 = vpop.f32.mrb[0].mxu0
    %v1309 = vadd.f32 0.0, %v1308
    %v1310 = vpop.f32.mrb[0].mxu0
    %1311 = vmatprep.mubr.f32.mxu0 0.0
    %1312 = vmatmul.mubr.f32.gmra.mrb[0].mxu0 %v1183
    %v1313 = vpop.f32.mrb[0].mxu0
    %v1314 = vadd.f32 0.0, %v1313
    %v1315 = vpop.f32.mrb[0].mxu0
    %1316 = vmatprep.mubr.f32.mxu0 0.0
    %1317 = vmatmul.mubr.f32.gmra.mrb[0].mxu0 %v1184
    %v1318 = vpop.f32.mrb[0].mxu0
    %v1319 = vadd.f32 0.0, %v1318
    %v1320 = vpop.f32.mrb[0].mxu0
    %1321 = vmatprep.mubr.f32.mxu0 0.0
    %1322 = vmatmul.mubr.f32.gmra.mrb[0].mxu0 %v1185
    %v1323 = vpop.f32.mrb[0].mxu0
    %v1324 = vadd.f32 0.0, %v1323
    %v1325 = vpop.f32.mrb[0].mxu0
    %1326 = vmatprep.mubr.f32.mxu0 0.0
    %1327 = vmatmul.mubr.f32.gmra.mrb[0].mxu0 %v1186
    %v1328 = vpop.f32.mrb[0].mxu0
    %v1329 = vadd.f32 0.0, %v1328
    %v1330 = vpop.f32.mrb[0].mxu0
    %1331 = vmatprep.mubr.f32.mxu0 0.0
    %1332 = vmatmul.mubr.f32.gmra.mrb[0].mxu0 %v1187
    %v1333 = vpop.f32.mrb[0].mxu0
    %v1334 = vadd.f32 0.0, %v1333
    %v1335 = vpop.f32.mrb[0].mxu0
    %1336 = vmatprep.mubr.f32.mxu0 0.0
    %1337 = vmatmul.mubr.f32.gmra.mrb[0].mxu0 %v1188
    %v1338 = vpop.f32.mrb[0].mxu0
    %v1339 = vadd.f32 0.0, %v1338
    %v1340 = vpop.f32.mrb[0].mxu0
    %1341 = vdwg.mxu0
    %s1342 = scalar_lea.vmem [#allocation2], 448
    %v1343 = vld [vmem:[%s1342] sm:$0xff]
    %v1344 = vld [vmem:[%s1342 + $0x8] sm:$0xff]
    %v1345 = vld [vmem:[%s1342 + $0x10] sm:$0xff]
    %v1346 = vld [vmem:[%s1342 + $0x18] sm:$0xff]
    %v1347 = vld [vmem:[%s1342 + $0x20] sm:$0xff]
    %v1348 = vld [vmem:[%s1342 + $0x28] sm:$0xff]
    %v1349 = vld [vmem:[%s1342 + $0x30] sm:$0xff]
    %v1350 = vld [vmem:[%s1342 + $0x38] sm:$0xff]
    %1351 = vrot.lane.b32.xlu0 %v163, 72
    %v1352 = vpop.permute.xlu0 %1351
    %1353 = vrot.lane.b32.xlu0 %v168, 72
    %v1354 = vpop.permute.xlu0 %1353
    %1355 = vrot.lane.b32.xlu0 %v173, 72
    %v1356 = vpop.permute.xlu0 %1355
    %1357 = vrot.lane.b32.xlu0 %v178, 72
    %v1358 = vpop.permute.xlu0 %1357
    %1359 = vrot.lane.b32.xlu0 %v183, 72
    %v1360 = vpop.permute.xlu0 %1359
    %1361 = vrot.lane.b32.xlu0 %v188, 72
    %v1362 = vpop.permute.xlu0 %1361
    %1363 = vrot.lane.b32.xlu0 %v193, 72
    %v1364 = vpop.permute.xlu0 %1363
    %1365 = vrot.lane.b32.xlu0 %v198, 72
    %v1366 = vpop.permute.xlu0 %1365
    %1367 = vrot.lane.b32.xlu0 %v203, 72
    %v1368 = vpop.permute.xlu0 %1367
    %1369 = vrot.lane.b32.xlu0 %v208, 72
    %v1370 = vpop.permute.xlu0 %1369
    %1371 = vrot.lane.b32.xlu0 %v213, 72
    %v1372 = vpop.permute.xlu0 %1371
    %1373 = vrot.lane.b32.xlu0 %v218, 72
    %v1374 = vpop.permute.xlu0 %1373
    %1375 = vrot.lane.b32.xlu0 %v223, 72
    %v1376 = vpop.permute.xlu0 %1375
    %1377 = vrot.lane.b32.xlu0 %v228, 72
    %v1378 = vpop.permute.xlu0 %1377
    %1379 = vrot.lane.b32.xlu0 %v233, 72
    %v1380 = vpop.permute.xlu0 %1379
    %1381 = vrot.lane.b32.xlu0 %v238, 72
    %v1382 = vpop.permute.xlu0 %1381
    %1399 = vmatprep.subr.mxu0 0.0
    %1400 = vmatpush1.msra.mxu0 %v1352
    %1401 = vmatprep.subr.mxu0 0.0
    %1402 = vmatpush1.msra.mxu0 %v1354
    %1403 = vmatprep.subr.mxu0 0.0
    %1404 = vmatpush1.msra.mxu0 %v1356
    %1405 = vmatprep.subr.mxu0 0.0
    %1406 = vmatpush1.msra.mxu0 %v1358
    %1407 = vmatprep.subr.mxu0 0.0
    %1408 = vmatpush1.msra.mxu0 %v1360
    %1409 = vmatprep.subr.mxu0 0.0
    %1410 = vmatpush1.msra.mxu0 %v1362
    %1411 = vmatprep.subr.mxu0 0.0
    %1412 = vmatpush1.msra.mxu0 %v1364
    %1413 = vmatprep.subr.mxu0 0.0
    %1414 = vmatpush1.msra.mxu0 %v1366
    %1415 = vmatprep.subr.mxu0 0.0
    %1416 = vmatpush1.msra.mxu0 %v1368
    %1417 = vmatprep.subr.mxu0 0.0
    %1418 = vmatpush1.msra.mxu0 %v1370
    %1419 = vmatprep.subr.mxu0 0.0
    %1420 = vmatpush1.msra.mxu0 %v1372
    %1421 = vmatprep.subr.mxu0 0.0
    %1422 = vmatpush1.msra.mxu0 %v1374
    %1423 = vmatprep.subr.mxu0 0.0
    %1424 = vmatpush1.msra.mxu0 %v1376
    %1425 = vmatprep.subr.mxu0 0.0
    %1426 = vmatpush1.msra.mxu0 %v1378
    %1427 = vmatprep.subr.mxu0 0.0
    %1428 = vmatpush1.msra.mxu0 %v1380
    %1429 = vmatprep.subr.mxu0 0.0
    %1430 = vmatpush1.msra.mxu0 %v1382
    %1431 = vmatprep.subr.mxu0 0.0
    %1432 = vmatpush1.msra.mxu0 0.0
    %1433 = vmatprep.subr.mxu0 0.0
    %1434 = vmatpush1.msra.mxu0 0.0
    %1435 = vmatprep.subr.mxu0 0.0
    %1436 = vmatpush1.msra.mxu0 0.0
    %1437 = vmatprep.subr.mxu0 0.0
    %1438 = vmatpush1.msra.mxu0 0.0
    %1439 = vmatprep.subr.mxu0 0.0
    %1440 = vmatpush1.msra.mxu0 0.0
    %1441 = vmatprep.subr.mxu0 0.0
    %1442 = vmatpush1.msra.mxu0 0.0
    %1443 = vmatprep.subr.mxu0 0.0
    %1444 = vmatpush1.msra.mxu0 0.0
    %1445 = vmatprep.subr.mxu0 0.0
    %1446 = vmatpush1.msra.mxu0 0.0
    %1447 = vmatprep.subr.mxu0 0.0
    %1448 = vmatpush1.msra.mxu0 0.0
    %1449 = vmatprep.subr.mxu0 0.0
    %1450 = vmatpush1.msra.mxu0 0.0
    %1451 = vmatprep.subr.mxu0 0.0
    %1452 = vmatpush1.msra.mxu0 0.0
    %1453 = vmatprep.subr.mxu0 0.0
    %1454 = vmatpush1.msra.mxu0 0.0
    %1455 = vmatprep.subr.mxu0 0.0
    %1456 = vmatpush1.msra.mxu0 0.0
    %1457 = vmatprep.subr.mxu0 0.0
    %1458 = vmatpush1.msra.mxu0 0.0
    %1459 = vmatprep.subr.mxu0 0.0
    %1460 = vmatpush1.msra.mxu0 0.0
    %1461 = vmatprep.subr.mxu0 0.0
    %1462 = vmatpush1.msra.mxu0 0.0
    %1463 = vmatprep.mubr.f32.mxu0 0.0
    %1464 = vmatmul.mubr.f32.gmra.mrb[0].mxu0 %v1343
    %v1465 = vpop.f32.mrb[0].mxu0
    %v1466 = vadd.f32 0.0, %v1465
    %v1467 = vpop.f32.mrb[0].mxu0
    %1468 = vmatprep.mubr.f32.mxu0 0.0
    %1469 = vmatmul.mubr.f32.gmra.mrb[0].mxu0 %v1344
    %v1470 = vpop.f32.mrb[0].mxu0
    %v1471 = vadd.f32 0.0, %v1470
    %v1472 = vpop.f32.mrb[0].mxu0
    %1473 = vmatprep.mubr.f32.mxu0 0.0
    %1474 = vmatmul.mubr.f32.gmra.mrb[0].mxu0 %v1345
    %v1475 = vpop.f32.mrb[0].mxu0
    %v1476 = vadd.f32 0.0, %v1475
    %v1477 = vpop.f32.mrb[0].mxu0
    %1478 = vmatprep.mubr.f32.mxu0 0.0
    %1479 = vmatmul.mubr.f32.gmra.mrb[0].mxu0 %v1346
    %v1480 = vpop.f32.mrb[0].mxu0
    %v1481 = vadd.f32 0.0, %v1480
    %v1482 = vpop.f32.mrb[0].mxu0
    %1483 = vmatprep.mubr.f32.mxu0 0.0
    %1484 = vmatmul.mubr.f32.gmra.mrb[0].mxu0 %v1347
    %v1485 = vpop.f32.mrb[0].mxu0
    %v1486 = vadd.f32 0.0, %v1485
    %v1487 = vpop.f32.mrb[0].mxu0
    %1488 = vmatprep.mubr.f32.mxu0 0.0
    %1489 = vmatmul.mubr.f32.gmra.mrb[0].mxu0 %v1348
    %v1490 = vpop.f32.mrb[0].mxu0
    %v1491 = vadd.f32 0.0, %v1490
    %v1492 = vpop.f32.mrb[0].mxu0
    %1493 = vmatprep.mubr.f32.mxu0 0.0
    %1494 = vmatmul.mubr.f32.gmra.mrb[0].mxu0 %v1349
    %v1495 = vpop.f32.mrb[0].mxu0
    %v1496 = vadd.f32 0.0, %v1495
    %v1497 = vpop.f32.mrb[0].mxu0
    %1498 = vmatprep.mubr.f32.mxu0 0.0
    %1499 = vmatmul.mubr.f32.gmra.mrb[0].mxu0 %v1350
    %v1500 = vpop.f32.mrb[0].mxu0
    %v1501 = vadd.f32 0.0, %v1500
    %v1502 = vpop.f32.mrb[0].mxu0
    %1503 = vdwg.mxu0
    %s1504 = scalar_lea.vmem [#allocation2], 512
    %v1505 = vld [vmem:[%s1504] sm:$0xff]
    %v1506 = vld [vmem:[%s1504 + $0x8] sm:$0xff]
    %v1507 = vld [vmem:[%s1504 + $0x10] sm:$0xff]
    %v1508 = vld [vmem:[%s1504 + $0x18] sm:$0xff]
    %v1509 = vld [vmem:[%s1504 + $0x20] sm:$0xff]
    %v1510 = vld [vmem:[%s1504 + $0x28] sm:$0xff]
    %v1511 = vld [vmem:[%s1504 + $0x30] sm:$0xff]
    %v1512 = vld [vmem:[%s1504 + $0x38] sm:$0xff]
    %1513 = vrot.lane.b32.xlu0 %v163, 64
    %v1514 = vpop.permute.xlu0 %1513
    %1515 = vrot.lane.b32.xlu0 %v168, 64
    %v1516 = vpop.permute.xlu0 %1515
    %1517 = vrot.lane.b32.xlu0 %v173, 64
    %v1518 = vpop.permute.xlu0 %1517
    %1519 = vrot.lane.b32.xlu0 %v178, 64
    %v1520 = vpop.permute.xlu0 %1519
    %1521 = vrot.lane.b32.xlu0 %v183, 64
    %v1522 = vpop.permute.xlu0 %1521
    %1523 = vrot.lane.b32.xlu0 %v188, 64
    %v1524 = vpop.permute.xlu0 %1523
    %1525 = vrot.lane.b32.xlu0 %v193, 64
    %v1526 = vpop.permute.xlu0 %1525
    %1527 = vrot.lane.b32.xlu0 %v198, 64
    %v1528 = vpop.permute.xlu0 %1527
    %1529 = vrot.lane.b32.xlu0 %v203, 64
    %v1530 = vpop.permute.xlu0 %1529
    %1531 = vrot.lane.b32.xlu0 %v208, 64
    %v1532 = vpop.permute.xlu0 %1531
    %1533 = vrot.lane.b32.xlu0 %v213, 64
    %v1534 = vpop.permute.xlu0 %1533
    %1535 = vrot.lane.b32.xlu0 %v218, 64
    %v1536 = vpop.permute.xlu0 %1535
    %1537 = vrot.lane.b32.xlu0 %v223, 64
    %v1538 = vpop.permute.xlu0 %1537
    %1539 = vrot.lane.b32.xlu0 %v228, 64
    %v1540 = vpop.permute.xlu0 %1539
    %1541 = vrot.lane.b32.xlu0 %v233, 64
    %v1542 = vpop.permute.xlu0 %1541
    %1543 = vrot.lane.b32.xlu0 %v238, 64
    %v1544 = vpop.permute.xlu0 %1543
    %1561 = vmatprep.subr.mxu0 0.0
    %1562 = vmatpush1.msra.mxu0 %v1514
    %1563 = vmatprep.subr.mxu0 0.0
    %1564 = vmatpush1.msra.mxu0 %v1516
    %1565 = vmatprep.subr.mxu0 0.0
    %1566 = vmatpush1.msra.mxu0 %v1518
    %1567 = vmatprep.subr.mxu0 0.0
    %1568 = vmatpush1.msra.mxu0 %v1520
    %1569 = vmatprep.subr.mxu0 0.0
    %1570 = vmatpush1.msra.mxu0 %v1522
    %1571 = vmatprep.subr.mxu0 0.0
    %1572 = vmatpush1.msra.mxu0 %v1524
    %1573 = vmatprep.subr.mxu0 0.0
    %1574 = vmatpush1.msra.mxu0 %v1526
    %1575 = vmatprep.subr.mxu0 0.0
    %1576 = vmatpush1.msra.mxu0 %v1528
    %1577 = vmatprep.subr.mxu0 0.0
    %1578 = vmatpush1.msra.mxu0 %v1530
    %1579 = vmatprep.subr.mxu0 0.0
    %1580 = vmatpush1.msra.mxu0 %v1532
    %1581 = vmatprep.subr.mxu0 0.0
    %1582 = vmatpush1.msra.mxu0 %v1534
    %1583 = vmatprep.subr.mxu0 0.0
    %1584 = vmatpush1.msra.mxu0 %v1536
    %1585 = vmatprep.subr.mxu0 0.0
    %1586 = vmatpush1.msra.mxu0 %v1538
    %1587 = vmatprep.subr.mxu0 0.0
    %1588 = vmatpush1.msra.mxu0 %v1540
    %1589 = vmatprep.subr.mxu0 0.0
    %1590 = vmatpush1.msra.mxu0 %v1542
    %1591 = vmatprep.subr.mxu0 0.0
    %1592 = vmatpush1.msra.mxu0 %v1544
    %1593 = vmatprep.subr.mxu0 0.0
    %1594 = vmatpush1.msra.mxu0 0.0
    %1595 = vmatprep.subr.mxu0 0.0
    %1596 = vmatpush1.msra.mxu0 0.0
    %1597 = vmatprep.subr.mxu0 0.0
    %1598 = vmatpush1.msra.mxu0 0.0
    %1599 = vmatprep.subr.mxu0 0.0
    %1600 = vmatpush1.msra.mxu0 0.0
    %1601 = vmatprep.subr.mxu0 0.0
    %1602 = vmatpush1.msra.mxu0 0.0
    %1603 = vmatprep.subr.mxu0 0.0
    %1604 = vmatpush1.msra.mxu0 0.0
    %1605 = vmatprep.subr.mxu0 0.0
    %1606 = vmatpush1.msra.mxu0 0.0
    %1607 = vmatprep.subr.mxu0 0.0
    %1608 = vmatpush1.msra.mxu0 0.0
    %1609 = vmatprep.subr.mxu0 0.0
    %1610 = vmatpush1.msra.mxu0 0.0
    %1611 = vmatprep.subr.mxu0 0.0
    %1612 = vmatpush1.msra.mxu0 0.0
    %1613 = vmatprep.subr.mxu0 0.0
    %1614 = vmatpush1.msra.mxu0 0.0
    %1615 = vmatprep.subr.mxu0 0.0
    %1616 = vmatpush1.msra.mxu0 0.0
    %1617 = vmatprep.subr.mxu0 0.0
    %1618 = vmatpush1.msra.mxu0 0.0
    %1619 = vmatprep.subr.mxu0 0.0
    %1620 = vmatpush1.msra.mxu0 0.0
    %1621 = vmatprep.subr.mxu0 0.0
    %1622 = vmatpush1.msra.mxu0 0.0
    %1623 = vmatprep.subr.mxu0 0.0
    %1624 = vmatpush1.msra.mxu0 0.0
    %1625 = vmatprep.mubr.f32.mxu0 0.0
    %1626 = vmatmul.mubr.f32.gmra.mrb[0].mxu0 %v1505
    %v1627 = vpop.f32.mrb[0].mxu0
    %v1628 = vadd.f32 0.0, %v1627
    %v1629 = vpop.f32.mrb[0].mxu0
    %1630 = vmatprep.mubr.f32.mxu0 0.0
    %1631 = vmatmul.mubr.f32.gmra.mrb[0].mxu0 %v1506
    %v1632 = vpop.f32.mrb[0].mxu0
    %v1633 = vadd.f32 0.0, %v1632
    %v1634 = vpop.f32.mrb[0].mxu0
    %1635 = vmatprep.mubr.f32.mxu0 0.0
    %1636 = vmatmul.mubr.f32.gmra.mrb[0].mxu0 %v1507
    %v1637 = vpop.f32.mrb[0].mxu0
    %v1638 = vadd.f32 0.0, %v1637
    %v1639 = vpop.f32.mrb[0].mxu0
    %1640 = vmatprep.mubr.f32.mxu0 0.0
    %1641 = vmatmul.mubr.f32.gmra.mrb[0].mxu0 %v1508
    %v1642 = vpop.f32.mrb[0].mxu0
    %v1643 = vadd.f32 0.0, %v1642
    %v1644 = vpop.f32.mrb[0].mxu0
    %1645 = vmatprep.mubr.f32.mxu0 0.0
    %1646 = vmatmul.mubr.f32.gmra.mrb[0].mxu0 %v1509
    %v1647 = vpop.f32.mrb[0].mxu0
    %v1648 = vadd.f32 0.0, %v1647
    %v1649 = vpop.f32.mrb[0].mxu0
    %1650 = vmatprep.mubr.f32.mxu0 0.0
    %1651 = vmatmul.mubr.f32.gmra.mrb[0].mxu0 %v1510
    %v1652 = vpop.f32.mrb[0].mxu0
    %v1653 = vadd.f32 0.0, %v1652
    %v1654 = vpop.f32.mrb[0].mxu0
    %1655 = vmatprep.mubr.f32.mxu0 0.0
    %1656 = vmatmul.mubr.f32.gmra.mrb[0].mxu0 %v1511
    %v1657 = vpop.f32.mrb[0].mxu0
    %v1658 = vadd.f32 0.0, %v1657
    %v1659 = vpop.f32.mrb[0].mxu0
    %1660 = vmatprep.mubr.f32.mxu0 0.0
    %1661 = vmatmul.mubr.f32.gmra.mrb[0].mxu0 %v1512
    %v1662 = vpop.f32.mrb[0].mxu0
    %v1663 = vadd.f32 0.0, %v1662
    %v1664 = vpop.f32.mrb[0].mxu0
    %1665 = vdwg.mxu0
    %s1666 = scalar_lea.vmem [#allocation2], 576
    %v1667 = vld [vmem:[%s1666] sm:$0xff]
    %v1668 = vld [vmem:[%s1666 + $0x8] sm:$0xff]
    %v1669 = vld [vmem:[%s1666 + $0x10] sm:$0xff]
    %v1670 = vld [vmem:[%s1666 + $0x18] sm:$0xff]
    %v1671 = vld [vmem:[%s1666 + $0x20] sm:$0xff]
    %v1672 = vld [vmem:[%s1666 + $0x28] sm:$0xff]
    %v1673 = vld [vmem:[%s1666 + $0x30] sm:$0xff]
    %v1674 = vld [vmem:[%s1666 + $0x38] sm:$0xff]
    %1675 = vrot.lane.b32.xlu0 %v163, 56
    %v1676 = vpop.permute.xlu0 %1675
    %1677 = vrot.lane.b32.xlu0 %v168, 56
    %v1678 = vpop.permute.xlu0 %1677
    %1679 = vrot.lane.b32.xlu0 %v173, 56
    %v1680 = vpop.permute.xlu0 %1679
    %1681 = vrot.lane.b32.xlu0 %v178, 56
    %v1682 = vpop.permute.xlu0 %1681
    %1683 = vrot.lane.b32.xlu0 %v183, 56
    %v1684 = vpop.permute.xlu0 %1683
    %1685 = vrot.lane.b32.xlu0 %v188, 56
    %v1686 = vpop.permute.xlu0 %1685
    %1687 = vrot.lane.b32.xlu0 %v193, 56
    %v1688 = vpop.permute.xlu0 %1687
    %1689 = vrot.lane.b32.xlu0 %v198, 56
    %v1690 = vpop.permute.xlu0 %1689
    %1691 = vrot.lane.b32.xlu0 %v203, 56
    %v1692 = vpop.permute.xlu0 %1691
    %1693 = vrot.lane.b32.xlu0 %v208, 56
    %v1694 = vpop.permute.xlu0 %1693
    %1695 = vrot.lane.b32.xlu0 %v213, 56
    %v1696 = vpop.permute.xlu0 %1695
    %1697 = vrot.lane.b32.xlu0 %v218, 56
    %v1698 = vpop.permute.xlu0 %1697
    %1699 = vrot.lane.b32.xlu0 %v223, 56
    %v1700 = vpop.permute.xlu0 %1699
    %1701 = vrot.lane.b32.xlu0 %v228, 56
    %v1702 = vpop.permute.xlu0 %1701
    %1703 = vrot.lane.b32.xlu0 %v233, 56
    %v1704 = vpop.permute.xlu0 %1703
    %1705 = vrot.lane.b32.xlu0 %v238, 56
    %v1706 = vpop.permute.xlu0 %1705
    %1723 = vmatprep.subr.mxu0 0.0
    %1724 = vmatpush1.msra.mxu0 %v1676
    %1725 = vmatprep.subr.mxu0 0.0
    %1726 = vmatpush1.msra.mxu0 %v1678
    %1727 = vmatprep.subr.mxu0 0.0
    %1728 = vmatpush1.msra.mxu0 %v1680
    %1729 = vmatprep.subr.mxu0 0.0
    %1730 = vmatpush1.msra.mxu0 %v1682
    %1731 = vmatprep.subr.mxu0 0.0
    %1732 = vmatpush1.msra.mxu0 %v1684
    %1733 = vmatprep.subr.mxu0 0.0
    %1734 = vmatpush1.msra.mxu0 %v1686
    %1735 = vmatprep.subr.mxu0 0.0
    %1736 = vmatpush1.msra.mxu0 %v1688
    %1737 = vmatprep.subr.mxu0 0.0
    %1738 = vmatpush1.msra.mxu0 %v1690
    %1739 = vmatprep.subr.mxu0 0.0
    %1740 = vmatpush1.msra.mxu0 %v1692
    %1741 = vmatprep.subr.mxu0 0.0
    %1742 = vmatpush1.msra.mxu0 %v1694
    %1743 = vmatprep.subr.mxu0 0.0
    %1744 = vmatpush1.msra.mxu0 %v1696
    %1745 = vmatprep.subr.mxu0 0.0
    %1746 = vmatpush1.msra.mxu0 %v1698
    %1747 = vmatprep.subr.mxu0 0.0
    %1748 = vmatpush1.msra.mxu0 %v1700
    %1749 = vmatprep.subr.mxu0 0.0
    %1750 = vmatpush1.msra.mxu0 %v1702
    %1751 = vmatprep.subr.mxu0 0.0
    %1752 = vmatpush1.msra.mxu0 %v1704
    %1753 = vmatprep.subr.mxu0 0.0
    %1754 = vmatpush1.msra.mxu0 %v1706
    %1755 = vmatprep.subr.mxu0 0.0
    %1756 = vmatpush1.msra.mxu0 0.0
    %1757 = vmatprep.subr.mxu0 0.0
    %1758 = vmatpush1.msra.mxu0 0.0
    %1759 = vmatprep.subr.mxu0 0.0
    %1760 = vmatpush1.msra.mxu0 0.0
    %1761 = vmatprep.subr.mxu0 0.0
    %1762 = vmatpush1.msra.mxu0 0.0
    %1763 = vmatprep.subr.mxu0 0.0
    %1764 = vmatpush1.msra.mxu0 0.0
    %1765 = vmatprep.subr.mxu0 0.0
    %1766 = vmatpush1.msra.mxu0 0.0
    %1767 = vmatprep.subr.mxu0 0.0
    %1768 = vmatpush1.msra.mxu0 0.0
    %1769 = vmatprep.subr.mxu0 0.0
    %1770 = vmatpush1.msra.mxu0 0.0
    %1771 = vmatprep.subr.mxu0 0.0
    %1772 = vmatpush1.msra.mxu0 0.0
    %1773 = vmatprep.subr.mxu0 0.0
    %1774 = vmatpush1.msra.mxu0 0.0
    %1775 = vmatprep.subr.mxu0 0.0
    %1776 = vmatpush1.msra.mxu0 0.0
    %1777 = vmatprep.subr.mxu0 0.0
    %1778 = vmatpush1.msra.mxu0 0.0
    %1779 = vmatprep.subr.mxu0 0.0
    %1780 = vmatpush1.msra.mxu0 0.0
    %1781 = vmatprep.subr.mxu0 0.0
    %1782 = vmatpush1.msra.mxu0 0.0
    %1783 = vmatprep.subr.mxu0 0.0
    %1784 = vmatpush1.msra.mxu0 0.0
    %1785 = vmatprep.subr.mxu0 0.0
    %1786 = vmatpush1.msra.mxu0 0.0
    %1787 = vmatprep.mubr.f32.mxu0 0.0
    %1788 = vmatmul.mubr.f32.gmra.mrb[0].mxu0 %v1667
    %v1789 = vpop.f32.mrb[0].mxu0
    %v1790 = vadd.f32 0.0, %v1789
    %v1791 = vpop.f32.mrb[0].mxu0
    %1792 = vmatprep.mubr.f32.mxu0 0.0
    %1793 = vmatmul.mubr.f32.gmra.mrb[0].mxu0 %v1668
    %v1794 = vpop.f32.mrb[0].mxu0
    %v1795 = vadd.f32 0.0, %v1794
    %v1796 = vpop.f32.mrb[0].mxu0
    %1797 = vmatprep.mubr.f32.mxu0 0.0
    %1798 = vmatmul.mubr.f32.gmra.mrb[0].mxu0 %v1669
    %v1799 = vpop.f32.mrb[0].mxu0
    %v1800 = vadd.f32 0.0, %v1799
    %v1801 = vpop.f32.mrb[0].mxu0
    %1802 = vmatprep.mubr.f32.mxu0 0.0
    %1803 = vmatmul.mubr.f32.gmra.mrb[0].mxu0 %v1670
    %v1804 = vpop.f32.mrb[0].mxu0
    %v1805 = vadd.f32 0.0, %v1804
    %v1806 = vpop.f32.mrb[0].mxu0
    %1807 = vmatprep.mubr.f32.mxu0 0.0
    %1808 = vmatmul.mubr.f32.gmra.mrb[0].mxu0 %v1671
    %v1809 = vpop.f32.mrb[0].mxu0
    %v1810 = vadd.f32 0.0, %v1809
    %v1811 = vpop.f32.mrb[0].mxu0
    %1812 = vmatprep.mubr.f32.mxu0 0.0
    %1813 = vmatmul.mubr.f32.gmra.mrb[0].mxu0 %v1672
    %v1814 = vpop.f32.mrb[0].mxu0
    %v1815 = vadd.f32 0.0, %v1814
    %v1816 = vpop.f32.mrb[0].mxu0
    %1817 = vmatprep.mubr.f32.mxu0 0.0
    %1818 = vmatmul.mubr.f32.gmra.mrb[0].mxu0 %v1673
    %v1819 = vpop.f32.mrb[0].mxu0
    %v1820 = vadd.f32 0.0, %v1819
    %v1821 = vpop.f32.mrb[0].mxu0
    %1822 = vmatprep.mubr.f32.mxu0 0.0
    %1823 = vmatmul.mubr.f32.gmra.mrb[0].mxu0 %v1674
    %v1824 = vpop.f32.mrb[0].mxu0
    %v1825 = vadd.f32 0.0, %v1824
    %v1826 = vpop.f32.mrb[0].mxu0
    %1827 = vdwg.mxu0
    %s1828 = scalar_lea.vmem [#allocation2], 640
    %v1829 = vld [vmem:[%s1828] sm:$0xff]
    %v1830 = vld [vmem:[%s1828 + $0x8] sm:$0xff]
    %v1831 = vld [vmem:[%s1828 + $0x10] sm:$0xff]
    %v1832 = vld [vmem:[%s1828 + $0x18] sm:$0xff]
    %v1833 = vld [vmem:[%s1828 + $0x20] sm:$0xff]
    %v1834 = vld [vmem:[%s1828 + $0x28] sm:$0xff]
    %v1835 = vld [vmem:[%s1828 + $0x30] sm:$0xff]
    %v1836 = vld [vmem:[%s1828 + $0x38] sm:$0xff]
    %1837 = vrot.lane.b32.xlu0 %v163, 48
    %v1838 = vpop.permute.xlu0 %1837
    %1839 = vrot.lane.b32.xlu0 %v168, 48
    %v1840 = vpop.permute.xlu0 %1839
    %1841 = vrot.lane.b32.xlu0 %v173, 48
    %v1842 = vpop.permute.xlu0 %1841
    %1843 = vrot.lane.b32.xlu0 %v178, 48
    %v1844 = vpop.permute.xlu0 %1843
    %1845 = vrot.lane.b32.xlu0 %v183, 48
    %v1846 = vpop.permute.xlu0 %1845
    %1847 = vrot.lane.b32.xlu0 %v188, 48
    %v1848 = vpop.permute.xlu0 %1847
    %1849 = vrot.lane.b32.xlu0 %v193, 48
    %v1850 = vpop.permute.xlu0 %1849
    %1851 = vrot.lane.b32.xlu0 %v198, 48
    %v1852 = vpop.permute.xlu0 %1851
    %1853 = vrot.lane.b32.xlu0 %v203, 48
    %v1854 = vpop.permute.xlu0 %1853
    %1855 = vrot.lane.b32.xlu0 %v208, 48
    %v1856 = vpop.permute.xlu0 %1855
    %1857 = vrot.lane.b32.xlu0 %v213, 48
    %v1858 = vpop.permute.xlu0 %1857
    %1859 = vrot.lane.b32.xlu0 %v218, 48
    %v1860 = vpop.permute.xlu0 %1859
    %1861 = vrot.lane.b32.xlu0 %v223, 48
    %v1862 = vpop.permute.xlu0 %1861
    %1863 = vrot.lane.b32.xlu0 %v228, 48
    %v1864 = vpop.permute.xlu0 %1863
    %1865 = vrot.lane.b32.xlu0 %v233, 48
    %v1866 = vpop.permute.xlu0 %1865
    %1867 = vrot.lane.b32.xlu0 %v238, 48
    %v1868 = vpop.permute.xlu0 %1867
    %1885 = vmatprep.subr.mxu0 0.0
    %1886 = vmatpush1.msra.mxu0 %v1838
    %1887 = vmatprep.subr.mxu0 0.0
    %1888 = vmatpush1.msra.mxu0 %v1840
    %1889 = vmatprep.subr.mxu0 0.0
    %1890 = vmatpush1.msra.mxu0 %v1842
    %1891 = vmatprep.subr.mxu0 0.0
    %1892 = vmatpush1.msra.mxu0 %v1844
    %1893 = vmatprep.subr.mxu0 0.0
    %1894 = vmatpush1.msra.mxu0 %v1846
    %1895 = vmatprep.subr.mxu0 0.0
    %1896 = vmatpush1.msra.mxu0 %v1848
    %1897 = vmatprep.subr.mxu0 0.0
    %1898 = vmatpush1.msra.mxu0 %v1850
    %1899 = vmatprep.subr.mxu0 0.0
    %1900 = vmatpush1.msra.mxu0 %v1852
    %1901 = vmatprep.subr.mxu0 0.0
    %1902 = vmatpush1.msra.mxu0 %v1854
    %1903 = vmatprep.subr.mxu0 0.0
    %1904 = vmatpush1.msra.mxu0 %v1856
    %1905 = vmatprep.subr.mxu0 0.0
    %1906 = vmatpush1.msra.mxu0 %v1858
    %1907 = vmatprep.subr.mxu0 0.0
    %1908 = vmatpush1.msra.mxu0 %v1860
    %1909 = vmatprep.subr.mxu0 0.0
    %1910 = vmatpush1.msra.mxu0 %v1862
    %1911 = vmatprep.subr.mxu0 0.0
    %1912 = vmatpush1.msra.mxu0 %v1864
    %1913 = vmatprep.subr.mxu0 0.0
    %1914 = vmatpush1.msra.mxu0 %v1866
    %1915 = vmatprep.subr.mxu0 0.0
    %1916 = vmatpush1.msra.mxu0 %v1868
    %1917 = vmatprep.subr.mxu0 0.0
    %1918 = vmatpush1.msra.mxu0 0.0
    %1919 = vmatprep.subr.mxu0 0.0
    %1920 = vmatpush1.msra.mxu0 0.0
    %1921 = vmatprep.subr.mxu0 0.0
    %1922 = vmatpush1.msra.mxu0 0.0
    %1923 = vmatprep.subr.mxu0 0.0
    %1924 = vmatpush1.msra.mxu0 0.0
    %1925 = vmatprep.subr.mxu0 0.0
    %1926 = vmatpush1.msra.mxu0 0.0
    %1927 = vmatprep.subr.mxu0 0.0
    %1928 = vmatpush1.msra.mxu0 0.0
    %1929 = vmatprep.subr.mxu0 0.0
    %1930 = vmatpush1.msra.mxu0 0.0
    %1931 = vmatprep.subr.mxu0 0.0
    %1932 = vmatpush1.msra.mxu0 0.0
    %1933 = vmatprep.subr.mxu0 0.0
    %1934 = vmatpush1.msra.mxu0 0.0
    %1935 = vmatprep.subr.mxu0 0.0
    %1936 = vmatpush1.msra.mxu0 0.0
    %1937 = vmatprep.subr.mxu0 0.0
    %1938 = vmatpush1.msra.mxu0 0.0
    %1939 = vmatprep.subr.mxu0 0.0
    %1940 = vmatpush1.msra.mxu0 0.0
    %1941 = vmatprep.subr.mxu0 0.0
    %1942 = vmatpush1.msra.mxu0 0.0
    %1943 = vmatprep.subr.mxu0 0.0
    %1944 = vmatpush1.msra.mxu0 0.0
    %1945 = vmatprep.subr.mxu0 0.0
    %1946 = vmatpush1.msra.mxu0 0.0
    %1947 = vmatprep.subr.mxu0 0.0
    %1948 = vmatpush1.msra.mxu0 0.0
    %1949 = vmatprep.mubr.f32.mxu0 0.0
    %1950 = vmatmul.mubr.f32.gmra.mrb[0].mxu0 %v1829
    %v1951 = vpop.f32.mrb[0].mxu0
    %v1952 = vadd.f32 0.0, %v1951
    %v1953 = vpop.f32.mrb[0].mxu0
    %1954 = vmatprep.mubr.f32.mxu0 0.0
    %1955 = vmatmul.mubr.f32.gmra.mrb[0].mxu0 %v1830
    %v1956 = vpop.f32.mrb[0].mxu0
    %v1957 = vadd.f32 0.0, %v1956
    %v1958 = vpop.f32.mrb[0].mxu0
    %1959 = vmatprep.mubr.f32.mxu0 0.0
    %1960 = vmatmul.mubr.f32.gmra.mrb[0].mxu0 %v1831
    %v1961 = vpop.f32.mrb[0].mxu0
    %v1962 = vadd.f32 0.0, %v1961
    %v1963 = vpop.f32.mrb[0].mxu0
    %1964 = vmatprep.mubr.f32.mxu0 0.0
    %1965 = vmatmul.mubr.f32.gmra.mrb[0].mxu0 %v1832
    %v1966 = vpop.f32.mrb[0].mxu0
    %v1967 = vadd.f32 0.0, %v1966
    %v1968 = vpop.f32.mrb[0].mxu0
    %1969 = vmatprep.mubr.f32.mxu0 0.0
    %1970 = vmatmul.mubr.f32.gmra.mrb[0].mxu0 %v1833
    %v1971 = vpop.f32.mrb[0].mxu0
    %v1972 = vadd.f32 0.0, %v1971
    %v1973 = vpop.f32.mrb[0].mxu0
    %1974 = vmatprep.mubr.f32.mxu0 0.0
    %1975 = vmatmul.mubr.f32.gmra.mrb[0].mxu0 %v1834
    %v1976 = vpop.f32.mrb[0].mxu0
    %v1977 = vadd.f32 0.0, %v1976
    %v1978 = vpop.f32.mrb[0].mxu0
    %1979 = vmatprep.mubr.f32.mxu0 0.0
    %1980 = vmatmul.mubr.f32.gmra.mrb[0].mxu0 %v1835
    %v1981 = vpop.f32.mrb[0].mxu0
    %v1982 = vadd.f32 0.0, %v1981
    %v1983 = vpop.f32.mrb[0].mxu0
    %1984 = vmatprep.mubr.f32.mxu0 0.0
    %1985 = vmatmul.mubr.f32.gmra.mrb[0].mxu0 %v1836
    %v1986 = vpop.f32.mrb[0].mxu0
    %v1987 = vadd.f32 0.0, %v1986
    %v1988 = vpop.f32.mrb[0].mxu0
    %1989 = vdwg.mxu0
    %s1990 = scalar_lea.vmem [#allocation2], 704
    %v1991 = vld [vmem:[%s1990] sm:$0xff]
    %v1992 = vld [vmem:[%s1990 + $0x8] sm:$0xff]
    %v1993 = vld [vmem:[%s1990 + $0x10] sm:$0xff]
    %v1994 = vld [vmem:[%s1990 + $0x18] sm:$0xff]
    %v1995 = vld [vmem:[%s1990 + $0x20] sm:$0xff]
    %v1996 = vld [vmem:[%s1990 + $0x28] sm:$0xff]
    %v1997 = vld [vmem:[%s1990 + $0x30] sm:$0xff]
    %v1998 = vld [vmem:[%s1990 + $0x38] sm:$0xff]
    %1999 = vrot.lane.b32.xlu0 %v163, 40
    %v2000 = vpop.permute.xlu0 %1999
    %2001 = vrot.lane.b32.xlu0 %v168, 40
    %v2002 = vpop.permute.xlu0 %2001
    %2003 = vrot.lane.b32.xlu0 %v173, 40
    %v2004 = vpop.permute.xlu0 %2003
    %2005 = vrot.lane.b32.xlu0 %v178, 40
    %v2006 = vpop.permute.xlu0 %2005
    %2007 = vrot.lane.b32.xlu0 %v183, 40
    %v2008 = vpop.permute.xlu0 %2007
    %2009 = vrot.lane.b32.xlu0 %v188, 40
    %v2010 = vpop.permute.xlu0 %2009
    %2011 = vrot.lane.b32.xlu0 %v193, 40
    %v2012 = vpop.permute.xlu0 %2011
    %2013 = vrot.lane.b32.xlu0 %v198, 40
    %v2014 = vpop.permute.xlu0 %2013
    %2015 = vrot.lane.b32.xlu0 %v203, 40
    %v2016 = vpop.permute.xlu0 %2015
    %2017 = vrot.lane.b32.xlu0 %v208, 40
    %v2018 = vpop.permute.xlu0 %2017
    %2019 = vrot.lane.b32.xlu0 %v213, 40
    %v2020 = vpop.permute.xlu0 %2019
    %2021 = vrot.lane.b32.xlu0 %v218, 40
    %v2022 = vpop.permute.xlu0 %2021
    %2023 = vrot.lane.b32.xlu0 %v223, 40
    %v2024 = vpop.permute.xlu0 %2023
    %2025 = vrot.lane.b32.xlu0 %v228, 40
    %v2026 = vpop.permute.xlu0 %2025
    %2027 = vrot.lane.b32.xlu0 %v233, 40
    %v2028 = vpop.permute.xlu0 %2027
    %2029 = vrot.lane.b32.xlu0 %v238, 40
    %v2030 = vpop.permute.xlu0 %2029
    %2047 = vmatprep.subr.mxu0 0.0
    %2048 = vmatpush1.msra.mxu0 %v2000
    %2049 = vmatprep.subr.mxu0 0.0
    %2050 = vmatpush1.msra.mxu0 %v2002
    %2051 = vmatprep.subr.mxu0 0.0
    %2052 = vmatpush1.msra.mxu0 %v2004
    %2053 = vmatprep.subr.mxu0 0.0
    %2054 = vmatpush1.msra.mxu0 %v2006
    %2055 = vmatprep.subr.mxu0 0.0
    %2056 = vmatpush1.msra.mxu0 %v2008
    %2057 = vmatprep.subr.mxu0 0.0
    %2058 = vmatpush1.msra.mxu0 %v2010
    %2059 = vmatprep.subr.mxu0 0.0
    %2060 = vmatpush1.msra.mxu0 %v2012
    %2061 = vmatprep.subr.mxu0 0.0
    %2062 = vmatpush1.msra.mxu0 %v2014
    %2063 = vmatprep.subr.mxu0 0.0
    %2064 = vmatpush1.msra.mxu0 %v2016
    %2065 = vmatprep.subr.mxu0 0.0
    %2066 = vmatpush1.msra.mxu0 %v2018
    %2067 = vmatprep.subr.mxu0 0.0
    %2068 = vmatpush1.msra.mxu0 %v2020
    %2069 = vmatprep.subr.mxu0 0.0
    %2070 = vmatpush1.msra.mxu0 %v2022
    %2071 = vmatprep.subr.mxu0 0.0
    %2072 = vmatpush1.msra.mxu0 %v2024
    %2073 = vmatprep.subr.mxu0 0.0
    %2074 = vmatpush1.msra.mxu0 %v2026
    %2075 = vmatprep.subr.mxu0 0.0
    %2076 = vmatpush1.msra.mxu0 %v2028
    %2077 = vmatprep.subr.mxu0 0.0
    %2078 = vmatpush1.msra.mxu0 %v2030
    %2079 = vmatprep.subr.mxu0 0.0
    %2080 = vmatpush1.msra.mxu0 0.0
    %2081 = vmatprep.subr.mxu0 0.0
    %2082 = vmatpush1.msra.mxu0 0.0
    %2083 = vmatprep.subr.mxu0 0.0
    %2084 = vmatpush1.msra.mxu0 0.0
    %2085 = vmatprep.subr.mxu0 0.0
    %2086 = vmatpush1.msra.mxu0 0.0
    %2087 = vmatprep.subr.mxu0 0.0
    %2088 = vmatpush1.msra.mxu0 0.0
    %2089 = vmatprep.subr.mxu0 0.0
    %2090 = vmatpush1.msra.mxu0 0.0
    %2091 = vmatprep.subr.mxu0 0.0
    %2092 = vmatpush1.msra.mxu0 0.0
    %2093 = vmatprep.subr.mxu0 0.0
    %2094 = vmatpush1.msra.mxu0 0.0
    %2095 = vmatprep.subr.mxu0 0.0
    %2096 = vmatpush1.msra.mxu0 0.0
    %2097 = vmatprep.subr.mxu0 0.0
    %2098 = vmatpush1.msra.mxu0 0.0
    %2099 = vmatprep.subr.mxu0 0.0
    %2100 = vmatpush1.msra.mxu0 0.0
    %2101 = vmatprep.subr.mxu0 0.0
    %2102 = vmatpush1.msra.mxu0 0.0
    %2103 = vmatprep.subr.mxu0 0.0
    %2104 = vmatpush1.msra.mxu0 0.0
    %2105 = vmatprep.subr.mxu0 0.0
    %2106 = vmatpush1.msra.mxu0 0.0
    %2107 = vmatprep.subr.mxu0 0.0
    %2108 = vmatpush1.msra.mxu0 0.0
    %2109 = vmatprep.subr.mxu0 0.0
    %2110 = vmatpush1.msra.mxu0 0.0
    %2111 = vmatprep.mubr.f32.mxu0 0.0
    %2112 = vmatmul.mubr.f32.gmra.mrb[0].mxu0 %v1991
    %v2113 = vpop.f32.mrb[0].mxu0
    %v2114 = vadd.f32 0.0, %v2113
    %v2115 = vpop.f32.mrb[0].mxu0
    %2116 = vmatprep.mubr.f32.mxu0 0.0
    %2117 = vmatmul.mubr.f32.gmra.mrb[0].mxu0 %v1992
    %v2118 = vpop.f32.mrb[0].mxu0
    %v2119 = vadd.f32 0.0, %v2118
    %v2120 = vpop.f32.mrb[0].mxu0
    %2121 = vmatprep.mubr.f32.mxu0 0.0
    %2122 = vmatmul.mubr.f32.gmra.mrb[0].mxu0 %v1993
    %v2123 = vpop.f32.mrb[0].mxu0
    %v2124 = vadd.f32 0.0, %v2123
    %v2125 = vpop.f32.mrb[0].mxu0
    %2126 = vmatprep.mubr.f32.mxu0 0.0
    %2127 = vmatmul.mubr.f32.gmra.mrb[0].mxu0 %v1994
    %v2128 = vpop.f32.mrb[0].mxu0
    %v2129 = vadd.f32 0.0, %v2128
    %v2130 = vpop.f32.mrb[0].mxu0
    %2131 = vmatprep.mubr.f32.mxu0 0.0
    %2132 = vmatmul.mubr.f32.gmra.mrb[0].mxu0 %v1995
    %v2133 = vpop.f32.mrb[0].mxu0
    %v2134 = vadd.f32 0.0, %v2133
    %v2135 = vpop.f32.mrb[0].mxu0
    %2136 = vmatprep.mubr.f32.mxu0 0.0
    %2137 = vmatmul.mubr.f32.gmra.mrb[0].mxu0 %v1996
    %v2138 = vpop.f32.mrb[0].mxu0
    %v2139 = vadd.f32 0.0, %v2138
    %v2140 = vpop.f32.mrb[0].mxu0
    %2141 = vmatprep.mubr.f32.mxu0 0.0
    %2142 = vmatmul.mubr.f32.gmra.mrb[0].mxu0 %v1997
    %v2143 = vpop.f32.mrb[0].mxu0
    %v2144 = vadd.f32 0.0, %v2143
    %v2145 = vpop.f32.mrb[0].mxu0
    %2146 = vmatprep.mubr.f32.mxu0 0.0
    %2147 = vmatmul.mubr.f32.gmra.mrb[0].mxu0 %v1998
    %v2148 = vpop.f32.mrb[0].mxu0
    %v2149 = vadd.f32 0.0, %v2148
    %v2150 = vpop.f32.mrb[0].mxu0
    %2151 = vdwg.mxu0
    %s2152 = scalar_lea.vmem [#allocation2], 768
    %v2153 = vld [vmem:[%s2152] sm:$0xff]
    %v2154 = vld [vmem:[%s2152 + $0x8] sm:$0xff]
    %v2155 = vld [vmem:[%s2152 + $0x10] sm:$0xff]
    %v2156 = vld [vmem:[%s2152 + $0x18] sm:$0xff]
    %v2157 = vld [vmem:[%s2152 + $0x20] sm:$0xff]
    %v2158 = vld [vmem:[%s2152 + $0x28] sm:$0xff]
    %v2159 = vld [vmem:[%s2152 + $0x30] sm:$0xff]
    %v2160 = vld [vmem:[%s2152 + $0x38] sm:$0xff]
    %2161 = vrot.lane.b32.xlu0 %v163, 32
    %v2162 = vpop.permute.xlu0 %2161
    %2163 = vrot.lane.b32.xlu0 %v168, 32
    %v2164 = vpop.permute.xlu0 %2163
    %2165 = vrot.lane.b32.xlu0 %v173, 32
    %v2166 = vpop.permute.xlu0 %2165
    %2167 = vrot.lane.b32.xlu0 %v178, 32
    %v2168 = vpop.permute.xlu0 %2167
    %2169 = vrot.lane.b32.xlu0 %v183, 32
    %v2170 = vpop.permute.xlu0 %2169
    %2171 = vrot.lane.b32.xlu0 %v188, 32
    %v2172 = vpop.permute.xlu0 %2171
    %2173 = vrot.lane.b32.xlu0 %v193, 32
    %v2174 = vpop.permute.xlu0 %2173
    %2175 = vrot.lane.b32.xlu0 %v198, 32
    %v2176 = vpop.permute.xlu0 %2175
    %2177 = vrot.lane.b32.xlu0 %v203, 32
    %v2178 = vpop.permute.xlu0 %2177
    %2179 = vrot.lane.b32.xlu0 %v208, 32
    %v2180 = vpop.permute.xlu0 %2179
    %2181 = vrot.lane.b32.xlu0 %v213, 32
    %v2182 = vpop.permute.xlu0 %2181
    %2183 = vrot.lane.b32.xlu0 %v218, 32
    %v2184 = vpop.permute.xlu0 %2183
    %2185 = vrot.lane.b32.xlu0 %v223, 32
    %v2186 = vpop.permute.xlu0 %2185
    %2187 = vrot.lane.b32.xlu0 %v228, 32
    %v2188 = vpop.permute.xlu0 %2187
    %2189 = vrot.lane.b32.xlu0 %v233, 32
    %v2190 = vpop.permute.xlu0 %2189
    %2191 = vrot.lane.b32.xlu0 %v238, 32
    %v2192 = vpop.permute.xlu0 %2191
    %2209 = vmatprep.subr.mxu0 0.0
    %2210 = vmatpush1.msra.mxu0 %v2162
    %2211 = vmatprep.subr.mxu0 0.0
    %2212 = vmatpush1.msra.mxu0 %v2164
    %2213 = vmatprep.subr.mxu0 0.0
    %2214 = vmatpush1.msra.mxu0 %v2166
    %2215 = vmatprep.subr.mxu0 0.0
    %2216 = vmatpush1.msra.mxu0 %v2168
    %2217 = vmatprep.subr.mxu0 0.0
    %2218 = vmatpush1.msra.mxu0 %v2170
    %2219 = vmatprep.subr.mxu0 0.0
    %2220 = vmatpush1.msra.mxu0 %v2172
    %2221 = vmatprep.subr.mxu0 0.0
    %2222 = vmatpush1.msra.mxu0 %v2174
    %2223 = vmatprep.subr.mxu0 0.0
    %2224 = vmatpush1.msra.mxu0 %v2176
    %2225 = vmatprep.subr.mxu0 0.0
    %2226 = vmatpush1.msra.mxu0 %v2178
    %2227 = vmatprep.subr.mxu0 0.0
    %2228 = vmatpush1.msra.mxu0 %v2180
    %2229 = vmatprep.subr.mxu0 0.0
    %2230 = vmatpush1.msra.mxu0 %v2182
    %2231 = vmatprep.subr.mxu0 0.0
    %2232 = vmatpush1.msra.mxu0 %v2184
    %2233 = vmatprep.subr.mxu0 0.0
    %2234 = vmatpush1.msra.mxu0 %v2186
    %2235 = vmatprep.subr.mxu0 0.0
    %2236 = vmatpush1.msra.mxu0 %v2188
    %2237 = vmatprep.subr.mxu0 0.0
    %2238 = vmatpush1.msra.mxu0 %v2190
    %2239 = vmatprep.subr.mxu0 0.0
    %2240 = vmatpush1.msra.mxu0 %v2192
    %2241 = vmatprep.subr.mxu0 0.0
    %2242 = vmatpush1.msra.mxu0 0.0
    %2243 = vmatprep.subr.mxu0 0.0
    %2244 = vmatpush1.msra.mxu0 0.0
    %2245 = vmatprep.subr.mxu0 0.0
    %2246 = vmatpush1.msra.mxu0 0.0
    %2247 = vmatprep.subr.mxu0 0.0
    %2248 = vmatpush1.msra.mxu0 0.0
    %2249 = vmatprep.subr.mxu0 0.0
    %2250 = vmatpush1.msra.mxu0 0.0
    %2251 = vmatprep.subr.mxu0 0.0
    %2252 = vmatpush1.msra.mxu0 0.0
    %2253 = vmatprep.subr.mxu0 0.0
    %2254 = vmatpush1.msra.mxu0 0.0
    %2255 = vmatprep.subr.mxu0 0.0
    %2256 = vmatpush1.msra.mxu0 0.0
    %2257 = vmatprep.subr.mxu0 0.0
    %2258 = vmatpush1.msra.mxu0 0.0
    %2259 = vmatprep.subr.mxu0 0.0
    %2260 = vmatpush1.msra.mxu0 0.0
    %2261 = vmatprep.subr.mxu0 0.0
    %2262 = vmatpush1.msra.mxu0 0.0
    %2263 = vmatprep.subr.mxu0 0.0
    %2264 = vmatpush1.msra.mxu0 0.0
    %2265 = vmatprep.subr.mxu0 0.0
    %2266 = vmatpush1.msra.mxu0 0.0
    %2267 = vmatprep.subr.mxu0 0.0
    %2268 = vmatpush1.msra.mxu0 0.0
    %2269 = vmatprep.subr.mxu0 0.0
    %2270 = vmatpush1.msra.mxu0 0.0
    %2271 = vmatprep.subr.mxu0 0.0
    %2272 = vmatpush1.msra.mxu0 0.0
    %2273 = vmatprep.mubr.f32.mxu0 0.0
    %2274 = vmatmul.mubr.f32.gmra.mrb[0].mxu0 %v2153
    %v2275 = vpop.f32.mrb[0].mxu0
    %v2276 = vadd.f32 0.0, %v2275
    %v2277 = vpop.f32.mrb[0].mxu0
    %2278 = vmatprep.mubr.f32.mxu0 0.0
    %2279 = vmatmul.mubr.f32.gmra.mrb[0].mxu0 %v2154
    %v2280 = vpop.f32.mrb[0].mxu0
    %v2281 = vadd.f32 0.0, %v2280
    %v2282 = vpop.f32.mrb[0].mxu0
    %2283 = vmatprep.mubr.f32.mxu0 0.0
    %2284 = vmatmul.mubr.f32.gmra.mrb[0].mxu0 %v2155
    %v2285 = vpop.f32.mrb[0].mxu0
    %v2286 = vadd.f32 0.0, %v2285
    %v2287 = vpop.f32.mrb[0].mxu0
    %2288 = vmatprep.mubr.f32.mxu0 0.0
    %2289 = vmatmul.mubr.f32.gmra.mrb[0].mxu0 %v2156
    %v2290 = vpop.f32.mrb[0].mxu0
    %v2291 = vadd.f32 0.0, %v2290
    %v2292 = vpop.f32.mrb[0].mxu0
    %2293 = vmatprep.mubr.f32.mxu0 0.0
    %2294 = vmatmul.mubr.f32.gmra.mrb[0].mxu0 %v2157
    %v2295 = vpop.f32.mrb[0].mxu0
    %v2296 = vadd.f32 0.0, %v2295
    %v2297 = vpop.f32.mrb[0].mxu0
    %2298 = vmatprep.mubr.f32.mxu0 0.0
    %2299 = vmatmul.mubr.f32.gmra.mrb[0].mxu0 %v2158
    %v2300 = vpop.f32.mrb[0].mxu0
    %v2301 = vadd.f32 0.0, %v2300
    %v2302 = vpop.f32.mrb[0].mxu0
    %2303 = vmatprep.mubr.f32.mxu0 0.0
    %2304 = vmatmul.mubr.f32.gmra.mrb[0].mxu0 %v2159
    %v2305 = vpop.f32.mrb[0].mxu0
    %v2306 = vadd.f32 0.0, %v2305
    %v2307 = vpop.f32.mrb[0].mxu0
    %2308 = vmatprep.mubr.f32.mxu0 0.0
    %2309 = vmatmul.mubr.f32.gmra.mrb[0].mxu0 %v2160
    %v2310 = vpop.f32.mrb[0].mxu0
    %v2311 = vadd.f32 0.0, %v2310
    %v2312 = vpop.f32.mrb[0].mxu0
    %2313 = vdwg.mxu0
    %s2314 = scalar_lea.vmem [#allocation2], 832
    %v2315 = vld [vmem:[%s2314] sm:$0xff]
    %v2316 = vld [vmem:[%s2314 + $0x8] sm:$0xff]
    %v2317 = vld [vmem:[%s2314 + $0x10] sm:$0xff]
    %v2318 = vld [vmem:[%s2314 + $0x18] sm:$0xff]
    %v2319 = vld [vmem:[%s2314 + $0x20] sm:$0xff]
    %v2320 = vld [vmem:[%s2314 + $0x28] sm:$0xff]
    %v2321 = vld [vmem:[%s2314 + $0x30] sm:$0xff]
    %v2322 = vld [vmem:[%s2314 + $0x38] sm:$0xff]
    %2323 = vrot.lane.b32.xlu0 %v163, 24
    %v2324 = vpop.permute.xlu0 %2323
    %2325 = vrot.lane.b32.xlu0 %v168, 24
    %v2326 = vpop.permute.xlu0 %2325
    %2327 = vrot.lane.b32.xlu0 %v173, 24
    %v2328 = vpop.permute.xlu0 %2327
    %2329 = vrot.lane.b32.xlu0 %v178, 24
    %v2330 = vpop.permute.xlu0 %2329
    %2331 = vrot.lane.b32.xlu0 %v183, 24
    %v2332 = vpop.permute.xlu0 %2331
    %2333 = vrot.lane.b32.xlu0 %v188, 24
    %v2334 = vpop.permute.xlu0 %2333
    %2335 = vrot.lane.b32.xlu0 %v193, 24
    %v2336 = vpop.permute.xlu0 %2335
    %2337 = vrot.lane.b32.xlu0 %v198, 24
    %v2338 = vpop.permute.xlu0 %2337
    %2339 = vrot.lane.b32.xlu0 %v203, 24
    %v2340 = vpop.permute.xlu0 %2339
    %2341 = vrot.lane.b32.xlu0 %v208, 24
    %v2342 = vpop.permute.xlu0 %2341
    %2343 = vrot.lane.b32.xlu0 %v213, 24
    %v2344 = vpop.permute.xlu0 %2343
    %2345 = vrot.lane.b32.xlu0 %v218, 24
    %v2346 = vpop.permute.xlu0 %2345
    %2347 = vrot.lane.b32.xlu0 %v223, 24
    %v2348 = vpop.permute.xlu0 %2347
    %2349 = vrot.lane.b32.xlu0 %v228, 24
    %v2350 = vpop.permute.xlu0 %2349
    %2351 = vrot.lane.b32.xlu0 %v233, 24
    %v2352 = vpop.permute.xlu0 %2351
    %2353 = vrot.lane.b32.xlu0 %v238, 24
    %v2354 = vpop.permute.xlu0 %2353
    %2371 = vmatprep.subr.mxu0 0.0
    %2372 = vmatpush1.msra.mxu0 %v2324
    %2373 = vmatprep.subr.mxu0 0.0
    %2374 = vmatpush1.msra.mxu0 %v2326
    %2375 = vmatprep.subr.mxu0 0.0
    %2376 = vmatpush1.msra.mxu0 %v2328
    %2377 = vmatprep.subr.mxu0 0.0
    %2378 = vmatpush1.msra.mxu0 %v2330
    %2379 = vmatprep.subr.mxu0 0.0
    %2380 = vmatpush1.msra.mxu0 %v2332
    %2381 = vmatprep.subr.mxu0 0.0
    %2382 = vmatpush1.msra.mxu0 %v2334
    %2383 = vmatprep.subr.mxu0 0.0
    %2384 = vmatpush1.msra.mxu0 %v2336
    %2385 = vmatprep.subr.mxu0 0.0
    %2386 = vmatpush1.msra.mxu0 %v2338
    %2387 = vmatprep.subr.mxu0 0.0
    %2388 = vmatpush1.msra.mxu0 %v2340
    %2389 = vmatprep.subr.mxu0 0.0
    %2390 = vmatpush1.msra.mxu0 %v2342
    %2391 = vmatprep.subr.mxu0 0.0
    %2392 = vmatpush1.msra.mxu0 %v2344
    %2393 = vmatprep.subr.mxu0 0.0
    %2394 = vmatpush1.msra.mxu0 %v2346
    %2395 = vmatprep.subr.mxu0 0.0
    %2396 = vmatpush1.msra.mxu0 %v2348
    %2397 = vmatprep.subr.mxu0 0.0
    %2398 = vmatpush1.msra.mxu0 %v2350
    %2399 = vmatprep.subr.mxu0 0.0
    %2400 = vmatpush1.msra.mxu0 %v2352
    %2401 = vmatprep.subr.mxu0 0.0
    %2402 = vmatpush1.msra.mxu0 %v2354
    %2403 = vmatprep.subr.mxu0 0.0
    %2404 = vmatpush1.msra.mxu0 0.0
    %2405 = vmatprep.subr.mxu0 0.0
    %2406 = vmatpush1.msra.mxu0 0.0
    %2407 = vmatprep.subr.mxu0 0.0
    %2408 = vmatpush1.msra.mxu0 0.0
    %2409 = vmatprep.subr.mxu0 0.0
    %2410 = vmatpush1.msra.mxu0 0.0
    %2411 = vmatprep.subr.mxu0 0.0
    %2412 = vmatpush1.msra.mxu0 0.0
    %2413 = vmatprep.subr.mxu0 0.0
    %2414 = vmatpush1.msra.mxu0 0.0
    %2415 = vmatprep.subr.mxu0 0.0
    %2416 = vmatpush1.msra.mxu0 0.0
    %2417 = vmatprep.subr.mxu0 0.0
    %2418 = vmatpush1.msra.mxu0 0.0
    %2419 = vmatprep.subr.mxu0 0.0
    %2420 = vmatpush1.msra.mxu0 0.0
    %2421 = vmatprep.subr.mxu0 0.0
    %2422 = vmatpush1.msra.mxu0 0.0
    %2423 = vmatprep.subr.mxu0 0.0
    %2424 = vmatpush1.msra.mxu0 0.0
    %2425 = vmatprep.subr.mxu0 0.0
    %2426 = vmatpush1.msra.mxu0 0.0
    %2427 = vmatprep.subr.mxu0 0.0
    %2428 = vmatpush1.msra.mxu0 0.0
    %2429 = vmatprep.subr.mxu0 0.0
    %2430 = vmatpush1.msra.mxu0 0.0
    %2431 = vmatprep.subr.mxu0 0.0
    %2432 = vmatpush1.msra.mxu0 0.0
    %2433 = vmatprep.subr.mxu0 0.0
    %2434 = vmatpush1.msra.mxu0 0.0
    %2435 = vmatprep.mubr.f32.mxu0 0.0
    %2436 = vmatmul.mubr.f32.gmra.mrb[0].mxu0 %v2315
    %v2437 = vpop.f32.mrb[0].mxu0
    %v2438 = vadd.f32 0.0, %v2437
    %v2439 = vpop.f32.mrb[0].mxu0
    %2440 = vmatprep.mubr.f32.mxu0 0.0
    %2441 = vmatmul.mubr.f32.gmra.mrb[0].mxu0 %v2316
    %v2442 = vpop.f32.mrb[0].mxu0
    %v2443 = vadd.f32 0.0, %v2442
    %v2444 = vpop.f32.mrb[0].mxu0
    %2445 = vmatprep.mubr.f32.mxu0 0.0
    %2446 = vmatmul.mubr.f32.gmra.mrb[0].mxu0 %v2317
    %v2447 = vpop.f32.mrb[0].mxu0
    %v2448 = vadd.f32 0.0, %v2447
    %v2449 = vpop.f32.mrb[0].mxu0
    %2450 = vmatprep.mubr.f32.mxu0 0.0
    %2451 = vmatmul.mubr.f32.gmra.mrb[0].mxu0 %v2318
    %v2452 = vpop.f32.mrb[0].mxu0
    %v2453 = vadd.f32 0.0, %v2452
    %v2454 = vpop.f32.mrb[0].mxu0
    %2455 = vmatprep.mubr.f32.mxu0 0.0
    %2456 = vmatmul.mubr.f32.gmra.mrb[0].mxu0 %v2319
    %v2457 = vpop.f32.mrb[0].mxu0
    %v2458 = vadd.f32 0.0, %v2457
    %v2459 = vpop.f32.mrb[0].mxu0
    %2460 = vmatprep.mubr.f32.mxu0 0.0
    %2461 = vmatmul.mubr.f32.gmra.mrb[0].mxu0 %v2320
    %v2462 = vpop.f32.mrb[0].mxu0
    %v2463 = vadd.f32 0.0, %v2462
    %v2464 = vpop.f32.mrb[0].mxu0
    %2465 = vmatprep.mubr.f32.mxu0 0.0
    %2466 = vmatmul.mubr.f32.gmra.mrb[0].mxu0 %v2321
    %v2467 = vpop.f32.mrb[0].mxu0
    %v2468 = vadd.f32 0.0, %v2467
    %v2469 = vpop.f32.mrb[0].mxu0
    %2470 = vmatprep.mubr.f32.mxu0 0.0
    %2471 = vmatmul.mubr.f32.gmra.mrb[0].mxu0 %v2322
    %v2472 = vpop.f32.mrb[0].mxu0
    %v2473 = vadd.f32 0.0, %v2472
    %v2474 = vpop.f32.mrb[0].mxu0
    %2475 = vdwg.mxu0
    %s2476 = scalar_lea.vmem [#allocation2], 896
    %v2477 = vld [vmem:[%s2476] sm:$0xff]
    %v2478 = vld [vmem:[%s2476 + $0x8] sm:$0xff]
    %v2479 = vld [vmem:[%s2476 + $0x10] sm:$0xff]
    %v2480 = vld [vmem:[%s2476 + $0x18] sm:$0xff]
    %v2481 = vld [vmem:[%s2476 + $0x20] sm:$0xff]
    %v2482 = vld [vmem:[%s2476 + $0x28] sm:$0xff]
    %v2483 = vld [vmem:[%s2476 + $0x30] sm:$0xff]
    %v2484 = vld [vmem:[%s2476 + $0x38] sm:$0xff]
    %2485 = vrot.lane.b32.xlu0 %v163, 16
    %v2486 = vpop.permute.xlu0 %2485
    %2487 = vrot.lane.b32.xlu0 %v168, 16
    %v2488 = vpop.permute.xlu0 %2487
    %2489 = vrot.lane.b32.xlu0 %v173, 16
    %v2490 = vpop.permute.xlu0 %2489
    %2491 = vrot.lane.b32.xlu0 %v178, 16
    %v2492 = vpop.permute.xlu0 %2491
    %2493 = vrot.lane.b32.xlu0 %v183, 16
    %v2494 = vpop.permute.xlu0 %2493
    %2495 = vrot.lane.b32.xlu0 %v188, 16
    %v2496 = vpop.permute.xlu0 %2495
    %2497 = vrot.lane.b32.xlu0 %v193, 16
    %v2498 = vpop.permute.xlu0 %2497
    %2499 = vrot.lane.b32.xlu0 %v198, 16
    %v2500 = vpop.permute.xlu0 %2499
    %2501 = vrot.lane.b32.xlu0 %v203, 16
    %v2502 = vpop.permute.xlu0 %2501
    %2503 = vrot.lane.b32.xlu0 %v208, 16
    %v2504 = vpop.permute.xlu0 %2503
    %2505 = vrot.lane.b32.xlu0 %v213, 16
    %v2506 = vpop.permute.xlu0 %2505
    %2507 = vrot.lane.b32.xlu0 %v218, 16
    %v2508 = vpop.permute.xlu0 %2507
    %2509 = vrot.lane.b32.xlu0 %v223, 16
    %v2510 = vpop.permute.xlu0 %2509
    %2511 = vrot.lane.b32.xlu0 %v228, 16
    %v2512 = vpop.permute.xlu0 %2511
    %2513 = vrot.lane.b32.xlu0 %v233, 16
    %v2514 = vpop.permute.xlu0 %2513
    %2515 = vrot.lane.b32.xlu0 %v238, 16
    %v2516 = vpop.permute.xlu0 %2515
    %2533 = vmatprep.subr.mxu0 0.0
    %2534 = vmatpush1.msra.mxu0 %v2486
    %2535 = vmatprep.subr.mxu0 0.0
    %2536 = vmatpush1.msra.mxu0 %v2488
    %2537 = vmatprep.subr.mxu0 0.0
    %2538 = vmatpush1.msra.mxu0 %v2490
    %2539 = vmatprep.subr.mxu0 0.0
    %2540 = vmatpush1.msra.mxu0 %v2492
    %2541 = vmatprep.subr.mxu0 0.0
    %2542 = vmatpush1.msra.mxu0 %v2494
    %2543 = vmatprep.subr.mxu0 0.0
    %2544 = vmatpush1.msra.mxu0 %v2496
    %2545 = vmatprep.subr.mxu0 0.0
    %2546 = vmatpush1.msra.mxu0 %v2498
    %2547 = vmatprep.subr.mxu0 0.0
    %2548 = vmatpush1.msra.mxu0 %v2500
    %2549 = vmatprep.subr.mxu0 0.0
    %2550 = vmatpush1.msra.mxu0 %v2502
    %2551 = vmatprep.subr.mxu0 0.0
    %2552 = vmatpush1.msra.mxu0 %v2504
    %2553 = vmatprep.subr.mxu0 0.0
    %2554 = vmatpush1.msra.mxu0 %v2506
    %2555 = vmatprep.subr.mxu0 0.0
    %2556 = vmatpush1.msra.mxu0 %v2508
    %2557 = vmatprep.subr.mxu0 0.0
    %2558 = vmatpush1.msra.mxu0 %v2510
    %2559 = vmatprep.subr.mxu0 0.0
    %2560 = vmatpush1.msra.mxu0 %v2512
    %2561 = vmatprep.subr.mxu0 0.0
    %2562 = vmatpush1.msra.mxu0 %v2514
    %2563 = vmatprep.subr.mxu0 0.0
    %2564 = vmatpush1.msra.mxu0 %v2516
    %2565 = vmatprep.subr.mxu0 0.0
    %2566 = vmatpush1.msra.mxu0 0.0
    %2567 = vmatprep.subr.mxu0 0.0
    %2568 = vmatpush1.msra.mxu0 0.0
    %2569 = vmatprep.subr.mxu0 0.0
    %2570 = vmatpush1.msra.mxu0 0.0
    %2571 = vmatprep.subr.mxu0 0.0
    %2572 = vmatpush1.msra.mxu0 0.0
    %2573 = vmatprep.subr.mxu0 0.0
    %2574 = vmatpush1.msra.mxu0 0.0
    %2575 = vmatprep.subr.mxu0 0.0
    %2576 = vmatpush1.msra.mxu0 0.0
    %2577 = vmatprep.subr.mxu0 0.0
    %2578 = vmatpush1.msra.mxu0 0.0
    %2579 = vmatprep.subr.mxu0 0.0
    %2580 = vmatpush1.msra.mxu0 0.0
    %2581 = vmatprep.subr.mxu0 0.0
    %2582 = vmatpush1.msra.mxu0 0.0
    %2583 = vmatprep.subr.mxu0 0.0
    %2584 = vmatpush1.msra.mxu0 0.0
    %2585 = vmatprep.subr.mxu0 0.0
    %2586 = vmatpush1.msra.mxu0 0.0
    %2587 = vmatprep.subr.mxu0 0.0
    %2588 = vmatpush1.msra.mxu0 0.0
    %2589 = vmatprep.subr.mxu0 0.0
    %2590 = vmatpush1.msra.mxu0 0.0
    %2591 = vmatprep.subr.mxu0 0.0
    %2592 = vmatpush1.msra.mxu0 0.0
    %2593 = vmatprep.subr.mxu0 0.0
    %2594 = vmatpush1.msra.mxu0 0.0
    %2595 = vmatprep.subr.mxu0 0.0
    %2596 = vmatpush1.msra.mxu0 0.0
    %2597 = vmatprep.mubr.f32.mxu0 0.0
    %2598 = vmatmul.mubr.f32.gmra.mrb[0].mxu0 %v2477
    %v2599 = vpop.f32.mrb[0].mxu0
    %v2600 = vadd.f32 0.0, %v2599
    %v2601 = vpop.f32.mrb[0].mxu0
    %2602 = vmatprep.mubr.f32.mxu0 0.0
    %2603 = vmatmul.mubr.f32.gmra.mrb[0].mxu0 %v2478
    %v2604 = vpop.f32.mrb[0].mxu0
    %v2605 = vadd.f32 0.0, %v2604
    %v2606 = vpop.f32.mrb[0].mxu0
    %2607 = vmatprep.mubr.f32.mxu0 0.0
    %2608 = vmatmul.mubr.f32.gmra.mrb[0].mxu0 %v2479
    %v2609 = vpop.f32.mrb[0].mxu0
    %v2610 = vadd.f32 0.0, %v2609
    %v2611 = vpop.f32.mrb[0].mxu0
    %2612 = vmatprep.mubr.f32.mxu0 0.0
    %2613 = vmatmul.mubr.f32.gmra.mrb[0].mxu0 %v2480
    %v2614 = vpop.f32.mrb[0].mxu0
    %v2615 = vadd.f32 0.0, %v2614
    %v2616 = vpop.f32.mrb[0].mxu0
    %2617 = vmatprep.mubr.f32.mxu0 0.0
    %2618 = vmatmul.mubr.f32.gmra.mrb[0].mxu0 %v2481
    %v2619 = vpop.f32.mrb[0].mxu0
    %v2620 = vadd.f32 0.0, %v2619
    %v2621 = vpop.f32.mrb[0].mxu0
    %2622 = vmatprep.mubr.f32.mxu0 0.0
    %2623 = vmatmul.mubr.f32.gmra.mrb[0].mxu0 %v2482
    %v2624 = vpop.f32.mrb[0].mxu0
    %v2625 = vadd.f32 0.0, %v2624
    %v2626 = vpop.f32.mrb[0].mxu0
    %2627 = vmatprep.mubr.f32.mxu0 0.0
    %2628 = vmatmul.mubr.f32.gmra.mrb[0].mxu0 %v2483
    %v2629 = vpop.f32.mrb[0].mxu0
    %v2630 = vadd.f32 0.0, %v2629
    %v2631 = vpop.f32.mrb[0].mxu0
    %2632 = vmatprep.mubr.f32.mxu0 0.0
    %2633 = vmatmul.mubr.f32.gmra.mrb[0].mxu0 %v2484
    %v2634 = vpop.f32.mrb[0].mxu0
    %v2635 = vadd.f32 0.0, %v2634
    %v2636 = vpop.f32.mrb[0].mxu0
    %2637 = vdwg.mxu0
    %s2638 = scalar_lea.vmem [#allocation2], 960
    %v2639 = vld [vmem:[%s2638] sm:$0xff]
    %v2640 = vld [vmem:[%s2638 + $0x8] sm:$0xff]
    %v2641 = vld [vmem:[%s2638 + $0x10] sm:$0xff]
    %v2642 = vld [vmem:[%s2638 + $0x18] sm:$0xff]
    %v2643 = vld [vmem:[%s2638 + $0x20] sm:$0xff]
    %v2644 = vld [vmem:[%s2638 + $0x28] sm:$0xff]
    %v2645 = vld [vmem:[%s2638 + $0x30] sm:$0xff]
    %v2646 = vld [vmem:[%s2638 + $0x38] sm:$0xff]
    %2647 = vrot.lane.b32.xlu0 %v163, 8
    %v2648 = vpop.permute.xlu0 %2647
    %2649 = vrot.lane.b32.xlu0 %v168, 8
    %v2650 = vpop.permute.xlu0 %2649
    %2651 = vrot.lane.b32.xlu0 %v173, 8
    %v2652 = vpop.permute.xlu0 %2651
    %2653 = vrot.lane.b32.xlu0 %v178, 8
    %v2654 = vpop.permute.xlu0 %2653
    %2655 = vrot.lane.b32.xlu0 %v183, 8
    %v2656 = vpop.permute.xlu0 %2655
    %2657 = vrot.lane.b32.xlu0 %v188, 8
    %v2658 = vpop.permute.xlu0 %2657
    %2659 = vrot.lane.b32.xlu0 %v193, 8
    %v2660 = vpop.permute.xlu0 %2659
    %2661 = vrot.lane.b32.xlu0 %v198, 8
    %v2662 = vpop.permute.xlu0 %2661
    %2663 = vrot.lane.b32.xlu0 %v203, 8
    %v2664 = vpop.permute.xlu0 %2663
    %2665 = vrot.lane.b32.xlu0 %v208, 8
    %v2666 = vpop.permute.xlu0 %2665
    %2667 = vrot.lane.b32.xlu0 %v213, 8
    %v2668 = vpop.permute.xlu0 %2667
    %2669 = vrot.lane.b32.xlu0 %v218, 8
    %v2670 = vpop.permute.xlu0 %2669
    %2671 = vrot.lane.b32.xlu0 %v223, 8
    %v2672 = vpop.permute.xlu0 %2671
    %2673 = vrot.lane.b32.xlu0 %v228, 8
    %v2674 = vpop.permute.xlu0 %2673
    %2675 = vrot.lane.b32.xlu0 %v233, 8
    %v2676 = vpop.permute.xlu0 %2675
    %2677 = vrot.lane.b32.xlu0 %v238, 8
    %v2678 = vpop.permute.xlu0 %2677
    %2695 = vmatprep.subr.mxu0 0.0
    %2696 = vmatpush1.msra.mxu0 %v2648
    %2697 = vmatprep.subr.mxu0 0.0
    %2698 = vmatpush1.msra.mxu0 %v2650
    %2699 = vmatprep.subr.mxu0 0.0
    %2700 = vmatpush1.msra.mxu0 %v2652
    %2701 = vmatprep.subr.mxu0 0.0
    %2702 = vmatpush1.msra.mxu0 %v2654
    %2703 = vmatprep.subr.mxu0 0.0
    %2704 = vmatpush1.msra.mxu0 %v2656
    %2705 = vmatprep.subr.mxu0 0.0
    %2706 = vmatpush1.msra.mxu0 %v2658
    %2707 = vmatprep.subr.mxu0 0.0
    %2708 = vmatpush1.msra.mxu0 %v2660
    %2709 = vmatprep.subr.mxu0 0.0
    %2710 = vmatpush1.msra.mxu0 %v2662
    %2711 = vmatprep.subr.mxu0 0.0
    %2712 = vmatpush1.msra.mxu0 %v2664
    %2713 = vmatprep.subr.mxu0 0.0
    %2714 = vmatpush1.msra.mxu0 %v2666
    %2715 = vmatprep.subr.mxu0 0.0
    %2716 = vmatpush1.msra.mxu0 %v2668
    %2717 = vmatprep.subr.mxu0 0.0
    %2718 = vmatpush1.msra.mxu0 %v2670
    %2719 = vmatprep.subr.mxu0 0.0
    %2720 = vmatpush1.msra.mxu0 %v2672
    %2721 = vmatprep.subr.mxu0 0.0
    %2722 = vmatpush1.msra.mxu0 %v2674
    %2723 = vmatprep.subr.mxu0 0.0
    %2724 = vmatpush1.msra.mxu0 %v2676
    %2725 = vmatprep.subr.mxu0 0.0
    %2726 = vmatpush1.msra.mxu0 %v2678
    %2727 = vmatprep.subr.mxu0 0.0
    %2728 = vmatpush1.msra.mxu0 0.0
    %2729 = vmatprep.subr.mxu0 0.0
    %2730 = vmatpush1.msra.mxu0 0.0
    %2731 = vmatprep.subr.mxu0 0.0
    %2732 = vmatpush1.msra.mxu0 0.0
    %2733 = vmatprep.subr.mxu0 0.0
    %2734 = vmatpush1.msra.mxu0 0.0
    %2735 = vmatprep.subr.mxu0 0.0
    %2736 = vmatpush1.msra.mxu0 0.0
    %2737 = vmatprep.subr.mxu0 0.0
    %2738 = vmatpush1.msra.mxu0 0.0
    %2739 = vmatprep.subr.mxu0 0.0
    %2740 = vmatpush1.msra.mxu0 0.0
    %2741 = vmatprep.subr.mxu0 0.0
    %2742 = vmatpush1.msra.mxu0 0.0
    %2743 = vmatprep.subr.mxu0 0.0
    %2744 = vmatpush1.msra.mxu0 0.0
    %2745 = vmatprep.subr.mxu0 0.0
    %2746 = vmatpush1.msra.mxu0 0.0
    %2747 = vmatprep.subr.mxu0 0.0
    %2748 = vmatpush1.msra.mxu0 0.0
    %2749 = vmatprep.subr.mxu0 0.0
    %2750 = vmatpush1.msra.mxu0 0.0
    %2751 = vmatprep.subr.mxu0 0.0
    %2752 = vmatpush1.msra.mxu0 0.0
    %2753 = vmatprep.subr.mxu0 0.0
    %2754 = vmatpush1.msra.mxu0 0.0
    %2755 = vmatprep.subr.mxu0 0.0
    %2756 = vmatpush1.msra.mxu0 0.0
    %2757 = vmatprep.subr.mxu0 0.0
    %2758 = vmatpush1.msra.mxu0 0.0
    %2759 = vmatprep.mubr.f32.mxu0 0.0
    %2760 = vmatmul.mubr.f32.gmra.mrb[0].mxu0 %v2639
    %v2761 = vpop.f32.mrb[0].mxu0
    %v2762 = vadd.f32 0.0, %v2761
    %v2763 = vpop.f32.mrb[0].mxu0
    %2764 = vmatprep.mubr.f32.mxu0 0.0
    %2765 = vmatmul.mubr.f32.gmra.mrb[0].mxu0 %v2640
    %v2766 = vpop.f32.mrb[0].mxu0
    %v2767 = vadd.f32 0.0, %v2766
    %v2768 = vpop.f32.mrb[0].mxu0
    %2769 = vmatprep.mubr.f32.mxu0 0.0
    %2770 = vmatmul.mubr.f32.gmra.mrb[0].mxu0 %v2641
    %v2771 = vpop.f32.mrb[0].mxu0
    %v2772 = vadd.f32 0.0, %v2771
    %v2773 = vpop.f32.mrb[0].mxu0
    %2774 = vmatprep.mubr.f32.mxu0 0.0
    %2775 = vmatmul.mubr.f32.gmra.mrb[0].mxu0 %v2642
    %v2776 = vpop.f32.mrb[0].mxu0
    %v2777 = vadd.f32 0.0, %v2776
    %v2778 = vpop.f32.mrb[0].mxu0
    %2779 = vmatprep.mubr.f32.mxu0 0.0
    %2780 = vmatmul.mubr.f32.gmra.mrb[0].mxu0 %v2643
    %v2781 = vpop.f32.mrb[0].mxu0
    %v2782 = vadd.f32 0.0, %v2781
    %v2783 = vpop.f32.mrb[0].mxu0
    %2784 = vmatprep.mubr.f32.mxu0 0.0
    %2785 = vmatmul.mubr.f32.gmra.mrb[0].mxu0 %v2644
    %v2786 = vpop.f32.mrb[0].mxu0
    %v2787 = vadd.f32 0.0, %v2786
    %v2788 = vpop.f32.mrb[0].mxu0
    %2789 = vmatprep.mubr.f32.mxu0 0.0
    %2790 = vmatmul.mubr.f32.gmra.mrb[0].mxu0 %v2645
    %v2791 = vpop.f32.mrb[0].mxu0
    %v2792 = vadd.f32 0.0, %v2791
    %v2793 = vpop.f32.mrb[0].mxu0
    %2794 = vmatprep.mubr.f32.mxu0 0.0
    %2795 = vmatmul.mubr.f32.gmra.mrb[0].mxu0 %v2646
    %v2796 = vpop.f32.mrb[0].mxu0
    %v2797 = vadd.f32 0.0, %v2796
    %v2798 = vpop.f32.mrb[0].mxu0
    %2799 = vdwg.mxu0
    %2808 = vrot.lane.b32.xlu0 %v494, 8
    %v2809 = vpop.permute.xlu0 %2808
    %2810 = vrot.lane.b32.xlu0 %v499, 8
    %v2811 = vpop.permute.xlu0 %2810
    %2812 = vrot.lane.b32.xlu0 %v504, 8
    %v2813 = vpop.permute.xlu0 %2812
    %2814 = vrot.lane.b32.xlu0 %v509, 8
    %v2815 = vpop.permute.xlu0 %2814
    %2816 = vrot.lane.b32.xlu0 %v514, 8
    %v2817 = vpop.permute.xlu0 %2816
    %2818 = vrot.lane.b32.xlu0 %v519, 8
    %v2819 = vpop.permute.xlu0 %2818
    %2820 = vrot.lane.b32.xlu0 %v524, 8
    %v2821 = vpop.permute.xlu0 %2820
    %2822 = vrot.lane.b32.xlu0 %v529, 8
    %v2823 = vpop.permute.xlu0 %2822
    %2840 = vrot.lane.b32.xlu0 %v656, 16
    %v2841 = vpop.permute.xlu0 %2840
    %2842 = vrot.lane.b32.xlu0 %v661, 16
    %v2843 = vpop.permute.xlu0 %2842
    %2844 = vrot.lane.b32.xlu0 %v666, 16
    %v2845 = vpop.permute.xlu0 %2844
    %2846 = vrot.lane.b32.xlu0 %v671, 16
    %v2847 = vpop.permute.xlu0 %2846
    %2848 = vrot.lane.b32.xlu0 %v676, 16
    %v2849 = vpop.permute.xlu0 %2848
    %2850 = vrot.lane.b32.xlu0 %v681, 16
    %v2851 = vpop.permute.xlu0 %2850
    %2852 = vrot.lane.b32.xlu0 %v686, 16
    %v2853 = vpop.permute.xlu0 %2852
    %2854 = vrot.lane.b32.xlu0 %v691, 16
    %v2855 = vpop.permute.xlu0 %2854
    %2872 = vrot.lane.b32.xlu0 %v818, 24
    %v2873 = vpop.permute.xlu0 %2872
    %2874 = vrot.lane.b32.xlu0 %v823, 24
    %v2875 = vpop.permute.xlu0 %2874
    %2876 = vrot.lane.b32.xlu0 %v828, 24
    %v2877 = vpop.permute.xlu0 %2876
    %2878 = vrot.lane.b32.xlu0 %v833, 24
    %v2879 = vpop.permute.xlu0 %2878
    %2880 = vrot.lane.b32.xlu0 %v838, 24
    %v2881 = vpop.permute.xlu0 %2880
    %2882 = vrot.lane.b32.xlu0 %v843, 24
    %v2883 = vpop.permute.xlu0 %2882
    %2884 = vrot.lane.b32.xlu0 %v848, 24
    %v2885 = vpop.permute.xlu0 %2884
    %2886 = vrot.lane.b32.xlu0 %v853, 24
    %v2887 = vpop.permute.xlu0 %2886
    %2904 = vrot.lane.b32.xlu0 %v980, 32
    %v2905 = vpop.permute.xlu0 %2904
    %2906 = vrot.lane.b32.xlu0 %v985, 32
    %v2907 = vpop.permute.xlu0 %2906
    %2908 = vrot.lane.b32.xlu0 %v990, 32
    %v2909 = vpop.permute.xlu0 %2908
    %2910 = vrot.lane.b32.xlu0 %v995, 32
    %v2911 = vpop.permute.xlu0 %2910
    %2912 = vrot.lane.b32.xlu0 %v1000, 32
    %v2913 = vpop.permute.xlu0 %2912
    %2914 = vrot.lane.b32.xlu0 %v1005, 32
    %v2915 = vpop.permute.xlu0 %2914
    %2916 = vrot.lane.b32.xlu0 %v1010, 32
    %v2917 = vpop.permute.xlu0 %2916
    %2918 = vrot.lane.b32.xlu0 %v1015, 32
    %v2919 = vpop.permute.xlu0 %2918
    %2936 = vrot.lane.b32.xlu0 %v1142, 40
    %v2937 = vpop.permute.xlu0 %2936
    %2938 = vrot.lane.b32.xlu0 %v1147, 40
    %v2939 = vpop.permute.xlu0 %2938
    %2940 = vrot.lane.b32.xlu0 %v1152, 40
    %v2941 = vpop.permute.xlu0 %2940
    %2942 = vrot.lane.b32.xlu0 %v1157, 40
    %v2943 = vpop.permute.xlu0 %2942
    %2944 = vrot.lane.b32.xlu0 %v1162, 40
    %v2945 = vpop.permute.xlu0 %2944
    %2946 = vrot.lane.b32.xlu0 %v1167, 40
    %v2947 = vpop.permute.xlu0 %2946
    %2948 = vrot.lane.b32.xlu0 %v1172, 40
    %v2949 = vpop.permute.xlu0 %2948
    %2950 = vrot.lane.b32.xlu0 %v1177, 40
    %v2951 = vpop.permute.xlu0 %2950
    %2968 = vrot.lane.b32.xlu0 %v1304, 48
    %v2969 = vpop.permute.xlu0 %2968
    %2970 = vrot.lane.b32.xlu0 %v1309, 48
    %v2971 = vpop.permute.xlu0 %2970
    %2972 = vrot.lane.b32.xlu0 %v1314, 48
    %v2973 = vpop.permute.xlu0 %2972
    %2974 = vrot.lane.b32.xlu0 %v1319, 48
    %v2975 = vpop.permute.xlu0 %2974
    %2976 = vrot.lane.b32.xlu0 %v1324, 48
    %v2977 = vpop.permute.xlu0 %2976
    %2978 = vrot.lane.b32.xlu0 %v1329, 48
    %v2979 = vpop.permute.xlu0 %2978
    %2980 = vrot.lane.b32.xlu0 %v1334, 48
    %v2981 = vpop.permute.xlu0 %2980
    %2982 = vrot.lane.b32.xlu0 %v1339, 48
    %v2983 = vpop.permute.xlu0 %2982
    %3000 = vrot.lane.b32.xlu0 %v1466, 56
    %v3001 = vpop.permute.xlu0 %3000
    %3002 = vrot.lane.b32.xlu0 %v1471, 56
    %v3003 = vpop.permute.xlu0 %3002
    %3004 = vrot.lane.b32.xlu0 %v1476, 56
    %v3005 = vpop.permute.xlu0 %3004
    %3006 = vrot.lane.b32.xlu0 %v1481, 56
    %v3007 = vpop.permute.xlu0 %3006
    %3008 = vrot.lane.b32.xlu0 %v1486, 56
    %v3009 = vpop.permute.xlu0 %3008
    %3010 = vrot.lane.b32.xlu0 %v1491, 56
    %v3011 = vpop.permute.xlu0 %3010
    %3012 = vrot.lane.b32.xlu0 %v1496, 56
    %v3013 = vpop.permute.xlu0 %3012
    %3014 = vrot.lane.b32.xlu0 %v1501, 56
    %v3015 = vpop.permute.xlu0 %3014
    %3032 = vrot.lane.b32.xlu0 %v1628, 64
    %v3033 = vpop.permute.xlu0 %3032
    %3034 = vrot.lane.b32.xlu0 %v1633, 64
    %v3035 = vpop.permute.xlu0 %3034
    %3036 = vrot.lane.b32.xlu0 %v1638, 64
    %v3037 = vpop.permute.xlu0 %3036
    %3038 = vrot.lane.b32.xlu0 %v1643, 64
    %v3039 = vpop.permute.xlu0 %3038
    %3040 = vrot.lane.b32.xlu0 %v1648, 64
    %v3041 = vpop.permute.xlu0 %3040
    %3042 = vrot.lane.b32.xlu0 %v1653, 64
    %v3043 = vpop.permute.xlu0 %3042
    %3044 = vrot.lane.b32.xlu0 %v1658, 64
    %v3045 = vpop.permute.xlu0 %3044
    %3046 = vrot.lane.b32.xlu0 %v1663, 64
    %v3047 = vpop.permute.xlu0 %3046
    %3064 = vrot.lane.b32.xlu0 %v1790, 72
    %v3065 = vpop.permute.xlu0 %3064
    %3066 = vrot.lane.b32.xlu0 %v1795, 72
    %v3067 = vpop.permute.xlu0 %3066
    %3068 = vrot.lane.b32.xlu0 %v1800, 72
    %v3069 = vpop.permute.xlu0 %3068
    %3070 = vrot.lane.b32.xlu0 %v1805, 72
    %v3071 = vpop.permute.xlu0 %3070
    %3072 = vrot.lane.b32.xlu0 %v1810, 72
    %v3073 = vpop.permute.xlu0 %3072
    %3074 = vrot.lane.b32.xlu0 %v1815, 72
    %v3075 = vpop.permute.xlu0 %3074
    %3076 = vrot.lane.b32.xlu0 %v1820, 72
    %v3077 = vpop.permute.xlu0 %3076
    %3078 = vrot.lane.b32.xlu0 %v1825, 72
    %v3079 = vpop.permute.xlu0 %3078
    %3096 = vrot.lane.b32.xlu0 %v1952, 80
    %v3097 = vpop.permute.xlu0 %3096
    %3098 = vrot.lane.b32.xlu0 %v1957, 80
    %v3099 = vpop.permute.xlu0 %3098
    %3100 = vrot.lane.b32.xlu0 %v1962, 80
    %v3101 = vpop.permute.xlu0 %3100
    %3102 = vrot.lane.b32.xlu0 %v1967, 80
    %v3103 = vpop.permute.xlu0 %3102
    %3104 = vrot.lane.b32.xlu0 %v1972, 80
    %v3105 = vpop.permute.xlu0 %3104
    %3106 = vrot.lane.b32.xlu0 %v1977, 80
    %v3107 = vpop.permute.xlu0 %3106
    %3108 = vrot.lane.b32.xlu0 %v1982, 80
    %v3109 = vpop.permute.xlu0 %3108
    %3110 = vrot.lane.b32.xlu0 %v1987, 80
    %v3111 = vpop.permute.xlu0 %3110
    %3128 = vrot.lane.b32.xlu0 %v2114, 88
    %v3129 = vpop.permute.xlu0 %3128
    %3130 = vrot.lane.b32.xlu0 %v2119, 88
    %v3131 = vpop.permute.xlu0 %3130
    %3132 = vrot.lane.b32.xlu0 %v2124, 88
    %v3133 = vpop.permute.xlu0 %3132
    %3134 = vrot.lane.b32.xlu0 %v2129, 88
    %v3135 = vpop.permute.xlu0 %3134
    %3136 = vrot.lane.b32.xlu0 %v2134, 88
    %v3137 = vpop.permute.xlu0 %3136
    %3138 = vrot.lane.b32.xlu0 %v2139, 88
    %v3139 = vpop.permute.xlu0 %3138
    %3140 = vrot.lane.b32.xlu0 %v2144, 88
    %v3141 = vpop.permute.xlu0 %3140
    %3142 = vrot.lane.b32.xlu0 %v2149, 88
    %v3143 = vpop.permute.xlu0 %3142
    %3160 = vrot.lane.b32.xlu0 %v2276, 96
    %v3161 = vpop.permute.xlu0 %3160
    %3162 = vrot.lane.b32.xlu0 %v2281, 96
    %v3163 = vpop.permute.xlu0 %3162
    %3164 = vrot.lane.b32.xlu0 %v2286, 96
    %v3165 = vpop.permute.xlu0 %3164
    %3166 = vrot.lane.b32.xlu0 %v2291, 96
    %v3167 = vpop.permute.xlu0 %3166
    %3168 = vrot.lane.b32.xlu0 %v2296, 96
    %v3169 = vpop.permute.xlu0 %3168
    %3170 = vrot.lane.b32.xlu0 %v2301, 96
    %v3171 = vpop.permute.xlu0 %3170
    %3172 = vrot.lane.b32.xlu0 %v2306, 96
    %v3173 = vpop.permute.xlu0 %3172
    %3174 = vrot.lane.b32.xlu0 %v2311, 96
    %v3175 = vpop.permute.xlu0 %3174
    %3192 = vrot.lane.b32.xlu0 %v2438, 104
    %v3193 = vpop.permute.xlu0 %3192
    %3194 = vrot.lane.b32.xlu0 %v2443, 104
    %v3195 = vpop.permute.xlu0 %3194
    %3196 = vrot.lane.b32.xlu0 %v2448, 104
    %v3197 = vpop.permute.xlu0 %3196
    %3198 = vrot.lane.b32.xlu0 %v2453, 104
    %v3199 = vpop.permute.xlu0 %3198
    %3200 = vrot.lane.b32.xlu0 %v2458, 104
    %v3201 = vpop.permute.xlu0 %3200
    %3202 = vrot.lane.b32.xlu0 %v2463, 104
    %v3203 = vpop.permute.xlu0 %3202
    %3204 = vrot.lane.b32.xlu0 %v2468, 104
    %v3205 = vpop.permute.xlu0 %3204
    %3206 = vrot.lane.b32.xlu0 %v2473, 104
    %v3207 = vpop.permute.xlu0 %3206
    %3224 = vrot.lane.b32.xlu0 %v2600, 112
    %v3225 = vpop.permute.xlu0 %3224
    %3226 = vrot.lane.b32.xlu0 %v2605, 112
    %v3227 = vpop.permute.xlu0 %3226
    %3228 = vrot.lane.b32.xlu0 %v2610, 112
    %v3229 = vpop.permute.xlu0 %3228
    %3230 = vrot.lane.b32.xlu0 %v2615, 112
    %v3231 = vpop.permute.xlu0 %3230
    %3232 = vrot.lane.b32.xlu0 %v2620, 112
    %v3233 = vpop.permute.xlu0 %3232
    %3234 = vrot.lane.b32.xlu0 %v2625, 112
    %v3235 = vpop.permute.xlu0 %3234
    %3236 = vrot.lane.b32.xlu0 %v2630, 112
    %v3237 = vpop.permute.xlu0 %3236
    %3238 = vrot.lane.b32.xlu0 %v2635, 112
    %v3239 = vpop.permute.xlu0 %3238
    %3256 = vrot.lane.b32.xlu0 %v2762, 120
    %v3257 = vpop.permute.xlu0 %3256
    %3258 = vrot.lane.b32.xlu0 %v2767, 120
    %v3259 = vpop.permute.xlu0 %3258
    %3260 = vrot.lane.b32.xlu0 %v2772, 120
    %v3261 = vpop.permute.xlu0 %3260
    %3262 = vrot.lane.b32.xlu0 %v2777, 120
    %v3263 = vpop.permute.xlu0 %3262
    %3264 = vrot.lane.b32.xlu0 %v2782, 120
    %v3265 = vpop.permute.xlu0 %3264
    %3266 = vrot.lane.b32.xlu0 %v2787, 120
    %v3267 = vpop.permute.xlu0 %3266
    %3268 = vrot.lane.b32.xlu0 %v2792, 120
    %v3269 = vpop.permute.xlu0 %3268
    %3270 = vrot.lane.b32.xlu0 %v2797, 120
    %v3271 = vpop.permute.xlu0 %3270
    %vm3280 = vcmask 64512
    %v3281 = vsel %vm3280, %v316, %v2809
    %v3282 = vsel %vm3280, %v321, %v2811
    %v3283 = vsel %vm3280, %v326, %v2813
    %v3284 = vsel %vm3280, %v331, %v2815
    %v3285 = vsel %vm3280, %v336, %v2817
    %v3286 = vsel %vm3280, %v341, %v2819
    %v3287 = vsel %vm3280, %v346, %v2821
    %v3288 = vsel %vm3280, %v351, %v2823
    %v3289 = vsel %vm47, %v3281, %v2841
    %v3290 = vsel %vm47, %v3282, %v2843
    %v3291 = vsel %vm47, %v3283, %v2845
    %v3292 = vsel %vm47, %v3284, %v2847
    %v3293 = vsel %vm47, %v3285, %v2849
    %v3294 = vsel %vm47, %v3286, %v2851
    %v3295 = vsel %vm47, %v3287, %v2853
    %v3296 = vsel %vm47, %v3288, %v2855
    %vm3297 = vcmask 195584
    %v3298 = vsel %vm3297, %v3289, %v2873
    %v3299 = vsel %vm3297, %v3290, %v2875
    %v3300 = vsel %vm3297, %v3291, %v2877
    %v3301 = vsel %vm3297, %v3292, %v2879
    %v3302 = vsel %vm3297, %v3293, %v2881
    %v3303 = vsel %vm3297, %v3294, %v2883
    %v3304 = vsel %vm3297, %v3295, %v2885
    %v3305 = vsel %vm3297, %v3296, %v2887
    %vm3306 = vcmask 261120
    %v3307 = vsel %vm3306, %v3298, %v2905
    %v3308 = vsel %vm3306, %v3299, %v2907
    %v3309 = vsel %vm3306, %v3300, %v2909
    %v3310 = vsel %vm3306, %v3301, %v2911
    %v3311 = vsel %vm3306, %v3302, %v2913
    %v3312 = vsel %vm3306, %v3303, %v2915
    %v3313 = vsel %vm3306, %v3304, %v2917
    %v3314 = vsel %vm3306, %v3305, %v2919
    %vm3315 = vcmask 326656
    %v3316 = vsel %vm3315, %v3307, %v2937
    %v3317 = vsel %vm3315, %v3308, %v2939
    %v3318 = vsel %vm3315, %v3309, %v2941
    %v3319 = vsel %vm3315, %v3310, %v2943
    %v3320 = vsel %vm3315, %v3311, %v2945
    %v3321 = vsel %vm3315, %v3312, %v2947
    %v3322 = vsel %vm3315, %v3313, %v2949
    %v3323 = vsel %vm3315, %v3314, %v2951
    %vm3324 = vcmask 392192
    %v3325 = vsel %vm3324, %v3316, %v2969
    %v3326 = vsel %vm3324, %v3317, %v2971
    %v3327 = vsel %vm3324, %v3318, %v2973
    %v3328 = vsel %vm3324, %v3319, %v2975
    %v3329 = vsel %vm3324, %v3320, %v2977
    %v3330 = vsel %vm3324, %v3321, %v2979
    %v3331 = vsel %vm3324, %v3322, %v2981
    %v3332 = vsel %vm3324, %v3323, %v2983
    %vm3333 = vcmask 457728
    %v3334 = vsel %vm3333, %v3325, %v3001
    %v3335 = vsel %vm3333, %v3326, %v3003
    %v3336 = vsel %vm3333, %v3327, %v3005
    %v3337 = vsel %vm3333, %v3328, %v3007
    %v3338 = vsel %vm3333, %v3329, %v3009
    %v3339 = vsel %vm3333, %v3330, %v3011
    %v3340 = vsel %vm3333, %v3331, %v3013
    %v3341 = vsel %vm3333, %v3332, %v3015
    %vm3342 = vcmask 523264
    %v3343 = vsel %vm3342, %v3334, %v3033
    %v3344 = vsel %vm3342, %v3335, %v3035
    %v3345 = vsel %vm3342, %v3336, %v3037
    %v3346 = vsel %vm3342, %v3337, %v3039
    %v3347 = vsel %vm3342, %v3338, %v3041
    %v3348 = vsel %vm3342, %v3339, %v3043
    %v3349 = vsel %vm3342, %v3340, %v3045
    %v3350 = vsel %vm3342, %v3341, %v3047
    %vm3351 = vcmask 588800
    %v3352 = vsel %vm3351, %v3343, %v3065
    %v3353 = vsel %vm3351, %v3344, %v3067
    %v3354 = vsel %vm3351, %v3345, %v3069
    %v3355 = vsel %vm3351, %v3346, %v3071
    %v3356 = vsel %vm3351, %v3347, %v3073
    %v3357 = vsel %vm3351, %v3348, %v3075
    %v3358 = vsel %vm3351, %v3349, %v3077
    %v3359 = vsel %vm3351, %v3350, %v3079
    %vm3360 = vcmask 654336
    %v3361 = vsel %vm3360, %v3352, %v3097
    %v3362 = vsel %vm3360, %v3353, %v3099
    %v3363 = vsel %vm3360, %v3354, %v3101
    %v3364 = vsel %vm3360, %v3355, %v3103
    %v3365 = vsel %vm3360, %v3356, %v3105
    %v3366 = vsel %vm3360, %v3357, %v3107
    %v3367 = vsel %vm3360, %v3358, %v3109
    %v3368 = vsel %vm3360, %v3359, %v3111
    %vm3369 = vcmask 719872
    %v3370 = vsel %vm3369, %v3361, %v3129
    %v3371 = vsel %vm3369, %v3362, %v3131
    %v3372 = vsel %vm3369, %v3363, %v3133
    %v3373 = vsel %vm3369, %v3364, %v3135
    %v3374 = vsel %vm3369, %v3365, %v3137
    %v3375 = vsel %vm3369, %v3366, %v3139
    %v3376 = vsel %vm3369, %v3367, %v3141
    %v3377 = vsel %vm3369, %v3368, %v3143
    %vm3378 = vcmask 785408
    %v3379 = vsel %vm3378, %v3370, %v3161
    %v3380 = vsel %vm3378, %v3371, %v3163
    %v3381 = vsel %vm3378, %v3372, %v3165
    %v3382 = vsel %vm3378, %v3373, %v3167
    %v3383 = vsel %vm3378, %v3374, %v3169
    %v3384 = vsel %vm3378, %v3375, %v3171
    %v3385 = vsel %vm3378, %v3376, %v3173
    %v3386 = vsel %vm3378, %v3377, %v3175
    %vm3387 = vcmask 850944
    %v3388 = vsel %vm3387, %v3379, %v3193
    %v3389 = vsel %vm3387, %v3380, %v3195
    %v3390 = vsel %vm3387, %v3381, %v3197
    %v3391 = vsel %vm3387, %v3382, %v3199
    %v3392 = vsel %vm3387, %v3383, %v3201
    %v3393 = vsel %vm3387, %v3384, %v3203
    %v3394 = vsel %vm3387, %v3385, %v3205
    %v3395 = vsel %vm3387, %v3386, %v3207
    %vm3396 = vcmask 916480
    %v3397 = vsel %vm3396, %v3388, %v3225
    %v3398 = vsel %vm3396, %v3389, %v3227
    %v3399 = vsel %vm3396, %v3390, %v3229
    %v3400 = vsel %vm3396, %v3391, %v3231
    %v3401 = vsel %vm3396, %v3392, %v3233
    %v3402 = vsel %vm3396, %v3393, %v3235
    %v3403 = vsel %vm3396, %v3394, %v3237
    %v3404 = vsel %vm3396, %v3395, %v3239
    %vm3405 = vcmask 982016
    %v3406 = vsel %vm3405, %v3397, %v3257
    %v3407 = vsel %vm3405, %v3398, %v3259
    %v3408 = vsel %vm3405, %v3399, %v3261
    %v3409 = vsel %vm3405, %v3400, %v3263
    %v3410 = vsel %vm3405, %v3401, %v3265
    %v3411 = vsel %vm3405, %v3402, %v3267
    %v3412 = vsel %vm3405, %v3403, %v3269
    %v3413 = vsel %vm3405, %v3404, %v3271
    %3414 = vst [vmem:[#allocation5] sm:$0xff] %v3406
    %3415 = vst [vmem:[#allocation5 + $0x8] sm:$0xff] %v3407
    %3416 = vst [vmem:[#allocation5 + $0x10] sm:$0xff] %v3408
    %3417 = vst [vmem:[#allocation5 + $0x18] sm:$0xff] %v3409
    %3418 = vst [vmem:[#allocation5 + $0x20] sm:$0xff] %v3410
    %3419 = vst [vmem:[#allocation5 + $0x28] sm:$0xff] %v3411
    %3420 = vst [vmem:[#allocation5 + $0x30] sm:$0xff] %v3412
    %3421 = vst [vmem:[#allocation5 + $0x38] sm:$0xff] %v3413
    // Predicated region
    $region18: #{tpu_custom_call.1} parent=1 // pred_check
      _
    $region19: #{tpu_custom_call.1} parent=1 // pred_check_branch
      %3423 = sbr.rel (0) target = $region21
    $region20: #{tpu_custom_call.1} parent=1 // pred_region
      %s3425 = ssub.s32 1024, 1024
      %3426 = vsyncadd [#allocation4], %s3425
      %s3427 = sshll.u32 [#allocation5], 4
      %s3428 = int_to_ptr.vmem [resolvable:$true] %s3427
      %3433 = dma.vmem_to_hbm [thread:$0]  %s3428, 1024, %s3, [#allocation4], 128, 128, 8
    $region21: #{tpu_custom_call.1} parent=1 // pred_fallthru
      _
    // Predicated region
    $region22: #{tpu_custom_call.1} parent=1 // pred_check
      _
    $region23: #{tpu_custom_call.1} parent=1 // pred_check_branch
      %3435 = sbr.rel (0) target = $region25
    $region24: #{tpu_custom_call.1} parent=1 // pred_region
      %3436 = dma.done [#allocation4], 1024
    $region25: #{tpu_custom_call.1} parent=1 // pred_fallthru
      _
    %3437 = vsyncpa [#allocation3], 1
    %3438 = vsyncpa [#allocation4], 1

</llo_original>
